<compile_context>
chip_gen: v7x
topology: tpu7x:2x2x1
jax: 0.10.0
libtpu: 0.0.40
codegen_flags: <defaults>
</compile_context>

<pallas_src>
import functools

import jax
import jax.numpy as jnp
from jax import lax
from jax.experimental import pallas as pl
from jax.experimental.pallas import tpu as pltpu


def _centernet_head_kernel(x_ref, w1_ref, b1_ref, wh_ref, bh_ref,
                           tapmask_ref, sigmask_ref, o_ref, patches_ref,
                           *, W, K, N):
    """Single invocation; batch folded into the lane (pixel) axis.

    x_ref      : (K, N)      f32  input, channels on sublanes, N = B*H*W lanes
    w1_ref     : (K, 9*K)    bf16 3x3 conv weight, column (ky*3+kx)*K + c_in
    b1_ref     : (K, 1)      f32  3x3 conv bias
    wh_ref     : (8, K)      bf16 fused 1x1 head weights [cls|off|size|pad]
    bh_ref     : (8, 1)      f32  fused 1x1 head bias
    tapmask_ref: (9, N)      f32  per-tap validity mask (handles all borders
                                  incl. roll wrap across rows/batch)
    sigmask_ref: (8, 1)      f32  1.0 on rows that get a sigmoid, else 0.0
    o_ref      : (8, N)      f32  output (lane-dense, one full-tile store)
    patches_ref: (9*K, N)    bf16 im2col patch matrix scratch
    """
    # Build the im2col patch matrix with XLU rolls + precomputed border masks.
    for ky in range(3):
        for kx in range(3):
            t = ky * 3 + kx
            d = (ky - 1) * W + (kx - 1)          # flat neighbour offset
            if d == 0:
                patches_ref[t * K:(t + 1) * K, :] = (
                    x_ref[...].astype(jnp.bfloat16))
            else:
                tap = pltpu.roll(x_ref[...], shift=(-d) % N, axis=1)
                tap = tap * tapmask_ref[t:t + 1, :]       # zero out-of-image taps
                patches_ref[t * K:(t + 1) * K, :] = tap.astype(jnp.bfloat16)

    # 3x3 conv as one (K, 9K) @ (9K, N) bf16 MXU matmul (f32 acc) + bias + ReLU.
    hidden = jnp.dot(w1_ref[...], patches_ref[...],
                     preferred_element_type=jnp.float32)
    hidden = jnp.maximum(hidden + b1_ref[...], 0.0)       # (K, N) f32

    # Fused 1x1 heads: (8, K) @ (K, N) bf16 MXU matmul (f32 acc) + bias.
    heads = jnp.dot(wh_ref[...], hidden.astype(jnp.bfloat16),
                    preferred_element_type=jnp.float32) + bh_ref[...]   # (8, N)

    # Sigmoid on class-heatmap + offset rows only, single unmasked store.
    sig = jax.nn.sigmoid(heads)
    o_ref[...] = heads + sigmask_ref[...] * (sig - heads)


def centernet_head_forward(x_nchw, conv1_w, conv1_b, cls_w, cls_b,
                           off_w, off_b, size_w, size_b):
    """x_nchw: (B, K, H, W) f32; weights in PyTorch layouts.
    Returns (B, C+4, H, W) f32 = concat([sigmoid(cls), sigmoid(off), size])."""
    B, K, H, W = x_nchw.shape
    C = cls_w.shape[0]
    Cout = C + 4
    Cpad = 8                     # pad head rows to a full sublane tile
    HW = H * W
    N = B * HW                   # batch folded into the lane axis

    # x_flat[c, b*HW + m] = x[b, c, m]  (tiny layout plumbing in the wrapper).
    x_flat = jnp.transpose(x_nchw.reshape(B, K, HW), (1, 0, 2)).reshape(K, N)
    x_flat = x_flat.astype(jnp.float32)

    # conv1 weight (K, K, 3, 3) -> (K, 9K), column (ky*3+kx)*K + c_in.  bf16.
    w1_mat = jnp.transpose(conv1_w, (0, 2, 3, 1)).reshape(K, 9 * K)
    w1_mat = w1_mat.astype(jnp.bfloat16)
    b1_col = conv1_b.reshape(K, 1).astype(jnp.float32)

    # Fused 1x1 heads, padded to 8 rows: [cls | off | size | zeros].  bf16.
    wh = jnp.concatenate([cls_w.reshape(C, K), off_w.reshape(2, K),
                          size_w.reshape(2, K),
                          jnp.zeros((Cpad - Cout, K), jnp.float32)], axis=0)
    wh = wh.astype(jnp.bfloat16)
    bh = jnp.concatenate([cls_b, off_b, size_b,
                          jnp.zeros((Cpad - Cout,), jnp.float32)],
                         axis=0).reshape(Cpad, 1).astype(jnp.float32)

    # Per-tap validity mask over the folded lane axis: zero where the (dy,dx)
    # neighbour falls outside the image (also covers roll wrap-around and
    # cross-batch contamination, since those lanes are exactly the masked ones).
    yy = jnp.arange(HW, dtype=jnp.int32) // W
    xx = jnp.arange(HW, dtype=jnp.int32) % W
    rows = []
    for ky in range(3):
        for kx in range(3):
            dy, dx = ky - 1, kx - 1
            ok = ((yy + dy >= 0) & (yy + dy < H) &
                  (xx + dx >= 0) & (xx + dx < W))
            rows.append(ok)
    tap_mask = jnp.tile(jnp.stack(rows, axis=0).astype(jnp.float32),
                        (1, B))                                   # (9, N)

    # Rows that get a sigmoid: class heatmap + offsets.
    sig_mask = (jnp.arange(Cpad) < C + 2).astype(jnp.float32).reshape(Cpad, 1)

    kernel = functools.partial(_centernet_head_kernel, W=W, K=K, N=N)

    out_flat = pl.pallas_call(
        kernel,
        out_shape=jax.ShapeDtypeStruct((Cpad, N), jnp.float32),
        in_specs=[pl.BlockSpec(memory_space=pltpu.MemorySpace.VMEM)] * 7,
        out_specs=pl.BlockSpec(memory_space=pltpu.MemorySpace.VMEM),
        scratch_shapes=[pltpu.VMEM((9 * K, N), jnp.bfloat16)],
        compiler_params=pltpu.CompilerParams(
            vmem_limit_bytes=32 * 1024 * 1024),
    )(x_flat, w1_mat, b1_col, wh, bh, tap_mask, sig_mask)

    # (Cpad, B*HW) -> (B, Cout, H, W); tiny post-kernel layout op.
    out = jnp.transpose(out_flat.reshape(Cpad, B, H, W), (1, 0, 2, 3))
    return out[:, :Cout]


def centernet_head_reference(x, conv1_w, conv1_b, cls_w, cls_b,
                             off_w, off_b, size_w, size_b):
    """Pure-JAX (XLA conv, f32 HIGHEST) reference with identical semantics."""
    dn = ('NCHW', 'OIHW', 'NCHW')
    hp = lax.Precision.HIGHEST
    h = lax.conv_general_dilated(x, conv1_w, (1, 1), ((1, 1), (1, 1)),
                                 dimension_numbers=dn, precision=hp)
    h = jax.nn.relu(h + conv1_b.reshape(1, -1, 1, 1))

    def head(w, b):
        y = lax.conv_general_dilated(h, w, (1, 1), ((0, 0), (0, 0)),
                                     dimension_numbers=dn, precision=hp)
        return y + b.reshape(1, -1, 1, 1)

    cls = jax.nn.sigmoid(head(cls_w, cls_b))
    off = jax.nn.sigmoid(head(off_w, off_b))
    size = head(size_w, size_b)
    return jnp.concatenate([cls, off, size], axis=1)


if __name__ == "__main__":
    # CenterNetHead defaults: k_in_channels=64, c_classes=2.
    K, C = 64, 2
    B, H, W = 2, 16, 16

    key = jax.random.PRNGKey(0)
    keys = jax.random.split(key, 9)

    x = jax.random.normal(keys[0], (B, K, H, W), dtype=jnp.float32)

    # Parameters in PyTorch layouts: conv1 (out,in,3,3); 1x1 heads (out,in,1,1).
    conv1_w = jax.random.normal(keys[1], (K, K, 3, 3), dtype=jnp.float32) * 0.05
    conv1_b = jax.random.normal(keys[2], (K,), dtype=jnp.float32) * 0.05
    cls_w = jax.random.normal(keys[3], (C, K, 1, 1), dtype=jnp.float32) * 0.05
    cls_b = jax.random.normal(keys[4], (C,), dtype=jnp.float32) * 0.05
    off_w = jax.random.normal(keys[5], (2, K, 1, 1), dtype=jnp.float32) * 0.05
    off_b = jax.random.normal(keys[6], (2,), dtype=jnp.float32) * 0.05
    size_w = jax.random.normal(keys[7], (2, K, 1, 1), dtype=jnp.float32) * 0.05
    size_b = jax.random.normal(keys[8], (2,), dtype=jnp.float32) * 0.05

    out = centernet_head_forward(x, conv1_w, conv1_b, cls_w, cls_b,
                                 off_w, off_b, size_w, size_b)
    out = jax.block_until_ready(out)

    ref = centernet_head_reference(x, conv1_w, conv1_b, cls_w, cls_b,
                                   off_w, off_b, size_w, size_b)

    assert out.shape == (B, C + 4, H, W), out.shape
    # bf16 MXU operands (with f32 accumulation) -> intentionally relaxed
    # tolerance vs. the all-f32 XLA reference.
    max_err = float(jnp.max(jnp.abs(out - ref)))
    assert jnp.allclose(out, ref, atol=5e-2, rtol=5e-2), f"max |err| = {max_err}"

    print("KERNEL_OK")
</pallas_src>

<mosaic_0001>
module attributes {stable_mosaic.version = 11 : i64} {
  func.func @_centernet_head_kernel(%arg0: memref<64x512xf32, #tpu.memory_space<vmem>>, %arg1: memref<64x576xbf16, #tpu.memory_space<vmem>>, %arg2: memref<64x1xf32, #tpu.memory_space<vmem>>, %arg3: memref<8x64xbf16, #tpu.memory_space<vmem>>, %arg4: memref<8x1xf32, #tpu.memory_space<vmem>>, %arg5: memref<9x512xf32, #tpu.memory_space<vmem>>, %arg6: memref<8x1xf32, #tpu.memory_space<vmem>>, %arg7: memref<8x512xf32, #tpu.memory_space<vmem>>, %arg8: memref<576x512xbf16, #tpu.memory_space<vmem>>) attributes {dimension_semantics = [], scalar_prefetch = 0 : i64, scratch_operands = 1 : i64, tpu.core_type = #tpu.core_type<tc>} {
    %c0 = arith.constant 0 : index
    %c0_0 = arith.constant 0 : index
    %0 = vector.load %arg0[%c0, %c0_0] : memref<64x512xf32, #tpu.memory_space<vmem>>, vector<64x512xf32>
    %c17_i32 = arith.constant 17 : i32
    %1 = tpu.dynamic_rotate %0 by %c17_i32 dim 1 : vector<64x512xf32>, i32 -> vector<64x512xf32>
    %c0_1 = arith.constant 0 : index
    %c0_2 = arith.constant 0 : index
    %2 = vector.load %arg5[%c0_1, %c0_2] : memref<9x512xf32, #tpu.memory_space<vmem>>, vector<1x512xf32>
    %3 = vector.broadcast %2 : vector<1x512xf32> to vector<64x512xf32>
    %4 = arith.mulf %1, %3 : vector<64x512xf32>
    %5 = arith.truncf %4 : vector<64x512xf32> to vector<64x512xbf16>
    %c0_3 = arith.constant 0 : index
    %c0_4 = arith.constant 0 : index
    %6 = vector.load %arg8[%c0_3, %c0_4] : memref<576x512xbf16, #tpu.memory_space<vmem>>, vector<64x512xbf16>
    tpu.vector_store %arg8[%c0_3, %c0_4], %5 {strides = array<i32>} : memref<576x512xbf16, #tpu.memory_space<vmem>>, vector<64x512xbf16>,
    %c0_5 = arith.constant 0 : index
    %c0_6 = arith.constant 0 : index
    %7 = vector.load %arg0[%c0_5, %c0_6] : memref<64x512xf32, #tpu.memory_space<vmem>>, vector<64x512xf32>
    %c16_i32 = arith.constant 16 : i32
    %8 = tpu.dynamic_rotate %7 by %c16_i32 dim 1 : vector<64x512xf32>, i32 -> vector<64x512xf32>
    %c1 = arith.constant 1 : index
    %c0_7 = arith.constant 0 : index
    %9 = vector.load %arg5[%c1, %c0_7] : memref<9x512xf32, #tpu.memory_space<vmem>>, vector<1x512xf32>
    %10 = vector.broadcast %9 : vector<1x512xf32> to vector<64x512xf32>
    %11 = arith.mulf %8, %10 : vector<64x512xf32>
    %12 = arith.truncf %11 : vector<64x512xf32> to vector<64x512xbf16>
    %c64 = arith.constant 64 : index
    %c0_8 = arith.constant 0 : index
    %13 = vector.load %arg8[%c64, %c0_8] : memref<576x512xbf16, #tpu.memory_space<vmem>>, vector<64x512xbf16>
    tpu.vector_store %arg8[%c64, %c0_8], %12 {strides = array<i32>} : memref<576x512xbf16, #tpu.memory_space<vmem>>, vector<64x512xbf16>,
    %c0_9 = arith.constant 0 : index
    %c0_10 = arith.constant 0 : index
    %14 = vector.load %arg0[%c0_9, %c0_10] : memref<64x512xf32, #tpu.memory_space<vmem>>, vector<64x512xf32>
    %c15_i32 = arith.constant 15 : i32
    %15 = tpu.dynamic_rotate %14 by %c15_i32 dim 1 : vector<64x512xf32>, i32 -> vector<64x512xf32>
    %c2 = arith.constant 2 : index
    %c0_11 = arith.constant 0 : index
    %16 = vector.load %arg5[%c2, %c0_11] : memref<9x512xf32, #tpu.memory_space<vmem>>, vector<1x512xf32>
    %17 = vector.broadcast %16 : vector<1x512xf32> to vector<64x512xf32>
    %18 = arith.mulf %15, %17 : vector<64x512xf32>
    %19 = arith.truncf %18 : vector<64x512xf32> to vector<64x512xbf16>
    %c128 = arith.constant 128 : index
    %c0_12 = arith.constant 0 : index
    %20 = vector.load %arg8[%c128, %c0_12] : memref<576x512xbf16, #tpu.memory_space<vmem>>, vector<64x512xbf16>
    tpu.vector_store %arg8[%c128, %c0_12], %19 {strides = array<i32>} : memref<576x512xbf16, #tpu.memory_space<vmem>>, vector<64x512xbf16>,
    %c0_13 = arith.constant 0 : index
    %c0_14 = arith.constant 0 : index
    %21 = vector.load %arg0[%c0_13, %c0_14] : memref<64x512xf32, #tpu.memory_space<vmem>>, vector<64x512xf32>
    %c1_i32 = arith.constant 1 : i32
    %22 = tpu.dynamic_rotate %21 by %c1_i32 dim 1 : vector<64x512xf32>, i32 -> vector<64x512xf32>
    %c3 = arith.constant 3 : index
    %c0_15 = arith.constant 0 : index
    %23 = vector.load %arg5[%c3, %c0_15] : memref<9x512xf32, #tpu.memory_space<vmem>>, vector<1x512xf32>
    %24 = vector.broadcast %23 : vector<1x512xf32> to vector<64x512xf32>
    %25 = arith.mulf %22, %24 : vector<64x512xf32>
    %26 = arith.truncf %25 : vector<64x512xf32> to vector<64x512xbf16>
    %c192 = arith.constant 192 : index
    %c0_16 = arith.constant 0 : index
    %27 = vector.load %arg8[%c192, %c0_16] : memref<576x512xbf16, #tpu.memory_space<vmem>>, vector<64x512xbf16>
    tpu.vector_store %arg8[%c192, %c0_16], %26 {strides = array<i32>} : memref<576x512xbf16, #tpu.memory_space<vmem>>, vector<64x512xbf16>,
    %c0_17 = arith.constant 0 : index
    %c0_18 = arith.constant 0 : index
    %28 = vector.load %arg0[%c0_17, %c0_18] : memref<64x512xf32, #tpu.memory_space<vmem>>, vector<64x512xf32>
    %29 = arith.truncf %28 : vector<64x512xf32> to vector<64x512xbf16>
    %c256 = arith.constant 256 : index
    %c0_19 = arith.constant 0 : index
    %30 = vector.load %arg8[%c256, %c0_19] : memref<576x512xbf16, #tpu.memory_space<vmem>>, vector<64x512xbf16>
    tpu.vector_store %arg8[%c256, %c0_19], %29 {strides = array<i32>} : memref<576x512xbf16, #tpu.memory_space<vmem>>, vector<64x512xbf16>,
    %c0_20 = arith.constant 0 : index
    %c0_21 = arith.constant 0 : index
    %31 = vector.load %arg0[%c0_20, %c0_21] : memref<64x512xf32, #tpu.memory_space<vmem>>, vector<64x512xf32>
    %c511_i32 = arith.constant 511 : i32
    %32 = tpu.dynamic_rotate %31 by %c511_i32 dim 1 : vector<64x512xf32>, i32 -> vector<64x512xf32>
    %c5 = arith.constant 5 : index
    %c0_22 = arith.constant 0 : index
    %33 = vector.load %arg5[%c5, %c0_22] : memref<9x512xf32, #tpu.memory_space<vmem>>, vector<1x512xf32>
    %34 = vector.broadcast %33 : vector<1x512xf32> to vector<64x512xf32>
    %35 = arith.mulf %32, %34 : vector<64x512xf32>
    %36 = arith.truncf %35 : vector<64x512xf32> to vector<64x512xbf16>
    %c320 = arith.constant 320 : index
    %c0_23 = arith.constant 0 : index
    %37 = vector.load %arg8[%c320, %c0_23] : memref<576x512xbf16, #tpu.memory_space<vmem>>, vector<64x512xbf16>
    tpu.vector_store %arg8[%c320, %c0_23], %36 {strides = array<i32>} : memref<576x512xbf16, #tpu.memory_space<vmem>>, vector<64x512xbf16>,
    %c0_24 = arith.constant 0 : index
    %c0_25 = arith.constant 0 : index
    %38 = vector.load %arg0[%c0_24, %c0_25] : memref<64x512xf32, #tpu.memory_space<vmem>>, vector<64x512xf32>
    %c497_i32 = arith.constant 497 : i32
    %39 = tpu.dynamic_rotate %38 by %c497_i32 dim 1 : vector<64x512xf32>, i32 -> vector<64x512xf32>
    %c6 = arith.constant 6 : index
    %c0_26 = arith.constant 0 : index
    %40 = vector.load %arg5[%c6, %c0_26] : memref<9x512xf32, #tpu.memory_space<vmem>>, vector<1x512xf32>
    %41 = vector.broadcast %40 : vector<1x512xf32> to vector<64x512xf32>
    %42 = arith.mulf %39, %41 : vector<64x512xf32>
    %43 = arith.truncf %42 : vector<64x512xf32> to vector<64x512xbf16>
    %c384 = arith.constant 384 : index
    %c0_27 = arith.constant 0 : index
    %44 = vector.load %arg8[%c384, %c0_27] : memref<576x512xbf16, #tpu.memory_space<vmem>>, vector<64x512xbf16>
    tpu.vector_store %arg8[%c384, %c0_27], %43 {strides = array<i32>} : memref<576x512xbf16, #tpu.memory_space<vmem>>, vector<64x512xbf16>,
    %c0_28 = arith.constant 0 : index
    %c0_29 = arith.constant 0 : index
    %45 = vector.load %arg0[%c0_28, %c0_29] : memref<64x512xf32, #tpu.memory_space<vmem>>, vector<64x512xf32>
    %c496_i32 = arith.constant 496 : i32
    %46 = tpu.dynamic_rotate %45 by %c496_i32 dim 1 : vector<64x512xf32>, i32 -> vector<64x512xf32>
    %c7 = arith.constant 7 : index
    %c0_30 = arith.constant 0 : index
    %47 = vector.load %arg5[%c7, %c0_30] : memref<9x512xf32, #tpu.memory_space<vmem>>, vector<1x512xf32>
    %48 = vector.broadcast %47 : vector<1x512xf32> to vector<64x512xf32>
    %49 = arith.mulf %46, %48 : vector<64x512xf32>
    %50 = arith.truncf %49 : vector<64x512xf32> to vector<64x512xbf16>
    %c448 = arith.constant 448 : index
    %c0_31 = arith.constant 0 : index
    %51 = vector.load %arg8[%c448, %c0_31] : memref<576x512xbf16, #tpu.memory_space<vmem>>, vector<64x512xbf16>
    tpu.vector_store %arg8[%c448, %c0_31], %50 {strides = array<i32>} : memref<576x512xbf16, #tpu.memory_space<vmem>>, vector<64x512xbf16>,
    %c0_32 = arith.constant 0 : index
    %c0_33 = arith.constant 0 : index
    %52 = vector.load %arg0[%c0_32, %c0_33] : memref<64x512xf32, #tpu.memory_space<vmem>>, vector<64x512xf32>
    %c495_i32 = arith.constant 495 : i32
    %53 = tpu.dynamic_rotate %52 by %c495_i32 dim 1 : vector<64x512xf32>, i32 -> vector<64x512xf32>
    %c8 = arith.constant 8 : index
    %c0_34 = arith.constant 0 : index
    %54 = vector.load %arg5[%c8, %c0_34] : memref<9x512xf32, #tpu.memory_space<vmem>>, vector<1x512xf32>
    %55 = vector.broadcast %54 : vector<1x512xf32> to vector<64x512xf32>
    %56 = arith.mulf %53, %55 : vector<64x512xf32>
    %57 = arith.truncf %56 : vector<64x512xf32> to vector<64x512xbf16>
    %c512 = arith.constant 512 : index
    %c0_35 = arith.constant 0 : index
    %58 = vector.load %arg8[%c512, %c0_35] : memref<576x512xbf16, #tpu.memory_space<vmem>>, vector<64x512xbf16>
    tpu.vector_store %arg8[%c512, %c0_35], %57 {strides = array<i32>} : memref<576x512xbf16, #tpu.memory_space<vmem>>, vector<64x512xbf16>,
    %c0_36 = arith.constant 0 : index
    %c0_37 = arith.constant 0 : index
    %59 = vector.load %arg1[%c0_36, %c0_37] : memref<64x576xbf16, #tpu.memory_space<vmem>>, vector<64x576xbf16>
    %c0_38 = arith.constant 0 : index
    %c0_39 = arith.constant 0 : index
    %60 = vector.load %arg8[%c0_38, %c0_39] : memref<576x512xbf16, #tpu.memory_space<vmem>>, vector<576x512xbf16>
    %cst = arith.constant dense<0.000000e+00> : vector<64x512xf32>
    %61 = tpu.matmul %59, %60, %cst {dimension_numbers = #tpu.dot_dimension_numbers<[1], [0], [0], [1], [0, 0, 1, 1], [], []>} : vector<64x576xbf16>, vector<576x512xbf16>, vector<64x512xf32> -> vector<64x512xf32>
    %c0_40 = arith.constant 0 : index
    %c0_41 = arith.constant 0 : index
    %62 = vector.load %arg2[%c0_40, %c0_41] : memref<64x1xf32, #tpu.memory_space<vmem>>, vector<64x1xf32>
    %63 = vector.broadcast %62 : vector<64x1xf32> to vector<64x512xf32>
    %64 = arith.addf %61, %63 : vector<64x512xf32>
    %cst_42 = arith.constant 0.000000e+00 : f32
    %65 = vector.broadcast %cst_42 : f32 to vector<64x512xf32>
    %66 = arith.maximumf %64, %65 : vector<64x512xf32>
    %c0_43 = arith.constant 0 : index
    %c0_44 = arith.constant 0 : index
    %67 = vector.load %arg3[%c0_43, %c0_44] : memref<8x64xbf16, #tpu.memory_space<vmem>>, vector<8x64xbf16>
    %68 = arith.truncf %66 : vector<64x512xf32> to vector<64x512xbf16>
    %cst_45 = arith.constant dense<0.000000e+00> : vector<8x512xf32>
    %69 = tpu.matmul %67, %68, %cst_45 {dimension_numbers = #tpu.dot_dimension_numbers<[1], [0], [0], [1], [0, 0, 1, 1], [], []>} : vector<8x64xbf16>, vector<64x512xbf16>, vector<8x512xf32> -> vector<8x512xf32>
    %c0_46 = arith.constant 0 : index
    %c0_47 = arith.constant 0 : index
    %70 = vector.load %arg4[%c0_46, %c0_47] : memref<8x1xf32, #tpu.memory_space<vmem>>, vector<8x1xf32>
    %71 = vector.broadcast %70 : vector<8x1xf32> to vector<8x512xf32>
    %72 = arith.addf %69, %71 : vector<8x512xf32>
    %73 = arith.negf %72 : vector<8x512xf32>
    %74 = math.exp %73 : vector<8x512xf32>
    %cst_48 = arith.constant 1.000000e+00 : f32
    %75 = vector.broadcast %cst_48 : f32 to vector<8x512xf32>
    %76 = arith.addf %75, %74 : vector<8x512xf32>
    %77 = arith.divf %75, %76 : vector<8x512xf32>
    %c0_49 = arith.constant 0 : index
    %c0_50 = arith.constant 0 : index
    %78 = vector.load %arg6[%c0_49, %c0_50] : memref<8x1xf32, #tpu.memory_space<vmem>>, vector<8x1xf32>
    %79 = arith.subf %77, %72 : vector<8x512xf32>
    %80 = vector.broadcast %78 : vector<8x1xf32> to vector<8x512xf32>
    %81 = arith.mulf %80, %79 : vector<8x512xf32>
    %82 = arith.addf %72, %81 : vector<8x512xf32>
    %c0_51 = arith.constant 0 : index
    %c0_52 = arith.constant 0 : index
    %83 = vector.load %arg7[%c0_51, %c0_52] : memref<8x512xf32, #tpu.memory_space<vmem>>, vector<8x512xf32>
    tpu.vector_store %arg7[%c0_51, %c0_52], %82 {strides = array<i32>} : memref<8x512xf32, #tpu.memory_space<vmem>>, vector<8x512xf32>,
    return
  }
}

</mosaic_0001>

<llo_original>
// kernel: tpu_custom_call.1
$region0: #{tpu_custom_call.1}
  #allocation0 [shape = 'u32[]', space=smem, size = 0x4, offset = 0x4, fixed_abs, tag = 'smem constant byte address 0x4 - core index']
  #allocation1 [shape = 'u32[144,128]{1,0:T(1,128)}', space=vmem, size = 0x12000, scoped, tag = 'internal scratch']
  #allocation2 [shape = 'bf16[576,512]{1,0:T(16,128)(2,1)}', space=vmem, size = 0x90000, scoped, tag = 'scratch operand']
  %s0 = inlined_call_operand.hbm [shape: f32[64,512], index: 0, kind: input, shape index: {}]
  %s1 = inlined_call_operand.hbm [shape: bf16[64,576], index: 1, kind: input, shape index: {}]
  %s2 = inlined_call_operand.vmem [shape: f32[64,1], index: 2, kind: input, shape index: {}]
  %s3 = inlined_call_operand.vmem [shape: bf16[8,64], index: 3, kind: input, shape index: {}]
  %s4 = inlined_call_operand.vmem [shape: f32[8,1], index: 4, kind: input, shape index: {}]
  %s5 = inlined_call_operand.vmem [shape: f32[9,512], index: 5, kind: input, shape index: {}]
  %s6 = inlined_call_operand.vmem [shape: f32[8,1], index: 6, kind: input, shape index: {}]
  %s7 = inlined_call_operand.hbm [shape: f32[8,512], index: 7, kind: output, shape index: {}]
  %s8 = sld [smem:[#allocation0]]
  $region46: #{tpu_custom_call.1} parent=0
    _
  %s10 = ssub.s32 1, %s8
  %s11 = scalar_select 0, %s10, %s8
  $region1: #{tpu_custom_call.1} parent=0
    #allocation3 [shape = 'u8[131072]{0}', space=vmem, size = 0x20000, scoped, tag = 'input window, operand 0, single buffered']
    #allocation4 [shape = 's32[1]{0}', space=sflag, size = 0x4, scoped, tag = 'scoped memory for tpu_custom_call.1']
    #allocation5 [shape = 's32[1]{0}', space=sflag, size = 0x4, scoped, tag = 'scoped memory for tpu_custom_call.1']
    #allocation6 [shape = 'u8[81920]{0}', space=vmem, size = 0x14000, scoped, tag = 'input window, operand 1, single buffered']
    #allocation7 [shape = 's32[1]{0}', space=sflag, size = 0x4, scoped, tag = 'scoped memory for tpu_custom_call.1']
    #allocation8 [shape = 'u8[16384]{0}', space=vmem, size = 0x4000, scoped, tag = 'output window, operand 0, single buffered']
    %12 = vsyncpa [#allocation4], 0
    %13 = vsyncpa [#allocation7], 0
    %14 = vsyncpa [#allocation5], 0
    // Predicated region
    $region2: #{tpu_custom_call.1} parent=1 // pred_check
      _
    $region3: #{tpu_custom_call.1} parent=1 // pred_check_branch
      %16 = sbr.rel (0) target = $region5
    $region4: #{tpu_custom_call.1} parent=1 // pred_region
      %s18 = ssub.s32 4096, 4096
      %19 = vsyncadd [#allocation4], %s18
      %s20 = sshll.u32 [#allocation3], 4
      %s21 = int_to_ptr.vmem [resolvable:$true] %s20
      %26 = dma.hbm_to_vmem [thread:$0]  %s0, 4096, %s21, [#allocation4], 512, 512, 32
    $region5: #{tpu_custom_call.1} parent=1 // pred_fallthru
      _
    // Predicated region
    $region6: #{tpu_custom_call.1} parent=1 // pred_check
      _
    $region7: #{tpu_custom_call.1} parent=1 // pred_check_branch
      %28 = sbr.rel (0) target = $region9
    $region8: #{tpu_custom_call.1} parent=1 // pred_region
      %s30 = ssub.s32 2560, 2560
      %31 = vsyncadd [#allocation7], %s30
      %s32 = sshll.u32 [#allocation6], 4
      %s33 = int_to_ptr.vmem [resolvable:$true] %s32
      %38 = dma.hbm_to_vmem [thread:$0]  %s1, 2560, %s33, [#allocation7], 320, 320, 20
    $region9: #{tpu_custom_call.1} parent=1 // pred_fallthru
      _
    // Predicated region
    $region10: #{tpu_custom_call.1} parent=1 // pred_check
      _
    $region11: #{tpu_custom_call.1} parent=1 // pred_check_branch
      %40 = sbr.rel (0) target = $region13
    $region12: #{tpu_custom_call.1} parent=1 // pred_region
      _
    $region13: #{tpu_custom_call.1} parent=1 // pred_fallthru
      _
    // Predicated region
    $region14: #{tpu_custom_call.1} parent=1 // pred_check
      _
    $region15: #{tpu_custom_call.1} parent=1 // pred_check_branch
      %42 = sbr.rel (0) target = $region17
    $region16: #{tpu_custom_call.1} parent=1 // pred_region
      _
    $region17: #{tpu_custom_call.1} parent=1 // pred_fallthru
      _
    // Predicated region
    $region18: #{tpu_custom_call.1} parent=1 // pred_check
      _
    $region19: #{tpu_custom_call.1} parent=1 // pred_check_branch
      %44 = sbr.rel (0) target = $region21
    $region20: #{tpu_custom_call.1} parent=1 // pred_region
      _
    $region21: #{tpu_custom_call.1} parent=1 // pred_fallthru
      _
    // Predicated region
    $region22: #{tpu_custom_call.1} parent=1 // pred_check
      _
    $region23: #{tpu_custom_call.1} parent=1 // pred_check_branch
      %46 = sbr.rel (0) target = $region25
    $region24: #{tpu_custom_call.1} parent=1 // pred_region
      _
    $region25: #{tpu_custom_call.1} parent=1 // pred_fallthru
      _
    // Predicated region
    $region26: #{tpu_custom_call.1} parent=1 // pred_check
      _
    $region27: #{tpu_custom_call.1} parent=1 // pred_check_branch
      %48 = sbr.rel (0) target = $region29
    $region28: #{tpu_custom_call.1} parent=1 // pred_region
      _
    $region29: #{tpu_custom_call.1} parent=1 // pred_fallthru
      _
    // Predicated region
    $region30: #{tpu_custom_call.1} parent=1 // pred_check
      _
    $region31: #{tpu_custom_call.1} parent=1 // pred_check_branch
      %50 = sbr.rel (0) target = $region33
    $region32: #{tpu_custom_call.1} parent=1 // pred_region
      %51 = dma.done [#allocation4], 4096
    $region33: #{tpu_custom_call.1} parent=1 // pred_fallthru
      _
    // Predicated region
    $region34: #{tpu_custom_call.1} parent=1 // pred_check
      _
    $region35: #{tpu_custom_call.1} parent=1 // pred_check_branch
      %53 = sbr.rel (0) target = $region37
    $region36: #{tpu_custom_call.1} parent=1 // pred_region
      %54 = dma.done [#allocation7], 2560
    $region37: #{tpu_custom_call.1} parent=1 // pred_fallthru
      _
    %v56 = vld [vmem:[#allocation3] sm:$0xff]
    %v57 = vld [vmem:[#allocation3 + $0x8] sm:$0xff]
    %v58 = vld [vmem:[#allocation3 + $0x10] sm:$0xff]
    %v59 = vld [vmem:[#allocation3 + $0x18] sm:$0xff]
    %v60 = vld [vmem:[#allocation3 + $0x20] sm:$0xff]
    %v61 = vld [vmem:[#allocation3 + $0x28] sm:$0xff]
    %v62 = vld [vmem:[#allocation3 + $0x30] sm:$0xff]
    %v63 = vld [vmem:[#allocation3 + $0x38] sm:$0xff]
    %v64 = vld [vmem:[#allocation3 + $0x40] sm:$0xff]
    %v65 = vld [vmem:[#allocation3 + $0x48] sm:$0xff]
    %v66 = vld [vmem:[#allocation3 + $0x50] sm:$0xff]
    %v67 = vld [vmem:[#allocation3 + $0x58] sm:$0xff]
    %v68 = vld [vmem:[#allocation3 + $0x60] sm:$0xff]
    %v69 = vld [vmem:[#allocation3 + $0x68] sm:$0xff]
    %v70 = vld [vmem:[#allocation3 + $0x70] sm:$0xff]
    %v71 = vld [vmem:[#allocation3 + $0x78] sm:$0xff]
    %v72 = vld [vmem:[#allocation3 + $0x80] sm:$0xff]
    %v73 = vld [vmem:[#allocation3 + $0x88] sm:$0xff]
    %v74 = vld [vmem:[#allocation3 + $0x90] sm:$0xff]
    %v75 = vld [vmem:[#allocation3 + $0x98] sm:$0xff]
    %v76 = vld [vmem:[#allocation3 + $0xa0] sm:$0xff]
    %v77 = vld [vmem:[#allocation3 + $0xa8] sm:$0xff]
    %v78 = vld [vmem:[#allocation3 + $0xb0] sm:$0xff]
    %v79 = vld [vmem:[#allocation3 + $0xb8] sm:$0xff]
    %v80 = vld [vmem:[#allocation3 + $0xc0] sm:$0xff]
    %v81 = vld [vmem:[#allocation3 + $0xc8] sm:$0xff]
    %v82 = vld [vmem:[#allocation3 + $0xd0] sm:$0xff]
    %v83 = vld [vmem:[#allocation3 + $0xd8] sm:$0xff]
    %v84 = vld [vmem:[#allocation3 + $0xe0] sm:$0xff]
    %v85 = vld [vmem:[#allocation3 + $0xe8] sm:$0xff]
    %v86 = vld [vmem:[#allocation3 + $0xf0] sm:$0xff]
    %v87 = vld [vmem:[#allocation3 + $0xf8] sm:$0xff]
    %88 = vrot.lane.b32.xlu0 %v56, 17
    %v89 = vpop.permute.xlu0 %88
    %90 = vrot.lane.b32.xlu0 %v60, 17
    %v91 = vpop.permute.xlu0 %90
    %92 = vrot.lane.b32.xlu0 %v64, 17
    %v93 = vpop.permute.xlu0 %92
    %94 = vrot.lane.b32.xlu0 %v68, 17
    %v95 = vpop.permute.xlu0 %94
    %96 = vrot.lane.b32.xlu0 %v72, 17
    %v97 = vpop.permute.xlu0 %96
    %98 = vrot.lane.b32.xlu0 %v76, 17
    %v99 = vpop.permute.xlu0 %98
    %100 = vrot.lane.b32.xlu0 %v80, 17
    %v101 = vpop.permute.xlu0 %100
    %102 = vrot.lane.b32.xlu0 %v84, 17
    %v103 = vpop.permute.xlu0 %102
    %104 = vrot.lane.b32.xlu0 %v57, 17
    %v105 = vpop.permute.xlu0 %104
    %106 = vrot.lane.b32.xlu0 %v61, 17
    %v107 = vpop.permute.xlu0 %106
    %108 = vrot.lane.b32.xlu0 %v65, 17
    %v109 = vpop.permute.xlu0 %108
    %110 = vrot.lane.b32.xlu0 %v69, 17
    %v111 = vpop.permute.xlu0 %110
    %112 = vrot.lane.b32.xlu0 %v73, 17
    %v113 = vpop.permute.xlu0 %112
    %114 = vrot.lane.b32.xlu0 %v77, 17
    %v115 = vpop.permute.xlu0 %114
    %116 = vrot.lane.b32.xlu0 %v81, 17
    %v117 = vpop.permute.xlu0 %116
    %118 = vrot.lane.b32.xlu0 %v85, 17
    %v119 = vpop.permute.xlu0 %118
    %120 = vrot.lane.b32.xlu0 %v58, 17
    %v121 = vpop.permute.xlu0 %120
    %122 = vrot.lane.b32.xlu0 %v62, 17
    %v123 = vpop.permute.xlu0 %122
    %124 = vrot.lane.b32.xlu0 %v66, 17
    %v125 = vpop.permute.xlu0 %124
    %126 = vrot.lane.b32.xlu0 %v70, 17
    %v127 = vpop.permute.xlu0 %126
    %128 = vrot.lane.b32.xlu0 %v74, 17
    %v129 = vpop.permute.xlu0 %128
    %130 = vrot.lane.b32.xlu0 %v78, 17
    %v131 = vpop.permute.xlu0 %130
    %132 = vrot.lane.b32.xlu0 %v82, 17
    %v133 = vpop.permute.xlu0 %132
    %134 = vrot.lane.b32.xlu0 %v86, 17
    %v135 = vpop.permute.xlu0 %134
    %136 = vrot.lane.b32.xlu0 %v59, 17
    %v137 = vpop.permute.xlu0 %136
    %138 = vrot.lane.b32.xlu0 %v63, 17
    %v139 = vpop.permute.xlu0 %138
    %140 = vrot.lane.b32.xlu0 %v67, 17
    %v141 = vpop.permute.xlu0 %140
    %142 = vrot.lane.b32.xlu0 %v71, 17
    %v143 = vpop.permute.xlu0 %142
    %144 = vrot.lane.b32.xlu0 %v75, 17
    %v145 = vpop.permute.xlu0 %144
    %146 = vrot.lane.b32.xlu0 %v79, 17
    %v147 = vpop.permute.xlu0 %146
    %148 = vrot.lane.b32.xlu0 %v83, 17
    %v149 = vpop.permute.xlu0 %148
    %150 = vrot.lane.b32.xlu0 %v87, 17
    %v151 = vpop.permute.xlu0 %150
    %v152 = vlaneseq
    %v153 = vand.u32 %v152, 127
    %vm154 = vcmp.lt.s32.totalorder %v153, 17
    %v155 = vsel %vm154, %v121, %v137
    %v156 = vsel %vm154, %v123, %v139
    %v157 = vsel %vm154, %v125, %v141
    %v158 = vsel %vm154, %v127, %v143
    %v159 = vsel %vm154, %v129, %v145
    %v160 = vsel %vm154, %v131, %v147
    %v161 = vsel %vm154, %v133, %v149
    %v162 = vsel %vm154, %v135, %v151
    %v163 = vsel %vm154, %v105, %v121
    %v164 = vsel %vm154, %v107, %v123
    %v165 = vsel %vm154, %v109, %v125
    %v166 = vsel %vm154, %v111, %v127
    %v167 = vsel %vm154, %v113, %v129
    %v168 = vsel %vm154, %v115, %v131
    %v169 = vsel %vm154, %v117, %v133
    %v170 = vsel %vm154, %v119, %v135
    %v171 = vsel %vm154, %v89, %v105
    %v172 = vsel %vm154, %v91, %v107
    %v173 = vsel %vm154, %v93, %v109
    %v174 = vsel %vm154, %v95, %v111
    %v175 = vsel %vm154, %v97, %v113
    %v176 = vsel %vm154, %v99, %v115
    %v177 = vsel %vm154, %v101, %v117
    %v178 = vsel %vm154, %v103, %v119
    %v179 = vsel %vm154, %v137, %v89
    %v180 = vsel %vm154, %v139, %v91
    %v181 = vsel %vm154, %v141, %v93
    %v182 = vsel %vm154, %v143, %v95
    %v183 = vsel %vm154, %v145, %v97
    %v184 = vsel %vm154, %v147, %v99
    %v185 = vsel %vm154, %v149, %v101
    %v186 = vsel %vm154, %v151, %v103
    %v187 = vld [vmem:[%s5] ss:$8 sm:$0xf]
    %v189 = vlaneseq
    %v190 = vshrl.u32 %v189, 7
    %v191 = vsub.s32 0, %v190
    %v192 = vrot.slane %v187, %v191
    %v193 = vlaneseq
    %v194 = vshrl.u32 %v193, 7
    %v195 = vsub.s32 1, %v194
    %v196 = vrot.slane %v187, %v195
    %v197 = vlaneseq
    %v198 = vshrl.u32 %v197, 7
    %v199 = vsub.s32 2, %v198
    %v200 = vrot.slane %v187, %v199
    %v201 = vlaneseq
    %v202 = vshrl.u32 %v201, 7
    %v203 = vsub.s32 3, %v202
    %v204 = vrot.slane %v187, %v203
    %v209 = vmul.f32 %v179, %v192
    %v210 = vmul.f32 %v171, %v196
    %v211 = vmul.f32 %v163, %v200
    %v212 = vmul.f32 %v155, %v204
    %v213 = vmul.f32 %v180, %v192
    %v214 = vmul.f32 %v172, %v196
    %v215 = vmul.f32 %v164, %v200
    %v216 = vmul.f32 %v156, %v204
    %v217 = vmul.f32 %v181, %v192
    %v218 = vmul.f32 %v173, %v196
    %v219 = vmul.f32 %v165, %v200
    %v220 = vmul.f32 %v157, %v204
    %v221 = vmul.f32 %v182, %v192
    %v222 = vmul.f32 %v174, %v196
    %v223 = vmul.f32 %v166, %v200
    %v224 = vmul.f32 %v158, %v204
    %v225 = vmul.f32 %v183, %v192
    %v226 = vmul.f32 %v175, %v196
    %v227 = vmul.f32 %v167, %v200
    %v228 = vmul.f32 %v159, %v204
    %v229 = vmul.f32 %v184, %v192
    %v230 = vmul.f32 %v176, %v196
    %v231 = vmul.f32 %v168, %v200
    %v232 = vmul.f32 %v160, %v204
    %v233 = vmul.f32 %v185, %v192
    %v234 = vmul.f32 %v177, %v196
    %v235 = vmul.f32 %v169, %v200
    %v236 = vmul.f32 %v161, %v204
    %v237 = vmul.f32 %v186, %v192
    %v238 = vmul.f32 %v178, %v196
    %v239 = vmul.f32 %v170, %v200
    %v240 = vmul.f32 %v162, %v204
    %v241 = vpack.c.bf16 %v213, %v209
    %v242 = vpack.c.bf16 %v214, %v210
    %v243 = vpack.c.bf16 %v215, %v211
    %v244 = vpack.c.bf16 %v216, %v212
    %v245 = vpack.c.bf16 %v221, %v217
    %v246 = vpack.c.bf16 %v222, %v218
    %v247 = vpack.c.bf16 %v223, %v219
    %v248 = vpack.c.bf16 %v224, %v220
    %v249 = vpack.c.bf16 %v229, %v225
    %v250 = vpack.c.bf16 %v230, %v226
    %v251 = vpack.c.bf16 %v231, %v227
    %v252 = vpack.c.bf16 %v232, %v228
    %v253 = vpack.c.bf16 %v237, %v233
    %v254 = vpack.c.bf16 %v238, %v234
    %v255 = vpack.c.bf16 %v239, %v235
    %v256 = vpack.c.bf16 %v240, %v236
    %257 = vst [vmem:[#allocation2] sm:$0xff] %v241
    %258 = vst [vmem:[#allocation2 + $0x8] sm:$0xff] %v242
    %259 = vst [vmem:[#allocation2 + $0x10] sm:$0xff] %v243
    %260 = vst [vmem:[#allocation2 + $0x18] sm:$0xff] %v244
    %261 = vst [vmem:[#allocation2 + $0x20] sm:$0xff] %v245
    %262 = vst [vmem:[#allocation2 + $0x28] sm:$0xff] %v246
    %263 = vst [vmem:[#allocation2 + $0x30] sm:$0xff] %v247
    %264 = vst [vmem:[#allocation2 + $0x38] sm:$0xff] %v248
    %265 = vst [vmem:[#allocation2 + $0x40] sm:$0xff] %v249
    %266 = vst [vmem:[#allocation2 + $0x48] sm:$0xff] %v250
    %267 = vst [vmem:[#allocation2 + $0x50] sm:$0xff] %v251
    %268 = vst [vmem:[#allocation2 + $0x58] sm:$0xff] %v252
    %269 = vst [vmem:[#allocation2 + $0x60] sm:$0xff] %v253
    %270 = vst [vmem:[#allocation2 + $0x68] sm:$0xff] %v254
    %271 = vst [vmem:[#allocation2 + $0x70] sm:$0xff] %v255
    %272 = vst [vmem:[#allocation2 + $0x78] sm:$0xff] %v256
    %v273 = vld [vmem:[#allocation3] sm:$0xff]
    %v274 = vld [vmem:[#allocation3 + $0x8] sm:$0xff]
    %v275 = vld [vmem:[#allocation3 + $0x10] sm:$0xff]
    %v276 = vld [vmem:[#allocation3 + $0x18] sm:$0xff]
    %v277 = vld [vmem:[#allocation3 + $0x20] sm:$0xff]
    %v278 = vld [vmem:[#allocation3 + $0x28] sm:$0xff]
    %v279 = vld [vmem:[#allocation3 + $0x30] sm:$0xff]
    %v280 = vld [vmem:[#allocation3 + $0x38] sm:$0xff]
    %v281 = vld [vmem:[#allocation3 + $0x40] sm:$0xff]
    %v282 = vld [vmem:[#allocation3 + $0x48] sm:$0xff]
    %v283 = vld [vmem:[#allocation3 + $0x50] sm:$0xff]
    %v284 = vld [vmem:[#allocation3 + $0x58] sm:$0xff]
    %v285 = vld [vmem:[#allocation3 + $0x60] sm:$0xff]
    %v286 = vld [vmem:[#allocation3 + $0x68] sm:$0xff]
    %v287 = vld [vmem:[#allocation3 + $0x70] sm:$0xff]
    %v288 = vld [vmem:[#allocation3 + $0x78] sm:$0xff]
    %v289 = vld [vmem:[#allocation3 + $0x80] sm:$0xff]
    %v290 = vld [vmem:[#allocation3 + $0x88] sm:$0xff]
    %v291 = vld [vmem:[#allocation3 + $0x90] sm:$0xff]
    %v292 = vld [vmem:[#allocation3 + $0x98] sm:$0xff]
    %v293 = vld [vmem:[#allocation3 + $0xa0] sm:$0xff]
    %v294 = vld [vmem:[#allocation3 + $0xa8] sm:$0xff]
    %v295 = vld [vmem:[#allocation3 + $0xb0] sm:$0xff]
    %v296 = vld [vmem:[#allocation3 + $0xb8] sm:$0xff]
    %v297 = vld [vmem:[#allocation3 + $0xc0] sm:$0xff]
    %v298 = vld [vmem:[#allocation3 + $0xc8] sm:$0xff]
    %v299 = vld [vmem:[#allocation3 + $0xd0] sm:$0xff]
    %v300 = vld [vmem:[#allocation3 + $0xd8] sm:$0xff]
    %v301 = vld [vmem:[#allocation3 + $0xe0] sm:$0xff]
    %v302 = vld [vmem:[#allocation3 + $0xe8] sm:$0xff]
    %v303 = vld [vmem:[#allocation3 + $0xf0] sm:$0xff]
    %v304 = vld [vmem:[#allocation3 + $0xf8] sm:$0xff]
    %305 = vrot.lane.b32.xlu0 %v273, 16
    %v306 = vpop.permute.xlu0 %305
    %307 = vrot.lane.b32.xlu0 %v277, 16
    %v308 = vpop.permute.xlu0 %307
    %309 = vrot.lane.b32.xlu0 %v281, 16
    %v310 = vpop.permute.xlu0 %309
    %311 = vrot.lane.b32.xlu0 %v285, 16
    %v312 = vpop.permute.xlu0 %311
    %313 = vrot.lane.b32.xlu0 %v289, 16
    %v314 = vpop.permute.xlu0 %313
    %315 = vrot.lane.b32.xlu0 %v293, 16
    %v316 = vpop.permute.xlu0 %315
    %317 = vrot.lane.b32.xlu0 %v297, 16
    %v318 = vpop.permute.xlu0 %317
    %319 = vrot.lane.b32.xlu0 %v301, 16
    %v320 = vpop.permute.xlu0 %319
    %321 = vrot.lane.b32.xlu0 %v274, 16
    %v322 = vpop.permute.xlu0 %321
    %323 = vrot.lane.b32.xlu0 %v278, 16
    %v324 = vpop.permute.xlu0 %323
    %325 = vrot.lane.b32.xlu0 %v282, 16
    %v326 = vpop.permute.xlu0 %325
    %327 = vrot.lane.b32.xlu0 %v286, 16
    %v328 = vpop.permute.xlu0 %327
    %329 = vrot.lane.b32.xlu0 %v290, 16
    %v330 = vpop.permute.xlu0 %329
    %331 = vrot.lane.b32.xlu0 %v294, 16
    %v332 = vpop.permute.xlu0 %331
    %333 = vrot.lane.b32.xlu0 %v298, 16
    %v334 = vpop.permute.xlu0 %333
    %335 = vrot.lane.b32.xlu0 %v302, 16
    %v336 = vpop.permute.xlu0 %335
    %337 = vrot.lane.b32.xlu0 %v275, 16
    %v338 = vpop.permute.xlu0 %337
    %339 = vrot.lane.b32.xlu0 %v279, 16
    %v340 = vpop.permute.xlu0 %339
    %341 = vrot.lane.b32.xlu0 %v283, 16
    %v342 = vpop.permute.xlu0 %341
    %343 = vrot.lane.b32.xlu0 %v287, 16
    %v344 = vpop.permute.xlu0 %343
    %345 = vrot.lane.b32.xlu0 %v291, 16
    %v346 = vpop.permute.xlu0 %345
    %347 = vrot.lane.b32.xlu0 %v295, 16
    %v348 = vpop.permute.xlu0 %347
    %349 = vrot.lane.b32.xlu0 %v299, 16
    %v350 = vpop.permute.xlu0 %349
    %351 = vrot.lane.b32.xlu0 %v303, 16
    %v352 = vpop.permute.xlu0 %351
    %353 = vrot.lane.b32.xlu0 %v276, 16
    %v354 = vpop.permute.xlu0 %353
    %355 = vrot.lane.b32.xlu0 %v280, 16
    %v356 = vpop.permute.xlu0 %355
    %357 = vrot.lane.b32.xlu0 %v284, 16
    %v358 = vpop.permute.xlu0 %357
    %359 = vrot.lane.b32.xlu0 %v288, 16
    %v360 = vpop.permute.xlu0 %359
    %361 = vrot.lane.b32.xlu0 %v292, 16
    %v362 = vpop.permute.xlu0 %361
    %363 = vrot.lane.b32.xlu0 %v296, 16
    %v364 = vpop.permute.xlu0 %363
    %365 = vrot.lane.b32.xlu0 %v300, 16
    %v366 = vpop.permute.xlu0 %365
    %367 = vrot.lane.b32.xlu0 %v304, 16
    %v368 = vpop.permute.xlu0 %367
    %vm369 = vcmp.lt.s32.totalorder %v153, 16
    %v370 = vsel %vm369, %v338, %v354
    %v371 = vsel %vm369, %v340, %v356
    %v372 = vsel %vm369, %v342, %v358
    %v373 = vsel %vm369, %v344, %v360
    %v374 = vsel %vm369, %v346, %v362
    %v375 = vsel %vm369, %v348, %v364
    %v376 = vsel %vm369, %v350, %v366
    %v377 = vsel %vm369, %v352, %v368
    %v378 = vsel %vm369, %v322, %v338
    %v379 = vsel %vm369, %v324, %v340
    %v380 = vsel %vm369, %v326, %v342
    %v381 = vsel %vm369, %v328, %v344
    %v382 = vsel %vm369, %v330, %v346
    %v383 = vsel %vm369, %v332, %v348
    %v384 = vsel %vm369, %v334, %v350
    %v385 = vsel %vm369, %v336, %v352
    %v386 = vsel %vm369, %v306, %v322
    %v387 = vsel %vm369, %v308, %v324
    %v388 = vsel %vm369, %v310, %v326
    %v389 = vsel %vm369, %v312, %v328
    %v390 = vsel %vm369, %v314, %v330
    %v391 = vsel %vm369, %v316, %v332
    %v392 = vsel %vm369, %v318, %v334
    %v393 = vsel %vm369, %v320, %v336
    %v394 = vsel %vm369, %v354, %v306
    %v395 = vsel %vm369, %v356, %v308
    %v396 = vsel %vm369, %v358, %v310
    %v397 = vsel %vm369, %v360, %v312
    %v398 = vsel %vm369, %v362, %v314
    %v399 = vsel %vm369, %v364, %v316
    %v400 = vsel %vm369, %v366, %v318
    %v401 = vsel %vm369, %v368, %v320
    %s402 = scalar_lea.vmem %s5, 1
    %v403 = vld [vmem:[%s402] ss:$8 sm:$0xf]
    %v405 = vlaneseq
    %v406 = vshrl.u32 %v405, 7
    %v407 = vsub.s32 0, %v406
    %v408 = vrot.slane %v403, %v407
    %v409 = vlaneseq
    %v410 = vshrl.u32 %v409, 7
    %v411 = vsub.s32 1, %v410
    %v412 = vrot.slane %v403, %v411
    %v413 = vlaneseq
    %v414 = vshrl.u32 %v413, 7
    %v415 = vsub.s32 2, %v414
    %v416 = vrot.slane %v403, %v415
    %v417 = vlaneseq
    %v418 = vshrl.u32 %v417, 7
    %v419 = vsub.s32 3, %v418
    %v420 = vrot.slane %v403, %v419
    %v425 = vmul.f32 %v394, %v408
    %v426 = vmul.f32 %v386, %v412
    %v427 = vmul.f32 %v378, %v416
    %v428 = vmul.f32 %v370, %v420
    %v429 = vmul.f32 %v395, %v408
    %v430 = vmul.f32 %v387, %v412
    %v431 = vmul.f32 %v379, %v416
    %v432 = vmul.f32 %v371, %v420
    %v433 = vmul.f32 %v396, %v408
    %v434 = vmul.f32 %v388, %v412
    %v435 = vmul.f32 %v380, %v416
    %v436 = vmul.f32 %v372, %v420
    %v437 = vmul.f32 %v397, %v408
    %v438 = vmul.f32 %v389, %v412
    %v439 = vmul.f32 %v381, %v416
    %v440 = vmul.f32 %v373, %v420
    %v441 = vmul.f32 %v398, %v408
    %v442 = vmul.f32 %v390, %v412
    %v443 = vmul.f32 %v382, %v416
    %v444 = vmul.f32 %v374, %v420
    %v445 = vmul.f32 %v399, %v408
    %v446 = vmul.f32 %v391, %v412
    %v447 = vmul.f32 %v383, %v416
    %v448 = vmul.f32 %v375, %v420
    %v449 = vmul.f32 %v400, %v408
    %v450 = vmul.f32 %v392, %v412
    %v451 = vmul.f32 %v384, %v416
    %v452 = vmul.f32 %v376, %v420
    %v453 = vmul.f32 %v401, %v408
    %v454 = vmul.f32 %v393, %v412
    %v455 = vmul.f32 %v385, %v416
    %v456 = vmul.f32 %v377, %v420
    %v457 = vpack.c.bf16 %v429, %v425
    %v458 = vpack.c.bf16 %v430, %v426
    %v459 = vpack.c.bf16 %v431, %v427
    %v460 = vpack.c.bf16 %v432, %v428
    %v461 = vpack.c.bf16 %v437, %v433
    %v462 = vpack.c.bf16 %v438, %v434
    %v463 = vpack.c.bf16 %v439, %v435
    %v464 = vpack.c.bf16 %v440, %v436
    %v465 = vpack.c.bf16 %v445, %v441
    %v466 = vpack.c.bf16 %v446, %v442
    %v467 = vpack.c.bf16 %v447, %v443
    %v468 = vpack.c.bf16 %v448, %v444
    %v469 = vpack.c.bf16 %v453, %v449
    %v470 = vpack.c.bf16 %v454, %v450
    %v471 = vpack.c.bf16 %v455, %v451
    %v472 = vpack.c.bf16 %v456, %v452
    %473 = vst [vmem:[#allocation2 + $0x80] sm:$0xff] %v457
    %474 = vst [vmem:[#allocation2 + $0x88] sm:$0xff] %v458
    %475 = vst [vmem:[#allocation2 + $0x90] sm:$0xff] %v459
    %476 = vst [vmem:[#allocation2 + $0x98] sm:$0xff] %v460
    %477 = vst [vmem:[#allocation2 + $0xa0] sm:$0xff] %v461
    %478 = vst [vmem:[#allocation2 + $0xa8] sm:$0xff] %v462
    %479 = vst [vmem:[#allocation2 + $0xb0] sm:$0xff] %v463
    %480 = vst [vmem:[#allocation2 + $0xb8] sm:$0xff] %v464
    %481 = vst [vmem:[#allocation2 + $0xc0] sm:$0xff] %v465
    %482 = vst [vmem:[#allocation2 + $0xc8] sm:$0xff] %v466
    %483 = vst [vmem:[#allocation2 + $0xd0] sm:$0xff] %v467
    %484 = vst [vmem:[#allocation2 + $0xd8] sm:$0xff] %v468
    %485 = vst [vmem:[#allocation2 + $0xe0] sm:$0xff] %v469
    %486 = vst [vmem:[#allocation2 + $0xe8] sm:$0xff] %v470
    %487 = vst [vmem:[#allocation2 + $0xf0] sm:$0xff] %v471
    %488 = vst [vmem:[#allocation2 + $0xf8] sm:$0xff] %v472
    %v489 = vld [vmem:[#allocation3] sm:$0xff]
    %v490 = vld [vmem:[#allocation3 + $0x8] sm:$0xff]
    %v491 = vld [vmem:[#allocation3 + $0x10] sm:$0xff]
    %v492 = vld [vmem:[#allocation3 + $0x18] sm:$0xff]
    %v493 = vld [vmem:[#allocation3 + $0x20] sm:$0xff]
    %v494 = vld [vmem:[#allocation3 + $0x28] sm:$0xff]
    %v495 = vld [vmem:[#allocation3 + $0x30] sm:$0xff]
    %v496 = vld [vmem:[#allocation3 + $0x38] sm:$0xff]
    %v497 = vld [vmem:[#allocation3 + $0x40] sm:$0xff]
    %v498 = vld [vmem:[#allocation3 + $0x48] sm:$0xff]
    %v499 = vld [vmem:[#allocation3 + $0x50] sm:$0xff]
    %v500 = vld [vmem:[#allocation3 + $0x58] sm:$0xff]
    %v501 = vld [vmem:[#allocation3 + $0x60] sm:$0xff]
    %v502 = vld [vmem:[#allocation3 + $0x68] sm:$0xff]
    %v503 = vld [vmem:[#allocation3 + $0x70] sm:$0xff]
    %v504 = vld [vmem:[#allocation3 + $0x78] sm:$0xff]
    %v505 = vld [vmem:[#allocation3 + $0x80] sm:$0xff]
    %v506 = vld [vmem:[#allocation3 + $0x88] sm:$0xff]
    %v507 = vld [vmem:[#allocation3 + $0x90] sm:$0xff]
    %v508 = vld [vmem:[#allocation3 + $0x98] sm:$0xff]
    %v509 = vld [vmem:[#allocation3 + $0xa0] sm:$0xff]
    %v510 = vld [vmem:[#allocation3 + $0xa8] sm:$0xff]
    %v511 = vld [vmem:[#allocation3 + $0xb0] sm:$0xff]
    %v512 = vld [vmem:[#allocation3 + $0xb8] sm:$0xff]
    %v513 = vld [vmem:[#allocation3 + $0xc0] sm:$0xff]
    %v514 = vld [vmem:[#allocation3 + $0xc8] sm:$0xff]
    %v515 = vld [vmem:[#allocation3 + $0xd0] sm:$0xff]
    %v516 = vld [vmem:[#allocation3 + $0xd8] sm:$0xff]
    %v517 = vld [vmem:[#allocation3 + $0xe0] sm:$0xff]
    %v518 = vld [vmem:[#allocation3 + $0xe8] sm:$0xff]
    %v519 = vld [vmem:[#allocation3 + $0xf0] sm:$0xff]
    %v520 = vld [vmem:[#allocation3 + $0xf8] sm:$0xff]
    %521 = vrot.lane.b32.xlu0 %v489, 15
    %v522 = vpop.permute.xlu0 %521
    %523 = vrot.lane.b32.xlu0 %v493, 15
    %v524 = vpop.permute.xlu0 %523
    %525 = vrot.lane.b32.xlu0 %v497, 15
    %v526 = vpop.permute.xlu0 %525
    %527 = vrot.lane.b32.xlu0 %v501, 15
    %v528 = vpop.permute.xlu0 %527
    %529 = vrot.lane.b32.xlu0 %v505, 15
    %v530 = vpop.permute.xlu0 %529
    %531 = vrot.lane.b32.xlu0 %v509, 15
    %v532 = vpop.permute.xlu0 %531
    %533 = vrot.lane.b32.xlu0 %v513, 15
    %v534 = vpop.permute.xlu0 %533
    %535 = vrot.lane.b32.xlu0 %v517, 15
    %v536 = vpop.permute.xlu0 %535
    %537 = vrot.lane.b32.xlu0 %v490, 15
    %v538 = vpop.permute.xlu0 %537
    %539 = vrot.lane.b32.xlu0 %v494, 15
    %v540 = vpop.permute.xlu0 %539
    %541 = vrot.lane.b32.xlu0 %v498, 15
    %v542 = vpop.permute.xlu0 %541
    %543 = vrot.lane.b32.xlu0 %v502, 15
    %v544 = vpop.permute.xlu0 %543
    %545 = vrot.lane.b32.xlu0 %v506, 15
    %v546 = vpop.permute.xlu0 %545
    %547 = vrot.lane.b32.xlu0 %v510, 15
    %v548 = vpop.permute.xlu0 %547
    %549 = vrot.lane.b32.xlu0 %v514, 15
    %v550 = vpop.permute.xlu0 %549
    %551 = vrot.lane.b32.xlu0 %v518, 15
    %v552 = vpop.permute.xlu0 %551
    %553 = vrot.lane.b32.xlu0 %v491, 15
    %v554 = vpop.permute.xlu0 %553
    %555 = vrot.lane.b32.xlu0 %v495, 15
    %v556 = vpop.permute.xlu0 %555
    %557 = vrot.lane.b32.xlu0 %v499, 15
    %v558 = vpop.permute.xlu0 %557
    %559 = vrot.lane.b32.xlu0 %v503, 15
    %v560 = vpop.permute.xlu0 %559
    %561 = vrot.lane.b32.xlu0 %v507, 15
    %v562 = vpop.permute.xlu0 %561
    %563 = vrot.lane.b32.xlu0 %v511, 15
    %v564 = vpop.permute.xlu0 %563
    %565 = vrot.lane.b32.xlu0 %v515, 15
    %v566 = vpop.permute.xlu0 %565
    %567 = vrot.lane.b32.xlu0 %v519, 15
    %v568 = vpop.permute.xlu0 %567
    %569 = vrot.lane.b32.xlu0 %v492, 15
    %v570 = vpop.permute.xlu0 %569
    %571 = vrot.lane.b32.xlu0 %v496, 15
    %v572 = vpop.permute.xlu0 %571
    %573 = vrot.lane.b32.xlu0 %v500, 15
    %v574 = vpop.permute.xlu0 %573
    %575 = vrot.lane.b32.xlu0 %v504, 15
    %v576 = vpop.permute.xlu0 %575
    %577 = vrot.lane.b32.xlu0 %v508, 15
    %v578 = vpop.permute.xlu0 %577
    %579 = vrot.lane.b32.xlu0 %v512, 15
    %v580 = vpop.permute.xlu0 %579
    %581 = vrot.lane.b32.xlu0 %v516, 15
    %v582 = vpop.permute.xlu0 %581
    %583 = vrot.lane.b32.xlu0 %v520, 15
    %v584 = vpop.permute.xlu0 %583
    %vm585 = vcmp.lt.s32.totalorder %v153, 15
    %v586 = vsel %vm585, %v554, %v570
    %v587 = vsel %vm585, %v556, %v572
    %v588 = vsel %vm585, %v558, %v574
    %v589 = vsel %vm585, %v560, %v576
    %v590 = vsel %vm585, %v562, %v578
    %v591 = vsel %vm585, %v564, %v580
    %v592 = vsel %vm585, %v566, %v582
    %v593 = vsel %vm585, %v568, %v584
    %v594 = vsel %vm585, %v538, %v554
    %v595 = vsel %vm585, %v540, %v556
    %v596 = vsel %vm585, %v542, %v558
    %v597 = vsel %vm585, %v544, %v560
    %v598 = vsel %vm585, %v546, %v562
    %v599 = vsel %vm585, %v548, %v564
    %v600 = vsel %vm585, %v550, %v566
    %v601 = vsel %vm585, %v552, %v568
    %v602 = vsel %vm585, %v522, %v538
    %v603 = vsel %vm585, %v524, %v540
    %v604 = vsel %vm585, %v526, %v542
    %v605 = vsel %vm585, %v528, %v544
    %v606 = vsel %vm585, %v530, %v546
    %v607 = vsel %vm585, %v532, %v548
    %v608 = vsel %vm585, %v534, %v550
    %v609 = vsel %vm585, %v536, %v552
    %v610 = vsel %vm585, %v570, %v522
    %v611 = vsel %vm585, %v572, %v524
    %v612 = vsel %vm585, %v574, %v526
    %v613 = vsel %vm585, %v576, %v528
    %v614 = vsel %vm585, %v578, %v530
    %v615 = vsel %vm585, %v580, %v532
    %v616 = vsel %vm585, %v582, %v534
    %v617 = vsel %vm585, %v584, %v536
    %s618 = scalar_lea.vmem %s5, 2
    %v619 = vld [vmem:[%s618] ss:$8 sm:$0xf]
    %v621 = vlaneseq
    %v622 = vshrl.u32 %v621, 7
    %v623 = vsub.s32 0, %v622
    %v624 = vrot.slane %v619, %v623
    %v625 = vlaneseq
    %v626 = vshrl.u32 %v625, 7
    %v627 = vsub.s32 1, %v626
    %v628 = vrot.slane %v619, %v627
    %v629 = vlaneseq
    %v630 = vshrl.u32 %v629, 7
    %v631 = vsub.s32 2, %v630
    %v632 = vrot.slane %v619, %v631
    %v633 = vlaneseq
    %v634 = vshrl.u32 %v633, 7
    %v635 = vsub.s32 3, %v634
    %v636 = vrot.slane %v619, %v635
    %v641 = vmul.f32 %v610, %v624
    %v642 = vmul.f32 %v602, %v628
    %v643 = vmul.f32 %v594, %v632
    %v644 = vmul.f32 %v586, %v636
    %v645 = vmul.f32 %v611, %v624
    %v646 = vmul.f32 %v603, %v628
    %v647 = vmul.f32 %v595, %v632
    %v648 = vmul.f32 %v587, %v636
    %v649 = vmul.f32 %v612, %v624
    %v650 = vmul.f32 %v604, %v628
    %v651 = vmul.f32 %v596, %v632
    %v652 = vmul.f32 %v588, %v636
    %v653 = vmul.f32 %v613, %v624
    %v654 = vmul.f32 %v605, %v628
    %v655 = vmul.f32 %v597, %v632
    %v656 = vmul.f32 %v589, %v636
    %v657 = vmul.f32 %v614, %v624
    %v658 = vmul.f32 %v606, %v628
    %v659 = vmul.f32 %v598, %v632
    %v660 = vmul.f32 %v590, %v636
    %v661 = vmul.f32 %v615, %v624
    %v662 = vmul.f32 %v607, %v628
    %v663 = vmul.f32 %v599, %v632
    %v664 = vmul.f32 %v591, %v636
    %v665 = vmul.f32 %v616, %v624
    %v666 = vmul.f32 %v608, %v628
    %v667 = vmul.f32 %v600, %v632
    %v668 = vmul.f32 %v592, %v636
    %v669 = vmul.f32 %v617, %v624
    %v670 = vmul.f32 %v609, %v628
    %v671 = vmul.f32 %v601, %v632
    %v672 = vmul.f32 %v593, %v636
    %v673 = vpack.c.bf16 %v645, %v641
    %v674 = vpack.c.bf16 %v646, %v642
    %v675 = vpack.c.bf16 %v647, %v643
    %v676 = vpack.c.bf16 %v648, %v644
    %v677 = vpack.c.bf16 %v653, %v649
    %v678 = vpack.c.bf16 %v654, %v650
    %v679 = vpack.c.bf16 %v655, %v651
    %v680 = vpack.c.bf16 %v656, %v652
    %v681 = vpack.c.bf16 %v661, %v657
    %v682 = vpack.c.bf16 %v662, %v658
    %v683 = vpack.c.bf16 %v663, %v659
    %v684 = vpack.c.bf16 %v664, %v660
    %v685 = vpack.c.bf16 %v669, %v665
    %v686 = vpack.c.bf16 %v670, %v666
    %v687 = vpack.c.bf16 %v671, %v667
    %v688 = vpack.c.bf16 %v672, %v668
    %689 = vst [vmem:[#allocation2 + $0x100] sm:$0xff] %v673
    %690 = vst [vmem:[#allocation2 + $0x108] sm:$0xff] %v674
    %691 = vst [vmem:[#allocation2 + $0x110] sm:$0xff] %v675
    %692 = vst [vmem:[#allocation2 + $0x118] sm:$0xff] %v676
    %693 = vst [vmem:[#allocation2 + $0x120] sm:$0xff] %v677
    %694 = vst [vmem:[#allocation2 + $0x128] sm:$0xff] %v678
    %695 = vst [vmem:[#allocation2 + $0x130] sm:$0xff] %v679
    %696 = vst [vmem:[#allocation2 + $0x138] sm:$0xff] %v680
    %697 = vst [vmem:[#allocation2 + $0x140] sm:$0xff] %v681
    %698 = vst [vmem:[#allocation2 + $0x148] sm:$0xff] %v682
    %699 = vst [vmem:[#allocation2 + $0x150] sm:$0xff] %v683
    %700 = vst [vmem:[#allocation2 + $0x158] sm:$0xff] %v684
    %701 = vst [vmem:[#allocation2 + $0x160] sm:$0xff] %v685
    %702 = vst [vmem:[#allocation2 + $0x168] sm:$0xff] %v686
    %703 = vst [vmem:[#allocation2 + $0x170] sm:$0xff] %v687
    %704 = vst [vmem:[#allocation2 + $0x178] sm:$0xff] %v688
    %v705 = vld [vmem:[#allocation3] sm:$0xff]
    %v706 = vld [vmem:[#allocation3 + $0x8] sm:$0xff]
    %v707 = vld [vmem:[#allocation3 + $0x10] sm:$0xff]
    %v708 = vld [vmem:[#allocation3 + $0x18] sm:$0xff]
    %v709 = vld [vmem:[#allocation3 + $0x20] sm:$0xff]
    %v710 = vld [vmem:[#allocation3 + $0x28] sm:$0xff]
    %v711 = vld [vmem:[#allocation3 + $0x30] sm:$0xff]
    %v712 = vld [vmem:[#allocation3 + $0x38] sm:$0xff]
    %v713 = vld [vmem:[#allocation3 + $0x40] sm:$0xff]
    %v714 = vld [vmem:[#allocation3 + $0x48] sm:$0xff]
    %v715 = vld [vmem:[#allocation3 + $0x50] sm:$0xff]
    %v716 = vld [vmem:[#allocation3 + $0x58] sm:$0xff]
    %v717 = vld [vmem:[#allocation3 + $0x60] sm:$0xff]
    %v718 = vld [vmem:[#allocation3 + $0x68] sm:$0xff]
    %v719 = vld [vmem:[#allocation3 + $0x70] sm:$0xff]
    %v720 = vld [vmem:[#allocation3 + $0x78] sm:$0xff]
    %v721 = vld [vmem:[#allocation3 + $0x80] sm:$0xff]
    %v722 = vld [vmem:[#allocation3 + $0x88] sm:$0xff]
    %v723 = vld [vmem:[#allocation3 + $0x90] sm:$0xff]
    %v724 = vld [vmem:[#allocation3 + $0x98] sm:$0xff]
    %v725 = vld [vmem:[#allocation3 + $0xa0] sm:$0xff]
    %v726 = vld [vmem:[#allocation3 + $0xa8] sm:$0xff]
    %v727 = vld [vmem:[#allocation3 + $0xb0] sm:$0xff]
    %v728 = vld [vmem:[#allocation3 + $0xb8] sm:$0xff]
    %v729 = vld [vmem:[#allocation3 + $0xc0] sm:$0xff]
    %v730 = vld [vmem:[#allocation3 + $0xc8] sm:$0xff]
    %v731 = vld [vmem:[#allocation3 + $0xd0] sm:$0xff]
    %v732 = vld [vmem:[#allocation3 + $0xd8] sm:$0xff]
    %v733 = vld [vmem:[#allocation3 + $0xe0] sm:$0xff]
    %v734 = vld [vmem:[#allocation3 + $0xe8] sm:$0xff]
    %v735 = vld [vmem:[#allocation3 + $0xf0] sm:$0xff]
    %v736 = vld [vmem:[#allocation3 + $0xf8] sm:$0xff]
    %737 = vrot.lane.b32.xlu0 %v705, 1
    %v738 = vpop.permute.xlu0 %737
    %739 = vrot.lane.b32.xlu0 %v709, 1
    %v740 = vpop.permute.xlu0 %739
    %741 = vrot.lane.b32.xlu0 %v713, 1
    %v742 = vpop.permute.xlu0 %741
    %743 = vrot.lane.b32.xlu0 %v717, 1
    %v744 = vpop.permute.xlu0 %743
    %745 = vrot.lane.b32.xlu0 %v721, 1
    %v746 = vpop.permute.xlu0 %745
    %747 = vrot.lane.b32.xlu0 %v725, 1
    %v748 = vpop.permute.xlu0 %747
    %749 = vrot.lane.b32.xlu0 %v729, 1
    %v750 = vpop.permute.xlu0 %749
    %751 = vrot.lane.b32.xlu0 %v733, 1
    %v752 = vpop.permute.xlu0 %751
    %753 = vrot.lane.b32.xlu0 %v706, 1
    %v754 = vpop.permute.xlu0 %753
    %755 = vrot.lane.b32.xlu0 %v710, 1
    %v756 = vpop.permute.xlu0 %755
    %757 = vrot.lane.b32.xlu0 %v714, 1
    %v758 = vpop.permute.xlu0 %757
    %759 = vrot.lane.b32.xlu0 %v718, 1
    %v760 = vpop.permute.xlu0 %759
    %761 = vrot.lane.b32.xlu0 %v722, 1
    %v762 = vpop.permute.xlu0 %761
    %763 = vrot.lane.b32.xlu0 %v726, 1
    %v764 = vpop.permute.xlu0 %763
    %765 = vrot.lane.b32.xlu0 %v730, 1
    %v766 = vpop.permute.xlu0 %765
    %767 = vrot.lane.b32.xlu0 %v734, 1
    %v768 = vpop.permute.xlu0 %767
    %769 = vrot.lane.b32.xlu0 %v707, 1
    %v770 = vpop.permute.xlu0 %769
    %771 = vrot.lane.b32.xlu0 %v711, 1
    %v772 = vpop.permute.xlu0 %771
    %773 = vrot.lane.b32.xlu0 %v715, 1
    %v774 = vpop.permute.xlu0 %773
    %775 = vrot.lane.b32.xlu0 %v719, 1
    %v776 = vpop.permute.xlu0 %775
    %777 = vrot.lane.b32.xlu0 %v723, 1
    %v778 = vpop.permute.xlu0 %777
    %779 = vrot.lane.b32.xlu0 %v727, 1
    %v780 = vpop.permute.xlu0 %779
    %781 = vrot.lane.b32.xlu0 %v731, 1
    %v782 = vpop.permute.xlu0 %781
    %783 = vrot.lane.b32.xlu0 %v735, 1
    %v784 = vpop.permute.xlu0 %783
    %785 = vrot.lane.b32.xlu0 %v708, 1
    %v786 = vpop.permute.xlu0 %785
    %787 = vrot.lane.b32.xlu0 %v712, 1
    %v788 = vpop.permute.xlu0 %787
    %789 = vrot.lane.b32.xlu0 %v716, 1
    %v790 = vpop.permute.xlu0 %789
    %791 = vrot.lane.b32.xlu0 %v720, 1
    %v792 = vpop.permute.xlu0 %791
    %793 = vrot.lane.b32.xlu0 %v724, 1
    %v794 = vpop.permute.xlu0 %793
    %795 = vrot.lane.b32.xlu0 %v728, 1
    %v796 = vpop.permute.xlu0 %795
    %797 = vrot.lane.b32.xlu0 %v732, 1
    %v798 = vpop.permute.xlu0 %797
    %799 = vrot.lane.b32.xlu0 %v736, 1
    %v800 = vpop.permute.xlu0 %799
    %vm801 = vcmp.lt.s32.totalorder %v153, 1
    %v802 = vsel %vm801, %v770, %v786
    %v803 = vsel %vm801, %v772, %v788
    %v804 = vsel %vm801, %v774, %v790
    %v805 = vsel %vm801, %v776, %v792
    %v806 = vsel %vm801, %v778, %v794
    %v807 = vsel %vm801, %v780, %v796
    %v808 = vsel %vm801, %v782, %v798
    %v809 = vsel %vm801, %v784, %v800
    %v810 = vsel %vm801, %v754, %v770
    %v811 = vsel %vm801, %v756, %v772
    %v812 = vsel %vm801, %v758, %v774
    %v813 = vsel %vm801, %v760, %v776
    %v814 = vsel %vm801, %v762, %v778
    %v815 = vsel %vm801, %v764, %v780
    %v816 = vsel %vm801, %v766, %v782
    %v817 = vsel %vm801, %v768, %v784
    %v818 = vsel %vm801, %v738, %v754
    %v819 = vsel %vm801, %v740, %v756
    %v820 = vsel %vm801, %v742, %v758
    %v821 = vsel %vm801, %v744, %v760
    %v822 = vsel %vm801, %v746, %v762
    %v823 = vsel %vm801, %v748, %v764
    %v824 = vsel %vm801, %v750, %v766
    %v825 = vsel %vm801, %v752, %v768
    %v826 = vsel %vm801, %v786, %v738
    %v827 = vsel %vm801, %v788, %v740
    %v828 = vsel %vm801, %v790, %v742
    %v829 = vsel %vm801, %v792, %v744
    %v830 = vsel %vm801, %v794, %v746
    %v831 = vsel %vm801, %v796, %v748
    %v832 = vsel %vm801, %v798, %v750
    %v833 = vsel %vm801, %v800, %v752
    %s834 = scalar_lea.vmem %s5, 3
    %v835 = vld [vmem:[%s834] ss:$8 sm:$0xf]
    %v837 = vlaneseq
    %v838 = vshrl.u32 %v837, 7
    %v839 = vsub.s32 0, %v838
    %v840 = vrot.slane %v835, %v839
    %v841 = vlaneseq
    %v842 = vshrl.u32 %v841, 7
    %v843 = vsub.s32 1, %v842
    %v844 = vrot.slane %v835, %v843
    %v845 = vlaneseq
    %v846 = vshrl.u32 %v845, 7
    %v847 = vsub.s32 2, %v846
    %v848 = vrot.slane %v835, %v847
    %v849 = vlaneseq
    %v850 = vshrl.u32 %v849, 7
    %v851 = vsub.s32 3, %v850
    %v852 = vrot.slane %v835, %v851
    %v857 = vmul.f32 %v826, %v840
    %v858 = vmul.f32 %v818, %v844
    %v859 = vmul.f32 %v810, %v848
    %v860 = vmul.f32 %v802, %v852
    %v861 = vmul.f32 %v827, %v840
    %v862 = vmul.f32 %v819, %v844
    %v863 = vmul.f32 %v811, %v848
    %v864 = vmul.f32 %v803, %v852
    %v865 = vmul.f32 %v828, %v840
    %v866 = vmul.f32 %v820, %v844
    %v867 = vmul.f32 %v812, %v848
    %v868 = vmul.f32 %v804, %v852
    %v869 = vmul.f32 %v829, %v840
    %v870 = vmul.f32 %v821, %v844
    %v871 = vmul.f32 %v813, %v848
    %v872 = vmul.f32 %v805, %v852
    %v873 = vmul.f32 %v830, %v840
    %v874 = vmul.f32 %v822, %v844
    %v875 = vmul.f32 %v814, %v848
    %v876 = vmul.f32 %v806, %v852
    %v877 = vmul.f32 %v831, %v840
    %v878 = vmul.f32 %v823, %v844
    %v879 = vmul.f32 %v815, %v848
    %v880 = vmul.f32 %v807, %v852
    %v881 = vmul.f32 %v832, %v840
    %v882 = vmul.f32 %v824, %v844
    %v883 = vmul.f32 %v816, %v848
    %v884 = vmul.f32 %v808, %v852
    %v885 = vmul.f32 %v833, %v840
    %v886 = vmul.f32 %v825, %v844
    %v887 = vmul.f32 %v817, %v848
    %v888 = vmul.f32 %v809, %v852
    %v889 = vpack.c.bf16 %v861, %v857
    %v890 = vpack.c.bf16 %v862, %v858
    %v891 = vpack.c.bf16 %v863, %v859
    %v892 = vpack.c.bf16 %v864, %v860
    %v893 = vpack.c.bf16 %v869, %v865
    %v894 = vpack.c.bf16 %v870, %v866
    %v895 = vpack.c.bf16 %v871, %v867
    %v896 = vpack.c.bf16 %v872, %v868
    %v897 = vpack.c.bf16 %v877, %v873
    %v898 = vpack.c.bf16 %v878, %v874
    %v899 = vpack.c.bf16 %v879, %v875
    %v900 = vpack.c.bf16 %v880, %v876
    %v901 = vpack.c.bf16 %v885, %v881
    %v902 = vpack.c.bf16 %v886, %v882
    %v903 = vpack.c.bf16 %v887, %v883
    %v904 = vpack.c.bf16 %v888, %v884
    %905 = vst [vmem:[#allocation2 + $0x180] sm:$0xff] %v889
    %906 = vst [vmem:[#allocation2 + $0x188] sm:$0xff] %v890
    %907 = vst [vmem:[#allocation2 + $0x190] sm:$0xff] %v891
    %908 = vst [vmem:[#allocation2 + $0x198] sm:$0xff] %v892
    %909 = vst [vmem:[#allocation2 + $0x1a0] sm:$0xff] %v893
    %910 = vst [vmem:[#allocation2 + $0x1a8] sm:$0xff] %v894
    %911 = vst [vmem:[#allocation2 + $0x1b0] sm:$0xff] %v895
    %912 = vst [vmem:[#allocation2 + $0x1b8] sm:$0xff] %v896
    %913 = vst [vmem:[#allocation2 + $0x1c0] sm:$0xff] %v897
    %914 = vst [vmem:[#allocation2 + $0x1c8] sm:$0xff] %v898
    %915 = vst [vmem:[#allocation2 + $0x1d0] sm:$0xff] %v899
    %916 = vst [vmem:[#allocation2 + $0x1d8] sm:$0xff] %v900
    %917 = vst [vmem:[#allocation2 + $0x1e0] sm:$0xff] %v901
    %918 = vst [vmem:[#allocation2 + $0x1e8] sm:$0xff] %v902
    %919 = vst [vmem:[#allocation2 + $0x1f0] sm:$0xff] %v903
    %920 = vst [vmem:[#allocation2 + $0x1f8] sm:$0xff] %v904
    %v921 = vld [vmem:[#allocation3] sm:$0xff]
    %v922 = vld [vmem:[#allocation3 + $0x8] sm:$0xff]
    %v923 = vld [vmem:[#allocation3 + $0x10] sm:$0xff]
    %v924 = vld [vmem:[#allocation3 + $0x18] sm:$0xff]
    %v925 = vld [vmem:[#allocation3 + $0x20] sm:$0xff]
    %v926 = vld [vmem:[#allocation3 + $0x28] sm:$0xff]
    %v927 = vld [vmem:[#allocation3 + $0x30] sm:$0xff]
    %v928 = vld [vmem:[#allocation3 + $0x38] sm:$0xff]
    %v929 = vld [vmem:[#allocation3 + $0x40] sm:$0xff]
    %v930 = vld [vmem:[#allocation3 + $0x48] sm:$0xff]
    %v931 = vld [vmem:[#allocation3 + $0x50] sm:$0xff]
    %v932 = vld [vmem:[#allocation3 + $0x58] sm:$0xff]
    %v933 = vld [vmem:[#allocation3 + $0x60] sm:$0xff]
    %v934 = vld [vmem:[#allocation3 + $0x68] sm:$0xff]
    %v935 = vld [vmem:[#allocation3 + $0x70] sm:$0xff]
    %v936 = vld [vmem:[#allocation3 + $0x78] sm:$0xff]
    %v937 = vld [vmem:[#allocation3 + $0x80] sm:$0xff]
    %v938 = vld [vmem:[#allocation3 + $0x88] sm:$0xff]
    %v939 = vld [vmem:[#allocation3 + $0x90] sm:$0xff]
    %v940 = vld [vmem:[#allocation3 + $0x98] sm:$0xff]
    %v941 = vld [vmem:[#allocation3 + $0xa0] sm:$0xff]
    %v942 = vld [vmem:[#allocation3 + $0xa8] sm:$0xff]
    %v943 = vld [vmem:[#allocation3 + $0xb0] sm:$0xff]
    %v944 = vld [vmem:[#allocation3 + $0xb8] sm:$0xff]
    %v945 = vld [vmem:[#allocation3 + $0xc0] sm:$0xff]
    %v946 = vld [vmem:[#allocation3 + $0xc8] sm:$0xff]
    %v947 = vld [vmem:[#allocation3 + $0xd0] sm:$0xff]
    %v948 = vld [vmem:[#allocation3 + $0xd8] sm:$0xff]
    %v949 = vld [vmem:[#allocation3 + $0xe0] sm:$0xff]
    %v950 = vld [vmem:[#allocation3 + $0xe8] sm:$0xff]
    %v951 = vld [vmem:[#allocation3 + $0xf0] sm:$0xff]
    %v952 = vld [vmem:[#allocation3 + $0xf8] sm:$0xff]
    %v953 = vpack.c.bf16 %v925, %v921
    %v954 = vpack.c.bf16 %v926, %v922
    %v955 = vpack.c.bf16 %v927, %v923
    %v956 = vpack.c.bf16 %v928, %v924
    %v957 = vpack.c.bf16 %v933, %v929
    %v958 = vpack.c.bf16 %v934, %v930
    %v959 = vpack.c.bf16 %v935, %v931
    %v960 = vpack.c.bf16 %v936, %v932
    %v961 = vpack.c.bf16 %v941, %v937
    %v962 = vpack.c.bf16 %v942, %v938
    %v963 = vpack.c.bf16 %v943, %v939
    %v964 = vpack.c.bf16 %v944, %v940
    %v965 = vpack.c.bf16 %v949, %v945
    %v966 = vpack.c.bf16 %v950, %v946
    %v967 = vpack.c.bf16 %v951, %v947
    %v968 = vpack.c.bf16 %v952, %v948
    %969 = vst [vmem:[#allocation2 + $0x200] sm:$0xff] %v953
    %970 = vst [vmem:[#allocation2 + $0x208] sm:$0xff] %v954
    %971 = vst [vmem:[#allocation2 + $0x210] sm:$0xff] %v955
    %972 = vst [vmem:[#allocation2 + $0x218] sm:$0xff] %v956
    %973 = vst [vmem:[#allocation2 + $0x220] sm:$0xff] %v957
    %974 = vst [vmem:[#allocation2 + $0x228] sm:$0xff] %v958
    %975 = vst [vmem:[#allocation2 + $0x230] sm:$0xff] %v959
    %976 = vst [vmem:[#allocation2 + $0x238] sm:$0xff] %v960
    %977 = vst [vmem:[#allocation2 + $0x240] sm:$0xff] %v961
    %978 = vst [vmem:[#allocation2 + $0x248] sm:$0xff] %v962
    %979 = vst [vmem:[#allocation2 + $0x250] sm:$0xff] %v963
    %980 = vst [vmem:[#allocation2 + $0x258] sm:$0xff] %v964
    %981 = vst [vmem:[#allocation2 + $0x260] sm:$0xff] %v965
    %982 = vst [vmem:[#allocation2 + $0x268] sm:$0xff] %v966
    %983 = vst [vmem:[#allocation2 + $0x270] sm:$0xff] %v967
    %984 = vst [vmem:[#allocation2 + $0x278] sm:$0xff] %v968
    %v985 = vld [vmem:[#allocation3] sm:$0xff]
    %v986 = vld [vmem:[#allocation3 + $0x8] sm:$0xff]
    %v987 = vld [vmem:[#allocation3 + $0x10] sm:$0xff]
    %v988 = vld [vmem:[#allocation3 + $0x18] sm:$0xff]
    %v989 = vld [vmem:[#allocation3 + $0x20] sm:$0xff]
    %v990 = vld [vmem:[#allocation3 + $0x28] sm:$0xff]
    %v991 = vld [vmem:[#allocation3 + $0x30] sm:$0xff]
    %v992 = vld [vmem:[#allocation3 + $0x38] sm:$0xff]
    %v993 = vld [vmem:[#allocation3 + $0x40] sm:$0xff]
    %v994 = vld [vmem:[#allocation3 + $0x48] sm:$0xff]
    %v995 = vld [vmem:[#allocation3 + $0x50] sm:$0xff]
    %v996 = vld [vmem:[#allocation3 + $0x58] sm:$0xff]
    %v997 = vld [vmem:[#allocation3 + $0x60] sm:$0xff]
    %v998 = vld [vmem:[#allocation3 + $0x68] sm:$0xff]
    %v999 = vld [vmem:[#allocation3 + $0x70] sm:$0xff]
    %v1000 = vld [vmem:[#allocation3 + $0x78] sm:$0xff]
    %v1001 = vld [vmem:[#allocation3 + $0x80] sm:$0xff]
    %v1002 = vld [vmem:[#allocation3 + $0x88] sm:$0xff]
    %v1003 = vld [vmem:[#allocation3 + $0x90] sm:$0xff]
    %v1004 = vld [vmem:[#allocation3 + $0x98] sm:$0xff]
    %v1005 = vld [vmem:[#allocation3 + $0xa0] sm:$0xff]
    %v1006 = vld [vmem:[#allocation3 + $0xa8] sm:$0xff]
    %v1007 = vld [vmem:[#allocation3 + $0xb0] sm:$0xff]
    %v1008 = vld [vmem:[#allocation3 + $0xb8] sm:$0xff]
    %v1009 = vld [vmem:[#allocation3 + $0xc0] sm:$0xff]
    %v1010 = vld [vmem:[#allocation3 + $0xc8] sm:$0xff]
    %v1011 = vld [vmem:[#allocation3 + $0xd0] sm:$0xff]
    %v1012 = vld [vmem:[#allocation3 + $0xd8] sm:$0xff]
    %v1013 = vld [vmem:[#allocation3 + $0xe0] sm:$0xff]
    %v1014 = vld [vmem:[#allocation3 + $0xe8] sm:$0xff]
    %v1015 = vld [vmem:[#allocation3 + $0xf0] sm:$0xff]
    %v1016 = vld [vmem:[#allocation3 + $0xf8] sm:$0xff]
    %1017 = vrot.lane.b32.xlu0 %v985, 127
    %v1018 = vpop.permute.xlu0 %1017
    %1019 = vrot.lane.b32.xlu0 %v989, 127
    %v1020 = vpop.permute.xlu0 %1019
    %1021 = vrot.lane.b32.xlu0 %v993, 127
    %v1022 = vpop.permute.xlu0 %1021
    %1023 = vrot.lane.b32.xlu0 %v997, 127
    %v1024 = vpop.permute.xlu0 %1023
    %1025 = vrot.lane.b32.xlu0 %v1001, 127
    %v1026 = vpop.permute.xlu0 %1025
    %1027 = vrot.lane.b32.xlu0 %v1005, 127
    %v1028 = vpop.permute.xlu0 %1027
    %1029 = vrot.lane.b32.xlu0 %v1009, 127
    %v1030 = vpop.permute.xlu0 %1029
    %1031 = vrot.lane.b32.xlu0 %v1013, 127
    %v1032 = vpop.permute.xlu0 %1031
    %1033 = vrot.lane.b32.xlu0 %v986, 127
    %v1034 = vpop.permute.xlu0 %1033
    %1035 = vrot.lane.b32.xlu0 %v990, 127
    %v1036 = vpop.permute.xlu0 %1035
    %1037 = vrot.lane.b32.xlu0 %v994, 127
    %v1038 = vpop.permute.xlu0 %1037
    %1039 = vrot.lane.b32.xlu0 %v998, 127
    %v1040 = vpop.permute.xlu0 %1039
    %1041 = vrot.lane.b32.xlu0 %v1002, 127
    %v1042 = vpop.permute.xlu0 %1041
    %1043 = vrot.lane.b32.xlu0 %v1006, 127
    %v1044 = vpop.permute.xlu0 %1043
    %1045 = vrot.lane.b32.xlu0 %v1010, 127
    %v1046 = vpop.permute.xlu0 %1045
    %1047 = vrot.lane.b32.xlu0 %v1014, 127
    %v1048 = vpop.permute.xlu0 %1047
    %1049 = vrot.lane.b32.xlu0 %v987, 127
    %v1050 = vpop.permute.xlu0 %1049
    %1051 = vrot.lane.b32.xlu0 %v991, 127
    %v1052 = vpop.permute.xlu0 %1051
    %1053 = vrot.lane.b32.xlu0 %v995, 127
    %v1054 = vpop.permute.xlu0 %1053
    %1055 = vrot.lane.b32.xlu0 %v999, 127
    %v1056 = vpop.permute.xlu0 %1055
    %1057 = vrot.lane.b32.xlu0 %v1003, 127
    %v1058 = vpop.permute.xlu0 %1057
    %1059 = vrot.lane.b32.xlu0 %v1007, 127
    %v1060 = vpop.permute.xlu0 %1059
    %1061 = vrot.lane.b32.xlu0 %v1011, 127
    %v1062 = vpop.permute.xlu0 %1061
    %1063 = vrot.lane.b32.xlu0 %v1015, 127
    %v1064 = vpop.permute.xlu0 %1063
    %1065 = vrot.lane.b32.xlu0 %v988, 127
    %v1066 = vpop.permute.xlu0 %1065
    %1067 = vrot.lane.b32.xlu0 %v992, 127
    %v1068 = vpop.permute.xlu0 %1067
    %1069 = vrot.lane.b32.xlu0 %v996, 127
    %v1070 = vpop.permute.xlu0 %1069
    %1071 = vrot.lane.b32.xlu0 %v1000, 127
    %v1072 = vpop.permute.xlu0 %1071
    %1073 = vrot.lane.b32.xlu0 %v1004, 127
    %v1074 = vpop.permute.xlu0 %1073
    %1075 = vrot.lane.b32.xlu0 %v1008, 127
    %v1076 = vpop.permute.xlu0 %1075
    %1077 = vrot.lane.b32.xlu0 %v1012, 127
    %v1078 = vpop.permute.xlu0 %1077
    %1079 = vrot.lane.b32.xlu0 %v1016, 127
    %v1080 = vpop.permute.xlu0 %1079
    %vm1081 = vcmp.lt.s32.totalorder %v153, 127
    %v1082 = vsel %vm1081, %v1050, %v1066
    %v1083 = vsel %vm1081, %v1052, %v1068
    %v1084 = vsel %vm1081, %v1054, %v1070
    %v1085 = vsel %vm1081, %v1056, %v1072
    %v1086 = vsel %vm1081, %v1058, %v1074
    %v1087 = vsel %vm1081, %v1060, %v1076
    %v1088 = vsel %vm1081, %v1062, %v1078
    %v1089 = vsel %vm1081, %v1064, %v1080
    %v1090 = vsel %vm1081, %v1034, %v1050
    %v1091 = vsel %vm1081, %v1036, %v1052
    %v1092 = vsel %vm1081, %v1038, %v1054
    %v1093 = vsel %vm1081, %v1040, %v1056
    %v1094 = vsel %vm1081, %v1042, %v1058
    %v1095 = vsel %vm1081, %v1044, %v1060
    %v1096 = vsel %vm1081, %v1046, %v1062
    %v1097 = vsel %vm1081, %v1048, %v1064
    %v1098 = vsel %vm1081, %v1018, %v1034
    %v1099 = vsel %vm1081, %v1020, %v1036
    %v1100 = vsel %vm1081, %v1022, %v1038
    %v1101 = vsel %vm1081, %v1024, %v1040
    %v1102 = vsel %vm1081, %v1026, %v1042
    %v1103 = vsel %vm1081, %v1028, %v1044
    %v1104 = vsel %vm1081, %v1030, %v1046
    %v1105 = vsel %vm1081, %v1032, %v1048
    %v1106 = vsel %vm1081, %v1066, %v1018
    %v1107 = vsel %vm1081, %v1068, %v1020
    %v1108 = vsel %vm1081, %v1070, %v1022
    %v1109 = vsel %vm1081, %v1072, %v1024
    %v1110 = vsel %vm1081, %v1074, %v1026
    %v1111 = vsel %vm1081, %v1076, %v1028
    %v1112 = vsel %vm1081, %v1078, %v1030
    %v1113 = vsel %vm1081, %v1080, %v1032
    %s1114 = scalar_lea.vmem %s5, 5
    %v1115 = vld [vmem:[%s1114] ss:$8 sm:$0xf]
    %v1117 = vlaneseq
    %v1118 = vshrl.u32 %v1117, 7
    %v1119 = vsub.s32 0, %v1118
    %v1120 = vrot.slane %v1115, %v1119
    %v1121 = vlaneseq
    %v1122 = vshrl.u32 %v1121, 7
    %v1123 = vsub.s32 1, %v1122
    %v1124 = vrot.slane %v1115, %v1123
    %v1125 = vlaneseq
    %v1126 = vshrl.u32 %v1125, 7
    %v1127 = vsub.s32 2, %v1126
    %v1128 = vrot.slane %v1115, %v1127
    %v1129 = vlaneseq
    %v1130 = vshrl.u32 %v1129, 7
    %v1131 = vsub.s32 3, %v1130
    %v1132 = vrot.slane %v1115, %v1131
    %v1137 = vmul.f32 %v1098, %v1120
    %v1138 = vmul.f32 %v1090, %v1124
    %v1139 = vmul.f32 %v1082, %v1128
    %v1140 = vmul.f32 %v1106, %v1132
    %v1141 = vmul.f32 %v1099, %v1120
    %v1142 = vmul.f32 %v1091, %v1124
    %v1143 = vmul.f32 %v1083, %v1128
    %v1144 = vmul.f32 %v1107, %v1132
    %v1145 = vmul.f32 %v1100, %v1120
    %v1146 = vmul.f32 %v1092, %v1124
    %v1147 = vmul.f32 %v1084, %v1128
    %v1148 = vmul.f32 %v1108, %v1132
    %v1149 = vmul.f32 %v1101, %v1120
    %v1150 = vmul.f32 %v1093, %v1124
    %v1151 = vmul.f32 %v1085, %v1128
    %v1152 = vmul.f32 %v1109, %v1132
    %v1153 = vmul.f32 %v1102, %v1120
    %v1154 = vmul.f32 %v1094, %v1124
    %v1155 = vmul.f32 %v1086, %v1128
    %v1156 = vmul.f32 %v1110, %v1132
    %v1157 = vmul.f32 %v1103, %v1120
    %v1158 = vmul.f32 %v1095, %v1124
    %v1159 = vmul.f32 %v1087, %v1128
    %v1160 = vmul.f32 %v1111, %v1132
    %v1161 = vmul.f32 %v1104, %v1120
    %v1162 = vmul.f32 %v1096, %v1124
    %v1163 = vmul.f32 %v1088, %v1128
    %v1164 = vmul.f32 %v1112, %v1132
    %v1165 = vmul.f32 %v1105, %v1120
    %v1166 = vmul.f32 %v1097, %v1124
    %v1167 = vmul.f32 %v1089, %v1128
    %v1168 = vmul.f32 %v1113, %v1132
    %v1169 = vpack.c.bf16 %v1141, %v1137
    %v1170 = vpack.c.bf16 %v1142, %v1138
    %v1171 = vpack.c.bf16 %v1143, %v1139
    %v1172 = vpack.c.bf16 %v1144, %v1140
    %v1173 = vpack.c.bf16 %v1149, %v1145
    %v1174 = vpack.c.bf16 %v1150, %v1146
    %v1175 = vpack.c.bf16 %v1151, %v1147
    %v1176 = vpack.c.bf16 %v1152, %v1148
    %v1177 = vpack.c.bf16 %v1157, %v1153
    %v1178 = vpack.c.bf16 %v1158, %v1154
    %v1179 = vpack.c.bf16 %v1159, %v1155
    %v1180 = vpack.c.bf16 %v1160, %v1156
    %v1181 = vpack.c.bf16 %v1165, %v1161
    %v1182 = vpack.c.bf16 %v1166, %v1162
    %v1183 = vpack.c.bf16 %v1167, %v1163
    %v1184 = vpack.c.bf16 %v1168, %v1164
    %1185 = vst [vmem:[#allocation2 + $0x280] sm:$0xff] %v1169
    %1186 = vst [vmem:[#allocation2 + $0x288] sm:$0xff] %v1170
    %1187 = vst [vmem:[#allocation2 + $0x290] sm:$0xff] %v1171
    %1188 = vst [vmem:[#allocation2 + $0x298] sm:$0xff] %v1172
    %1189 = vst [vmem:[#allocation2 + $0x2a0] sm:$0xff] %v1173
    %1190 = vst [vmem:[#allocation2 + $0x2a8] sm:$0xff] %v1174
    %1191 = vst [vmem:[#allocation2 + $0x2b0] sm:$0xff] %v1175
    %1192 = vst [vmem:[#allocation2 + $0x2b8] sm:$0xff] %v1176
    %1193 = vst [vmem:[#allocation2 + $0x2c0] sm:$0xff] %v1177
    %1194 = vst [vmem:[#allocation2 + $0x2c8] sm:$0xff] %v1178
    %1195 = vst [vmem:[#allocation2 + $0x2d0] sm:$0xff] %v1179
    %1196 = vst [vmem:[#allocation2 + $0x2d8] sm:$0xff] %v1180
    %1197 = vst [vmem:[#allocation2 + $0x2e0] sm:$0xff] %v1181
    %1198 = vst [vmem:[#allocation2 + $0x2e8] sm:$0xff] %v1182
    %1199 = vst [vmem:[#allocation2 + $0x2f0] sm:$0xff] %v1183
    %1200 = vst [vmem:[#allocation2 + $0x2f8] sm:$0xff] %v1184
    %v1201 = vld [vmem:[#allocation3] sm:$0xff]
    %v1202 = vld [vmem:[#allocation3 + $0x8] sm:$0xff]
    %v1203 = vld [vmem:[#allocation3 + $0x10] sm:$0xff]
    %v1204 = vld [vmem:[#allocation3 + $0x18] sm:$0xff]
    %v1205 = vld [vmem:[#allocation3 + $0x20] sm:$0xff]
    %v1206 = vld [vmem:[#allocation3 + $0x28] sm:$0xff]
    %v1207 = vld [vmem:[#allocation3 + $0x30] sm:$0xff]
    %v1208 = vld [vmem:[#allocation3 + $0x38] sm:$0xff]
    %v1209 = vld [vmem:[#allocation3 + $0x40] sm:$0xff]
    %v1210 = vld [vmem:[#allocation3 + $0x48] sm:$0xff]
    %v1211 = vld [vmem:[#allocation3 + $0x50] sm:$0xff]
    %v1212 = vld [vmem:[#allocation3 + $0x58] sm:$0xff]
    %v1213 = vld [vmem:[#allocation3 + $0x60] sm:$0xff]
    %v1214 = vld [vmem:[#allocation3 + $0x68] sm:$0xff]
    %v1215 = vld [vmem:[#allocation3 + $0x70] sm:$0xff]
    %v1216 = vld [vmem:[#allocation3 + $0x78] sm:$0xff]
    %v1217 = vld [vmem:[#allocation3 + $0x80] sm:$0xff]
    %v1218 = vld [vmem:[#allocation3 + $0x88] sm:$0xff]
    %v1219 = vld [vmem:[#allocation3 + $0x90] sm:$0xff]
    %v1220 = vld [vmem:[#allocation3 + $0x98] sm:$0xff]
    %v1221 = vld [vmem:[#allocation3 + $0xa0] sm:$0xff]
    %v1222 = vld [vmem:[#allocation3 + $0xa8] sm:$0xff]
    %v1223 = vld [vmem:[#allocation3 + $0xb0] sm:$0xff]
    %v1224 = vld [vmem:[#allocation3 + $0xb8] sm:$0xff]
    %v1225 = vld [vmem:[#allocation3 + $0xc0] sm:$0xff]
    %v1226 = vld [vmem:[#allocation3 + $0xc8] sm:$0xff]
    %v1227 = vld [vmem:[#allocation3 + $0xd0] sm:$0xff]
    %v1228 = vld [vmem:[#allocation3 + $0xd8] sm:$0xff]
    %v1229 = vld [vmem:[#allocation3 + $0xe0] sm:$0xff]
    %v1230 = vld [vmem:[#allocation3 + $0xe8] sm:$0xff]
    %v1231 = vld [vmem:[#allocation3 + $0xf0] sm:$0xff]
    %v1232 = vld [vmem:[#allocation3 + $0xf8] sm:$0xff]
    %1233 = vrot.lane.b32.xlu0 %v1201, 113
    %v1234 = vpop.permute.xlu0 %1233
    %1235 = vrot.lane.b32.xlu0 %v1205, 113
    %v1236 = vpop.permute.xlu0 %1235
    %1237 = vrot.lane.b32.xlu0 %v1209, 113
    %v1238 = vpop.permute.xlu0 %1237
    %1239 = vrot.lane.b32.xlu0 %v1213, 113
    %v1240 = vpop.permute.xlu0 %1239
    %1241 = vrot.lane.b32.xlu0 %v1217, 113
    %v1242 = vpop.permute.xlu0 %1241
    %1243 = vrot.lane.b32.xlu0 %v1221, 113
    %v1244 = vpop.permute.xlu0 %1243
    %1245 = vrot.lane.b32.xlu0 %v1225, 113
    %v1246 = vpop.permute.xlu0 %1245
    %1247 = vrot.lane.b32.xlu0 %v1229, 113
    %v1248 = vpop.permute.xlu0 %1247
    %1249 = vrot.lane.b32.xlu0 %v1202, 113
    %v1250 = vpop.permute.xlu0 %1249
    %1251 = vrot.lane.b32.xlu0 %v1206, 113
    %v1252 = vpop.permute.xlu0 %1251
    %1253 = vrot.lane.b32.xlu0 %v1210, 113
    %v1254 = vpop.permute.xlu0 %1253
    %1255 = vrot.lane.b32.xlu0 %v1214, 113
    %v1256 = vpop.permute.xlu0 %1255
    %1257 = vrot.lane.b32.xlu0 %v1218, 113
    %v1258 = vpop.permute.xlu0 %1257
    %1259 = vrot.lane.b32.xlu0 %v1222, 113
    %v1260 = vpop.permute.xlu0 %1259
    %1261 = vrot.lane.b32.xlu0 %v1226, 113
    %v1262 = vpop.permute.xlu0 %1261
    %1263 = vrot.lane.b32.xlu0 %v1230, 113
    %v1264 = vpop.permute.xlu0 %1263
    %1265 = vrot.lane.b32.xlu0 %v1203, 113
    %v1266 = vpop.permute.xlu0 %1265
    %1267 = vrot.lane.b32.xlu0 %v1207, 113
    %v1268 = vpop.permute.xlu0 %1267
    %1269 = vrot.lane.b32.xlu0 %v1211, 113
    %v1270 = vpop.permute.xlu0 %1269
    %1271 = vrot.lane.b32.xlu0 %v1215, 113
    %v1272 = vpop.permute.xlu0 %1271
    %1273 = vrot.lane.b32.xlu0 %v1219, 113
    %v1274 = vpop.permute.xlu0 %1273
    %1275 = vrot.lane.b32.xlu0 %v1223, 113
    %v1276 = vpop.permute.xlu0 %1275
    %1277 = vrot.lane.b32.xlu0 %v1227, 113
    %v1278 = vpop.permute.xlu0 %1277
    %1279 = vrot.lane.b32.xlu0 %v1231, 113
    %v1280 = vpop.permute.xlu0 %1279
    %1281 = vrot.lane.b32.xlu0 %v1204, 113
    %v1282 = vpop.permute.xlu0 %1281
    %1283 = vrot.lane.b32.xlu0 %v1208, 113
    %v1284 = vpop.permute.xlu0 %1283
    %1285 = vrot.lane.b32.xlu0 %v1212, 113
    %v1286 = vpop.permute.xlu0 %1285
    %1287 = vrot.lane.b32.xlu0 %v1216, 113
    %v1288 = vpop.permute.xlu0 %1287
    %1289 = vrot.lane.b32.xlu0 %v1220, 113
    %v1290 = vpop.permute.xlu0 %1289
    %1291 = vrot.lane.b32.xlu0 %v1224, 113
    %v1292 = vpop.permute.xlu0 %1291
    %1293 = vrot.lane.b32.xlu0 %v1228, 113
    %v1294 = vpop.permute.xlu0 %1293
    %1295 = vrot.lane.b32.xlu0 %v1232, 113
    %v1296 = vpop.permute.xlu0 %1295
    %vm1297 = vcmp.lt.s32.totalorder %v153, 113
    %v1298 = vsel %vm1297, %v1266, %v1282
    %v1299 = vsel %vm1297, %v1268, %v1284
    %v1300 = vsel %vm1297, %v1270, %v1286
    %v1301 = vsel %vm1297, %v1272, %v1288
    %v1302 = vsel %vm1297, %v1274, %v1290
    %v1303 = vsel %vm1297, %v1276, %v1292
    %v1304 = vsel %vm1297, %v1278, %v1294
    %v1305 = vsel %vm1297, %v1280, %v1296
    %v1306 = vsel %vm1297, %v1250, %v1266
    %v1307 = vsel %vm1297, %v1252, %v1268
    %v1308 = vsel %vm1297, %v1254, %v1270
    %v1309 = vsel %vm1297, %v1256, %v1272
    %v1310 = vsel %vm1297, %v1258, %v1274
    %v1311 = vsel %vm1297, %v1260, %v1276
    %v1312 = vsel %vm1297, %v1262, %v1278
    %v1313 = vsel %vm1297, %v1264, %v1280
    %v1314 = vsel %vm1297, %v1234, %v1250
    %v1315 = vsel %vm1297, %v1236, %v1252
    %v1316 = vsel %vm1297, %v1238, %v1254
    %v1317 = vsel %vm1297, %v1240, %v1256
    %v1318 = vsel %vm1297, %v1242, %v1258
    %v1319 = vsel %vm1297, %v1244, %v1260
    %v1320 = vsel %vm1297, %v1246, %v1262
    %v1321 = vsel %vm1297, %v1248, %v1264
    %v1322 = vsel %vm1297, %v1282, %v1234
    %v1323 = vsel %vm1297, %v1284, %v1236
    %v1324 = vsel %vm1297, %v1286, %v1238
    %v1325 = vsel %vm1297, %v1288, %v1240
    %v1326 = vsel %vm1297, %v1290, %v1242
    %v1327 = vsel %vm1297, %v1292, %v1244
    %v1328 = vsel %vm1297, %v1294, %v1246
    %v1329 = vsel %vm1297, %v1296, %v1248
    %s1330 = scalar_lea.vmem %s5, 6
    %v1331 = vld [vmem:[%s1330] ss:$8 sm:$0xf]
    %v1333 = vlaneseq
    %v1334 = vshrl.u32 %v1333, 7
    %v1335 = vsub.s32 0, %v1334
    %v1336 = vrot.slane %v1331, %v1335
    %v1337 = vlaneseq
    %v1338 = vshrl.u32 %v1337, 7
    %v1339 = vsub.s32 1, %v1338
    %v1340 = vrot.slane %v1331, %v1339
    %v1341 = vlaneseq
    %v1342 = vshrl.u32 %v1341, 7
    %v1343 = vsub.s32 2, %v1342
    %v1344 = vrot.slane %v1331, %v1343
    %v1345 = vlaneseq
    %v1346 = vshrl.u32 %v1345, 7
    %v1347 = vsub.s32 3, %v1346
    %v1348 = vrot.slane %v1331, %v1347
    %v1353 = vmul.f32 %v1314, %v1336
    %v1354 = vmul.f32 %v1306, %v1340
    %v1355 = vmul.f32 %v1298, %v1344
    %v1356 = vmul.f32 %v1322, %v1348
    %v1357 = vmul.f32 %v1315, %v1336
    %v1358 = vmul.f32 %v1307, %v1340
    %v1359 = vmul.f32 %v1299, %v1344
    %v1360 = vmul.f32 %v1323, %v1348
    %v1361 = vmul.f32 %v1316, %v1336
    %v1362 = vmul.f32 %v1308, %v1340
    %v1363 = vmul.f32 %v1300, %v1344
    %v1364 = vmul.f32 %v1324, %v1348
    %v1365 = vmul.f32 %v1317, %v1336
    %v1366 = vmul.f32 %v1309, %v1340
    %v1367 = vmul.f32 %v1301, %v1344
    %v1368 = vmul.f32 %v1325, %v1348
    %v1369 = vmul.f32 %v1318, %v1336
    %v1370 = vmul.f32 %v1310, %v1340
    %v1371 = vmul.f32 %v1302, %v1344
    %v1372 = vmul.f32 %v1326, %v1348
    %v1373 = vmul.f32 %v1319, %v1336
    %v1374 = vmul.f32 %v1311, %v1340
    %v1375 = vmul.f32 %v1303, %v1344
    %v1376 = vmul.f32 %v1327, %v1348
    %v1377 = vmul.f32 %v1320, %v1336
    %v1378 = vmul.f32 %v1312, %v1340
    %v1379 = vmul.f32 %v1304, %v1344
    %v1380 = vmul.f32 %v1328, %v1348
    %v1381 = vmul.f32 %v1321, %v1336
    %v1382 = vmul.f32 %v1313, %v1340
    %v1383 = vmul.f32 %v1305, %v1344
    %v1384 = vmul.f32 %v1329, %v1348
    %v1385 = vpack.c.bf16 %v1357, %v1353
    %v1386 = vpack.c.bf16 %v1358, %v1354
    %v1387 = vpack.c.bf16 %v1359, %v1355
    %v1388 = vpack.c.bf16 %v1360, %v1356
    %v1389 = vpack.c.bf16 %v1365, %v1361
    %v1390 = vpack.c.bf16 %v1366, %v1362
    %v1391 = vpack.c.bf16 %v1367, %v1363
    %v1392 = vpack.c.bf16 %v1368, %v1364
    %v1393 = vpack.c.bf16 %v1373, %v1369
    %v1394 = vpack.c.bf16 %v1374, %v1370
    %v1395 = vpack.c.bf16 %v1375, %v1371
    %v1396 = vpack.c.bf16 %v1376, %v1372
    %v1397 = vpack.c.bf16 %v1381, %v1377
    %v1398 = vpack.c.bf16 %v1382, %v1378
    %v1399 = vpack.c.bf16 %v1383, %v1379
    %v1400 = vpack.c.bf16 %v1384, %v1380
    %1401 = vst [vmem:[#allocation2 + $0x300] sm:$0xff] %v1385
    %1402 = vst [vmem:[#allocation2 + $0x308] sm:$0xff] %v1386
    %1403 = vst [vmem:[#allocation2 + $0x310] sm:$0xff] %v1387
    %1404 = vst [vmem:[#allocation2 + $0x318] sm:$0xff] %v1388
    %1405 = vst [vmem:[#allocation2 + $0x320] sm:$0xff] %v1389
    %1406 = vst [vmem:[#allocation2 + $0x328] sm:$0xff] %v1390
    %1407 = vst [vmem:[#allocation2 + $0x330] sm:$0xff] %v1391
    %1408 = vst [vmem:[#allocation2 + $0x338] sm:$0xff] %v1392
    %1409 = vst [vmem:[#allocation2 + $0x340] sm:$0xff] %v1393
    %1410 = vst [vmem:[#allocation2 + $0x348] sm:$0xff] %v1394
    %1411 = vst [vmem:[#allocation2 + $0x350] sm:$0xff] %v1395
    %1412 = vst [vmem:[#allocation2 + $0x358] sm:$0xff] %v1396
    %1413 = vst [vmem:[#allocation2 + $0x360] sm:$0xff] %v1397
    %1414 = vst [vmem:[#allocation2 + $0x368] sm:$0xff] %v1398
    %1415 = vst [vmem:[#allocation2 + $0x370] sm:$0xff] %v1399
    %1416 = vst [vmem:[#allocation2 + $0x378] sm:$0xff] %v1400
    %v1417 = vld [vmem:[#allocation3] sm:$0xff]
    %v1418 = vld [vmem:[#allocation3 + $0x8] sm:$0xff]
    %v1419 = vld [vmem:[#allocation3 + $0x10] sm:$0xff]
    %v1420 = vld [vmem:[#allocation3 + $0x18] sm:$0xff]
    %v1421 = vld [vmem:[#allocation3 + $0x20] sm:$0xff]
    %v1422 = vld [vmem:[#allocation3 + $0x28] sm:$0xff]
    %v1423 = vld [vmem:[#allocation3 + $0x30] sm:$0xff]
    %v1424 = vld [vmem:[#allocation3 + $0x38] sm:$0xff]
    %v1425 = vld [vmem:[#allocation3 + $0x40] sm:$0xff]
    %v1426 = vld [vmem:[#allocation3 + $0x48] sm:$0xff]
    %v1427 = vld [vmem:[#allocation3 + $0x50] sm:$0xff]
    %v1428 = vld [vmem:[#allocation3 + $0x58] sm:$0xff]
    %v1429 = vld [vmem:[#allocation3 + $0x60] sm:$0xff]
    %v1430 = vld [vmem:[#allocation3 + $0x68] sm:$0xff]
    %v1431 = vld [vmem:[#allocation3 + $0x70] sm:$0xff]
    %v1432 = vld [vmem:[#allocation3 + $0x78] sm:$0xff]
    %v1433 = vld [vmem:[#allocation3 + $0x80] sm:$0xff]
    %v1434 = vld [vmem:[#allocation3 + $0x88] sm:$0xff]
    %v1435 = vld [vmem:[#allocation3 + $0x90] sm:$0xff]
    %v1436 = vld [vmem:[#allocation3 + $0x98] sm:$0xff]
    %v1437 = vld [vmem:[#allocation3 + $0xa0] sm:$0xff]
    %v1438 = vld [vmem:[#allocation3 + $0xa8] sm:$0xff]
    %v1439 = vld [vmem:[#allocation3 + $0xb0] sm:$0xff]
    %v1440 = vld [vmem:[#allocation3 + $0xb8] sm:$0xff]
    %v1441 = vld [vmem:[#allocation3 + $0xc0] sm:$0xff]
    %v1442 = vld [vmem:[#allocation3 + $0xc8] sm:$0xff]
    %v1443 = vld [vmem:[#allocation3 + $0xd0] sm:$0xff]
    %v1444 = vld [vmem:[#allocation3 + $0xd8] sm:$0xff]
    %v1445 = vld [vmem:[#allocation3 + $0xe0] sm:$0xff]
    %v1446 = vld [vmem:[#allocation3 + $0xe8] sm:$0xff]
    %v1447 = vld [vmem:[#allocation3 + $0xf0] sm:$0xff]
    %v1448 = vld [vmem:[#allocation3 + $0xf8] sm:$0xff]
    %1449 = vrot.lane.b32.xlu0 %v1417, 112
    %v1450 = vpop.permute.xlu0 %1449
    %1451 = vrot.lane.b32.xlu0 %v1421, 112
    %v1452 = vpop.permute.xlu0 %1451
    %1453 = vrot.lane.b32.xlu0 %v1425, 112
    %v1454 = vpop.permute.xlu0 %1453
    %1455 = vrot.lane.b32.xlu0 %v1429, 112
    %v1456 = vpop.permute.xlu0 %1455
    %1457 = vrot.lane.b32.xlu0 %v1433, 112
    %v1458 = vpop.permute.xlu0 %1457
    %1459 = vrot.lane.b32.xlu0 %v1437, 112
    %v1460 = vpop.permute.xlu0 %1459
    %1461 = vrot.lane.b32.xlu0 %v1441, 112
    %v1462 = vpop.permute.xlu0 %1461
    %1463 = vrot.lane.b32.xlu0 %v1445, 112
    %v1464 = vpop.permute.xlu0 %1463
    %1465 = vrot.lane.b32.xlu0 %v1418, 112
    %v1466 = vpop.permute.xlu0 %1465
    %1467 = vrot.lane.b32.xlu0 %v1422, 112
    %v1468 = vpop.permute.xlu0 %1467
    %1469 = vrot.lane.b32.xlu0 %v1426, 112
    %v1470 = vpop.permute.xlu0 %1469
    %1471 = vrot.lane.b32.xlu0 %v1430, 112
    %v1472 = vpop.permute.xlu0 %1471
    %1473 = vrot.lane.b32.xlu0 %v1434, 112
    %v1474 = vpop.permute.xlu0 %1473
    %1475 = vrot.lane.b32.xlu0 %v1438, 112
    %v1476 = vpop.permute.xlu0 %1475
    %1477 = vrot.lane.b32.xlu0 %v1442, 112
    %v1478 = vpop.permute.xlu0 %1477
    %1479 = vrot.lane.b32.xlu0 %v1446, 112
    %v1480 = vpop.permute.xlu0 %1479
    %1481 = vrot.lane.b32.xlu0 %v1419, 112
    %v1482 = vpop.permute.xlu0 %1481
    %1483 = vrot.lane.b32.xlu0 %v1423, 112
    %v1484 = vpop.permute.xlu0 %1483
    %1485 = vrot.lane.b32.xlu0 %v1427, 112
    %v1486 = vpop.permute.xlu0 %1485
    %1487 = vrot.lane.b32.xlu0 %v1431, 112
    %v1488 = vpop.permute.xlu0 %1487
    %1489 = vrot.lane.b32.xlu0 %v1435, 112
    %v1490 = vpop.permute.xlu0 %1489
    %1491 = vrot.lane.b32.xlu0 %v1439, 112
    %v1492 = vpop.permute.xlu0 %1491
    %1493 = vrot.lane.b32.xlu0 %v1443, 112
    %v1494 = vpop.permute.xlu0 %1493
    %1495 = vrot.lane.b32.xlu0 %v1447, 112
    %v1496 = vpop.permute.xlu0 %1495
    %1497 = vrot.lane.b32.xlu0 %v1420, 112
    %v1498 = vpop.permute.xlu0 %1497
    %1499 = vrot.lane.b32.xlu0 %v1424, 112
    %v1500 = vpop.permute.xlu0 %1499
    %1501 = vrot.lane.b32.xlu0 %v1428, 112
    %v1502 = vpop.permute.xlu0 %1501
    %1503 = vrot.lane.b32.xlu0 %v1432, 112
    %v1504 = vpop.permute.xlu0 %1503
    %1505 = vrot.lane.b32.xlu0 %v1436, 112
    %v1506 = vpop.permute.xlu0 %1505
    %1507 = vrot.lane.b32.xlu0 %v1440, 112
    %v1508 = vpop.permute.xlu0 %1507
    %1509 = vrot.lane.b32.xlu0 %v1444, 112
    %v1510 = vpop.permute.xlu0 %1509
    %1511 = vrot.lane.b32.xlu0 %v1448, 112
    %v1512 = vpop.permute.xlu0 %1511
    %vm1513 = vcmp.lt.s32.totalorder %v153, 112
    %v1514 = vsel %vm1513, %v1482, %v1498
    %v1515 = vsel %vm1513, %v1484, %v1500
    %v1516 = vsel %vm1513, %v1486, %v1502
    %v1517 = vsel %vm1513, %v1488, %v1504
    %v1518 = vsel %vm1513, %v1490, %v1506
    %v1519 = vsel %vm1513, %v1492, %v1508
    %v1520 = vsel %vm1513, %v1494, %v1510
    %v1521 = vsel %vm1513, %v1496, %v1512
    %v1522 = vsel %vm1513, %v1466, %v1482
    %v1523 = vsel %vm1513, %v1468, %v1484
    %v1524 = vsel %vm1513, %v1470, %v1486
    %v1525 = vsel %vm1513, %v1472, %v1488
    %v1526 = vsel %vm1513, %v1474, %v1490
    %v1527 = vsel %vm1513, %v1476, %v1492
    %v1528 = vsel %vm1513, %v1478, %v1494
    %v1529 = vsel %vm1513, %v1480, %v1496
    %v1530 = vsel %vm1513, %v1450, %v1466
    %v1531 = vsel %vm1513, %v1452, %v1468
    %v1532 = vsel %vm1513, %v1454, %v1470
    %v1533 = vsel %vm1513, %v1456, %v1472
    %v1534 = vsel %vm1513, %v1458, %v1474
    %v1535 = vsel %vm1513, %v1460, %v1476
    %v1536 = vsel %vm1513, %v1462, %v1478
    %v1537 = vsel %vm1513, %v1464, %v1480
    %v1538 = vsel %vm1513, %v1498, %v1450
    %v1539 = vsel %vm1513, %v1500, %v1452
    %v1540 = vsel %vm1513, %v1502, %v1454
    %v1541 = vsel %vm1513, %v1504, %v1456
    %v1542 = vsel %vm1513, %v1506, %v1458
    %v1543 = vsel %vm1513, %v1508, %v1460
    %v1544 = vsel %vm1513, %v1510, %v1462
    %v1545 = vsel %vm1513, %v1512, %v1464
    %s1546 = scalar_lea.vmem %s5, 7
    %v1547 = vld [vmem:[%s1546] ss:$8 sm:$0xf]
    %v1549 = vlaneseq
    %v1550 = vshrl.u32 %v1549, 7
    %v1551 = vsub.s32 0, %v1550
    %v1552 = vrot.slane %v1547, %v1551
    %v1553 = vlaneseq
    %v1554 = vshrl.u32 %v1553, 7
    %v1555 = vsub.s32 1, %v1554
    %v1556 = vrot.slane %v1547, %v1555
    %v1557 = vlaneseq
    %v1558 = vshrl.u32 %v1557, 7
    %v1559 = vsub.s32 2, %v1558
    %v1560 = vrot.slane %v1547, %v1559
    %v1561 = vlaneseq
    %v1562 = vshrl.u32 %v1561, 7
    %v1563 = vsub.s32 3, %v1562
    %v1564 = vrot.slane %v1547, %v1563
    %v1569 = vmul.f32 %v1530, %v1552
    %v1570 = vmul.f32 %v1522, %v1556
    %v1571 = vmul.f32 %v1514, %v1560
    %v1572 = vmul.f32 %v1538, %v1564
    %v1573 = vmul.f32 %v1531, %v1552
    %v1574 = vmul.f32 %v1523, %v1556
    %v1575 = vmul.f32 %v1515, %v1560
    %v1576 = vmul.f32 %v1539, %v1564
    %v1577 = vmul.f32 %v1532, %v1552
    %v1578 = vmul.f32 %v1524, %v1556
    %v1579 = vmul.f32 %v1516, %v1560
    %v1580 = vmul.f32 %v1540, %v1564
    %v1581 = vmul.f32 %v1533, %v1552
    %v1582 = vmul.f32 %v1525, %v1556
    %v1583 = vmul.f32 %v1517, %v1560
    %v1584 = vmul.f32 %v1541, %v1564
    %v1585 = vmul.f32 %v1534, %v1552
    %v1586 = vmul.f32 %v1526, %v1556
    %v1587 = vmul.f32 %v1518, %v1560
    %v1588 = vmul.f32 %v1542, %v1564
    %v1589 = vmul.f32 %v1535, %v1552
    %v1590 = vmul.f32 %v1527, %v1556
    %v1591 = vmul.f32 %v1519, %v1560
    %v1592 = vmul.f32 %v1543, %v1564
    %v1593 = vmul.f32 %v1536, %v1552
    %v1594 = vmul.f32 %v1528, %v1556
    %v1595 = vmul.f32 %v1520, %v1560
    %v1596 = vmul.f32 %v1544, %v1564
    %v1597 = vmul.f32 %v1537, %v1552
    %v1598 = vmul.f32 %v1529, %v1556
    %v1599 = vmul.f32 %v1521, %v1560
    %v1600 = vmul.f32 %v1545, %v1564
    %v1601 = vpack.c.bf16 %v1573, %v1569
    %v1602 = vpack.c.bf16 %v1574, %v1570
    %v1603 = vpack.c.bf16 %v1575, %v1571
    %v1604 = vpack.c.bf16 %v1576, %v1572
    %v1605 = vpack.c.bf16 %v1581, %v1577
    %v1606 = vpack.c.bf16 %v1582, %v1578
    %v1607 = vpack.c.bf16 %v1583, %v1579
    %v1608 = vpack.c.bf16 %v1584, %v1580
    %v1609 = vpack.c.bf16 %v1589, %v1585
    %v1610 = vpack.c.bf16 %v1590, %v1586
    %v1611 = vpack.c.bf16 %v1591, %v1587
    %v1612 = vpack.c.bf16 %v1592, %v1588
    %v1613 = vpack.c.bf16 %v1597, %v1593
    %v1614 = vpack.c.bf16 %v1598, %v1594
    %v1615 = vpack.c.bf16 %v1599, %v1595
    %v1616 = vpack.c.bf16 %v1600, %v1596
    %1617 = vst [vmem:[#allocation2 + $0x380] sm:$0xff] %v1601
    %1618 = vst [vmem:[#allocation2 + $0x388] sm:$0xff] %v1602
    %1619 = vst [vmem:[#allocation2 + $0x390] sm:$0xff] %v1603
    %1620 = vst [vmem:[#allocation2 + $0x398] sm:$0xff] %v1604
    %1621 = vst [vmem:[#allocation2 + $0x3a0] sm:$0xff] %v1605
    %1622 = vst [vmem:[#allocation2 + $0x3a8] sm:$0xff] %v1606
    %1623 = vst [vmem:[#allocation2 + $0x3b0] sm:$0xff] %v1607
    %1624 = vst [vmem:[#allocation2 + $0x3b8] sm:$0xff] %v1608
    %1625 = vst [vmem:[#allocation2 + $0x3c0] sm:$0xff] %v1609
    %1626 = vst [vmem:[#allocation2 + $0x3c8] sm:$0xff] %v1610
    %1627 = vst [vmem:[#allocation2 + $0x3d0] sm:$0xff] %v1611
    %1628 = vst [vmem:[#allocation2 + $0x3d8] sm:$0xff] %v1612
    %1629 = vst [vmem:[#allocation2 + $0x3e0] sm:$0xff] %v1613
    %1630 = vst [vmem:[#allocation2 + $0x3e8] sm:$0xff] %v1614
    %1631 = vst [vmem:[#allocation2 + $0x3f0] sm:$0xff] %v1615
    %1632 = vst [vmem:[#allocation2 + $0x3f8] sm:$0xff] %v1616
    %v1633 = vld [vmem:[#allocation3] sm:$0xff]
    %v1634 = vld [vmem:[#allocation3 + $0x8] sm:$0xff]
    %v1635 = vld [vmem:[#allocation3 + $0x10] sm:$0xff]
    %v1636 = vld [vmem:[#allocation3 + $0x18] sm:$0xff]
    %v1637 = vld [vmem:[#allocation3 + $0x20] sm:$0xff]
    %v1638 = vld [vmem:[#allocation3 + $0x28] sm:$0xff]
    %v1639 = vld [vmem:[#allocation3 + $0x30] sm:$0xff]
    %v1640 = vld [vmem:[#allocation3 + $0x38] sm:$0xff]
    %v1641 = vld [vmem:[#allocation3 + $0x40] sm:$0xff]
    %v1642 = vld [vmem:[#allocation3 + $0x48] sm:$0xff]
    %v1643 = vld [vmem:[#allocation3 + $0x50] sm:$0xff]
    %v1644 = vld [vmem:[#allocation3 + $0x58] sm:$0xff]
    %v1645 = vld [vmem:[#allocation3 + $0x60] sm:$0xff]
    %v1646 = vld [vmem:[#allocation3 + $0x68] sm:$0xff]
    %v1647 = vld [vmem:[#allocation3 + $0x70] sm:$0xff]
    %v1648 = vld [vmem:[#allocation3 + $0x78] sm:$0xff]
    %v1649 = vld [vmem:[#allocation3 + $0x80] sm:$0xff]
    %v1650 = vld [vmem:[#allocation3 + $0x88] sm:$0xff]
    %v1651 = vld [vmem:[#allocation3 + $0x90] sm:$0xff]
    %v1652 = vld [vmem:[#allocation3 + $0x98] sm:$0xff]
    %v1653 = vld [vmem:[#allocation3 + $0xa0] sm:$0xff]
    %v1654 = vld [vmem:[#allocation3 + $0xa8] sm:$0xff]
    %v1655 = vld [vmem:[#allocation3 + $0xb0] sm:$0xff]
    %v1656 = vld [vmem:[#allocation3 + $0xb8] sm:$0xff]
    %v1657 = vld [vmem:[#allocation3 + $0xc0] sm:$0xff]
    %v1658 = vld [vmem:[#allocation3 + $0xc8] sm:$0xff]
    %v1659 = vld [vmem:[#allocation3 + $0xd0] sm:$0xff]
    %v1660 = vld [vmem:[#allocation3 + $0xd8] sm:$0xff]
    %v1661 = vld [vmem:[#allocation3 + $0xe0] sm:$0xff]
    %v1662 = vld [vmem:[#allocation3 + $0xe8] sm:$0xff]
    %v1663 = vld [vmem:[#allocation3 + $0xf0] sm:$0xff]
    %v1664 = vld [vmem:[#allocation3 + $0xf8] sm:$0xff]
    %1665 = vrot.lane.b32.xlu0 %v1633, 111
    %v1666 = vpop.permute.xlu0 %1665
    %1667 = vrot.lane.b32.xlu0 %v1637, 111
    %v1668 = vpop.permute.xlu0 %1667
    %1669 = vrot.lane.b32.xlu0 %v1641, 111
    %v1670 = vpop.permute.xlu0 %1669
    %1671 = vrot.lane.b32.xlu0 %v1645, 111
    %v1672 = vpop.permute.xlu0 %1671
    %1673 = vrot.lane.b32.xlu0 %v1649, 111
    %v1674 = vpop.permute.xlu0 %1673
    %1675 = vrot.lane.b32.xlu0 %v1653, 111
    %v1676 = vpop.permute.xlu0 %1675
    %1677 = vrot.lane.b32.xlu0 %v1657, 111
    %v1678 = vpop.permute.xlu0 %1677
    %1679 = vrot.lane.b32.xlu0 %v1661, 111
    %v1680 = vpop.permute.xlu0 %1679
    %1681 = vrot.lane.b32.xlu0 %v1634, 111
    %v1682 = vpop.permute.xlu0 %1681
    %1683 = vrot.lane.b32.xlu0 %v1638, 111
    %v1684 = vpop.permute.xlu0 %1683
    %1685 = vrot.lane.b32.xlu0 %v1642, 111
    %v1686 = vpop.permute.xlu0 %1685
    %1687 = vrot.lane.b32.xlu0 %v1646, 111
    %v1688 = vpop.permute.xlu0 %1687
    %1689 = vrot.lane.b32.xlu0 %v1650, 111
    %v1690 = vpop.permute.xlu0 %1689
    %1691 = vrot.lane.b32.xlu0 %v1654, 111
    %v1692 = vpop.permute.xlu0 %1691
    %1693 = vrot.lane.b32.xlu0 %v1658, 111
    %v1694 = vpop.permute.xlu0 %1693
    %1695 = vrot.lane.b32.xlu0 %v1662, 111
    %v1696 = vpop.permute.xlu0 %1695
    %1697 = vrot.lane.b32.xlu0 %v1635, 111
    %v1698 = vpop.permute.xlu0 %1697
    %1699 = vrot.lane.b32.xlu0 %v1639, 111
    %v1700 = vpop.permute.xlu0 %1699
    %1701 = vrot.lane.b32.xlu0 %v1643, 111
    %v1702 = vpop.permute.xlu0 %1701
    %1703 = vrot.lane.b32.xlu0 %v1647, 111
    %v1704 = vpop.permute.xlu0 %1703
    %1705 = vrot.lane.b32.xlu0 %v1651, 111
    %v1706 = vpop.permute.xlu0 %1705
    %1707 = vrot.lane.b32.xlu0 %v1655, 111
    %v1708 = vpop.permute.xlu0 %1707
    %1709 = vrot.lane.b32.xlu0 %v1659, 111
    %v1710 = vpop.permute.xlu0 %1709
    %1711 = vrot.lane.b32.xlu0 %v1663, 111
    %v1712 = vpop.permute.xlu0 %1711
    %1713 = vrot.lane.b32.xlu0 %v1636, 111
    %v1714 = vpop.permute.xlu0 %1713
    %1715 = vrot.lane.b32.xlu0 %v1640, 111
    %v1716 = vpop.permute.xlu0 %1715
    %1717 = vrot.lane.b32.xlu0 %v1644, 111
    %v1718 = vpop.permute.xlu0 %1717
    %1719 = vrot.lane.b32.xlu0 %v1648, 111
    %v1720 = vpop.permute.xlu0 %1719
    %1721 = vrot.lane.b32.xlu0 %v1652, 111
    %v1722 = vpop.permute.xlu0 %1721
    %1723 = vrot.lane.b32.xlu0 %v1656, 111
    %v1724 = vpop.permute.xlu0 %1723
    %1725 = vrot.lane.b32.xlu0 %v1660, 111
    %v1726 = vpop.permute.xlu0 %1725
    %1727 = vrot.lane.b32.xlu0 %v1664, 111
    %v1728 = vpop.permute.xlu0 %1727
    %vm1729 = vcmp.lt.s32.totalorder %v153, 111
    %v1730 = vsel %vm1729, %v1698, %v1714
    %v1731 = vsel %vm1729, %v1700, %v1716
    %v1732 = vsel %vm1729, %v1702, %v1718
    %v1733 = vsel %vm1729, %v1704, %v1720
    %v1734 = vsel %vm1729, %v1706, %v1722
    %v1735 = vsel %vm1729, %v1708, %v1724
    %v1736 = vsel %vm1729, %v1710, %v1726
    %v1737 = vsel %vm1729, %v1712, %v1728
    %v1738 = vsel %vm1729, %v1682, %v1698
    %v1739 = vsel %vm1729, %v1684, %v1700
    %v1740 = vsel %vm1729, %v1686, %v1702
    %v1741 = vsel %vm1729, %v1688, %v1704
    %v1742 = vsel %vm1729, %v1690, %v1706
    %v1743 = vsel %vm1729, %v1692, %v1708
    %v1744 = vsel %vm1729, %v1694, %v1710
    %v1745 = vsel %vm1729, %v1696, %v1712
    %v1746 = vsel %vm1729, %v1666, %v1682
    %v1747 = vsel %vm1729, %v1668, %v1684
    %v1748 = vsel %vm1729, %v1670, %v1686
    %v1749 = vsel %vm1729, %v1672, %v1688
    %v1750 = vsel %vm1729, %v1674, %v1690
    %v1751 = vsel %vm1729, %v1676, %v1692
    %v1752 = vsel %vm1729, %v1678, %v1694
    %v1753 = vsel %vm1729, %v1680, %v1696
    %v1754 = vsel %vm1729, %v1714, %v1666
    %v1755 = vsel %vm1729, %v1716, %v1668
    %v1756 = vsel %vm1729, %v1718, %v1670
    %v1757 = vsel %vm1729, %v1720, %v1672
    %v1758 = vsel %vm1729, %v1722, %v1674
    %v1759 = vsel %vm1729, %v1724, %v1676
    %v1760 = vsel %vm1729, %v1726, %v1678
    %v1761 = vsel %vm1729, %v1728, %v1680
    %s1762 = scalar_lea.vmem %s5, 32
    %v1763 = vld [vmem:[%s1762] ss:$8 sm:$0xf]
    %v1765 = vlaneseq
    %v1766 = vshrl.u32 %v1765, 7
    %v1767 = vsub.s32 0, %v1766
    %v1768 = vrot.slane %v1763, %v1767
    %v1769 = vlaneseq
    %v1770 = vshrl.u32 %v1769, 7
    %v1771 = vsub.s32 1, %v1770
    %v1772 = vrot.slane %v1763, %v1771
    %v1773 = vlaneseq
    %v1774 = vshrl.u32 %v1773, 7
    %v1775 = vsub.s32 2, %v1774
    %v1776 = vrot.slane %v1763, %v1775
    %v1777 = vlaneseq
    %v1778 = vshrl.u32 %v1777, 7
    %v1779 = vsub.s32 3, %v1778
    %v1780 = vrot.slane %v1763, %v1779
    %v1785 = vmul.f32 %v1746, %v1768
    %v1786 = vmul.f32 %v1738, %v1772
    %v1787 = vmul.f32 %v1730, %v1776
    %v1788 = vmul.f32 %v1754, %v1780
    %v1789 = vmul.f32 %v1747, %v1768
    %v1790 = vmul.f32 %v1739, %v1772
    %v1791 = vmul.f32 %v1731, %v1776
    %v1792 = vmul.f32 %v1755, %v1780
    %v1793 = vmul.f32 %v1748, %v1768
    %v1794 = vmul.f32 %v1740, %v1772
    %v1795 = vmul.f32 %v1732, %v1776
    %v1796 = vmul.f32 %v1756, %v1780
    %v1797 = vmul.f32 %v1749, %v1768
    %v1798 = vmul.f32 %v1741, %v1772
    %v1799 = vmul.f32 %v1733, %v1776
    %v1800 = vmul.f32 %v1757, %v1780
    %v1801 = vmul.f32 %v1750, %v1768
    %v1802 = vmul.f32 %v1742, %v1772
    %v1803 = vmul.f32 %v1734, %v1776
    %v1804 = vmul.f32 %v1758, %v1780
    %v1805 = vmul.f32 %v1751, %v1768
    %v1806 = vmul.f32 %v1743, %v1772
    %v1807 = vmul.f32 %v1735, %v1776
    %v1808 = vmul.f32 %v1759, %v1780
    %v1809 = vmul.f32 %v1752, %v1768
    %v1810 = vmul.f32 %v1744, %v1772
    %v1811 = vmul.f32 %v1736, %v1776
    %v1812 = vmul.f32 %v1760, %v1780
    %v1813 = vmul.f32 %v1753, %v1768
    %v1814 = vmul.f32 %v1745, %v1772
    %v1815 = vmul.f32 %v1737, %v1776
    %v1816 = vmul.f32 %v1761, %v1780
    %v1817 = vpack.c.bf16 %v1789, %v1785
    %v1818 = vpack.c.bf16 %v1790, %v1786
    %v1819 = vpack.c.bf16 %v1791, %v1787
    %v1820 = vpack.c.bf16 %v1792, %v1788
    %v1821 = vpack.c.bf16 %v1797, %v1793
    %v1822 = vpack.c.bf16 %v1798, %v1794
    %v1823 = vpack.c.bf16 %v1799, %v1795
    %v1824 = vpack.c.bf16 %v1800, %v1796
    %v1825 = vpack.c.bf16 %v1805, %v1801
    %v1826 = vpack.c.bf16 %v1806, %v1802
    %v1827 = vpack.c.bf16 %v1807, %v1803
    %v1828 = vpack.c.bf16 %v1808, %v1804
    %v1829 = vpack.c.bf16 %v1813, %v1809
    %v1830 = vpack.c.bf16 %v1814, %v1810
    %v1831 = vpack.c.bf16 %v1815, %v1811
    %v1832 = vpack.c.bf16 %v1816, %v1812
    %1833 = vst [vmem:[#allocation2 + $0x400] sm:$0xff] %v1817
    %1834 = vst [vmem:[#allocation2 + $0x408] sm:$0xff] %v1818
    %1835 = vst [vmem:[#allocation2 + $0x410] sm:$0xff] %v1819
    %1836 = vst [vmem:[#allocation2 + $0x418] sm:$0xff] %v1820
    %1837 = vst [vmem:[#allocation2 + $0x420] sm:$0xff] %v1821
    %1838 = vst [vmem:[#allocation2 + $0x428] sm:$0xff] %v1822
    %1839 = vst [vmem:[#allocation2 + $0x430] sm:$0xff] %v1823
    %1840 = vst [vmem:[#allocation2 + $0x438] sm:$0xff] %v1824
    %1841 = vst [vmem:[#allocation2 + $0x440] sm:$0xff] %v1825
    %1842 = vst [vmem:[#allocation2 + $0x448] sm:$0xff] %v1826
    %1843 = vst [vmem:[#allocation2 + $0x450] sm:$0xff] %v1827
    %1844 = vst [vmem:[#allocation2 + $0x458] sm:$0xff] %v1828
    %1845 = vst [vmem:[#allocation2 + $0x460] sm:$0xff] %v1829
    %1846 = vst [vmem:[#allocation2 + $0x468] sm:$0xff] %v1830
    %1847 = vst [vmem:[#allocation2 + $0x470] sm:$0xff] %v1831
    %1848 = vst [vmem:[#allocation2 + $0x478] sm:$0xff] %v1832
    %v1849 = vld [vmem:[#allocation6] sm:$0xff]
    %v1850 = vld [vmem:[#allocation6 + $0x8] sm:$0xff]
    %v1851 = vld [vmem:[#allocation6 + $0x10] sm:$0xf]
    %v1852 = vld [vmem:[#allocation6 + $0x14] sm:$0xff]
    %v1853 = vld [vmem:[#allocation6 + $0x1c] sm:$0xff]
    %v1854 = vld [vmem:[#allocation6 + $0x24] sm:$0xf]
    %v1855 = vld [vmem:[#allocation6 + $0x28] sm:$0xff]
    %v1856 = vld [vmem:[#allocation6 + $0x30] sm:$0xff]
    %v1857 = vld [vmem:[#allocation6 + $0x38] sm:$0xf]
    %v1858 = vld [vmem:[#allocation6 + $0x3c] sm:$0xff]
    %v1859 = vld [vmem:[#allocation6 + $0x44] sm:$0xff]
    %v1860 = vld [vmem:[#allocation6 + $0x4c] sm:$0xf]
    %v1861 = vld [vmem:[#allocation6 + $0x50] sm:$0xff]
    %v1862 = vld [vmem:[#allocation6 + $0x58] sm:$0xff]
    %v1863 = vld [vmem:[#allocation6 + $0x60] sm:$0xf]
    %v1864 = vld [vmem:[#allocation6 + $0x64] sm:$0xff]
    %v1865 = vld [vmem:[#allocation6 + $0x6c] sm:$0xff]
    %v1866 = vld [vmem:[#allocation6 + $0x74] sm:$0xf]
    %v1867 = vld [vmem:[#allocation6 + $0x78] sm:$0xff]
    %v1868 = vld [vmem:[#allocation6 + $0x80] sm:$0xff]
    %v1869 = vld [vmem:[#allocation6 + $0x88] sm:$0xf]
    %v1870 = vld [vmem:[#allocation6 + $0x8c] sm:$0xff]
    %v1871 = vld [vmem:[#allocation6 + $0x94] sm:$0xff]
    %v1872 = vld [vmem:[#allocation6 + $0x9c] sm:$0xf]
    %v1873 = vld [vmem:[#allocation2] sm:$0xff]
    %v1874 = vld [vmem:[#allocation2 + $0x8] sm:$0xff]
    %v1875 = vld [vmem:[#allocation2 + $0x10] sm:$0xff]
    %v1876 = vld [vmem:[#allocation2 + $0x18] sm:$0xff]
    %v1877 = vld [vmem:[#allocation2 + $0x20] sm:$0xff]
    %v1878 = vld [vmem:[#allocation2 + $0x28] sm:$0xff]
    %v1879 = vld [vmem:[#allocation2 + $0x30] sm:$0xff]
    %v1880 = vld [vmem:[#allocation2 + $0x38] sm:$0xff]
    %v1881 = vld [vmem:[#allocation2 + $0x40] sm:$0xff]
    %v1882 = vld [vmem:[#allocation2 + $0x48] sm:$0xff]
    %v1883 = vld [vmem:[#allocation2 + $0x50] sm:$0xff]
    %v1884 = vld [vmem:[#allocation2 + $0x58] sm:$0xff]
    %v1885 = vld [vmem:[#allocation2 + $0x60] sm:$0xff]
    %v1886 = vld [vmem:[#allocation2 + $0x68] sm:$0xff]
    %v1887 = vld [vmem:[#allocation2 + $0x70] sm:$0xff]
    %v1888 = vld [vmem:[#allocation2 + $0x78] sm:$0xff]
    %v1889 = vld [vmem:[#allocation2 + $0x80] sm:$0xff]
    %v1890 = vld [vmem:[#allocation2 + $0x88] sm:$0xff]
    %v1891 = vld [vmem:[#allocation2 + $0x90] sm:$0xff]
    %v1892 = vld [vmem:[#allocation2 + $0x98] sm:$0xff]
    %v1893 = vld [vmem:[#allocation2 + $0xa0] sm:$0xff]
    %v1894 = vld [vmem:[#allocation2 + $0xa8] sm:$0xff]
    %v1895 = vld [vmem:[#allocation2 + $0xb0] sm:$0xff]
    %v1896 = vld [vmem:[#allocation2 + $0xb8] sm:$0xff]
    %v1897 = vld [vmem:[#allocation2 + $0xc0] sm:$0xff]
    %v1898 = vld [vmem:[#allocation2 + $0xc8] sm:$0xff]
    %v1899 = vld [vmem:[#allocation2 + $0xd0] sm:$0xff]
    %v1900 = vld [vmem:[#allocation2 + $0xd8] sm:$0xff]
    %v1901 = vld [vmem:[#allocation2 + $0xe0] sm:$0xff]
    %v1902 = vld [vmem:[#allocation2 + $0xe8] sm:$0xff]
    %v1903 = vld [vmem:[#allocation2 + $0xf0] sm:$0xff]
    %v1904 = vld [vmem:[#allocation2 + $0xf8] sm:$0xff]
    %v1905 = vld [vmem:[#allocation2 + $0x100] sm:$0xff]
    %v1906 = vld [vmem:[#allocation2 + $0x108] sm:$0xff]
    %v1907 = vld [vmem:[#allocation2 + $0x110] sm:$0xff]
    %v1908 = vld [vmem:[#allocation2 + $0x118] sm:$0xff]
    %v1909 = vld [vmem:[#allocation2 + $0x120] sm:$0xff]
    %v1910 = vld [vmem:[#allocation2 + $0x128] sm:$0xff]
    %v1911 = vld [vmem:[#allocation2 + $0x130] sm:$0xff]
    %v1912 = vld [vmem:[#allocation2 + $0x138] sm:$0xff]
    %v1913 = vld [vmem:[#allocation2 + $0x140] sm:$0xff]
    %v1914 = vld [vmem:[#allocation2 + $0x148] sm:$0xff]
    %v1915 = vld [vmem:[#allocation2 + $0x150] sm:$0xff]
    %v1916 = vld [vmem:[#allocation2 + $0x158] sm:$0xff]
    %v1917 = vld [vmem:[#allocation2 + $0x160] sm:$0xff]
    %v1918 = vld [vmem:[#allocation2 + $0x168] sm:$0xff]
    %v1919 = vld [vmem:[#allocation2 + $0x170] sm:$0xff]
    %v1920 = vld [vmem:[#allocation2 + $0x178] sm:$0xff]
    %v1921 = vld [vmem:[#allocation2 + $0x180] sm:$0xff]
    %v1922 = vld [vmem:[#allocation2 + $0x188] sm:$0xff]
    %v1923 = vld [vmem:[#allocation2 + $0x190] sm:$0xff]
    %v1924 = vld [vmem:[#allocation2 + $0x198] sm:$0xff]
    %v1925 = vld [vmem:[#allocation2 + $0x1a0] sm:$0xff]
    %v1926 = vld [vmem:[#allocation2 + $0x1a8] sm:$0xff]
    %v1927 = vld [vmem:[#allocation2 + $0x1b0] sm:$0xff]
    %v1928 = vld [vmem:[#allocation2 + $0x1b8] sm:$0xff]
    %v1929 = vld [vmem:[#allocation2 + $0x1c0] sm:$0xff]
    %v1930 = vld [vmem:[#allocation2 + $0x1c8] sm:$0xff]
    %v1931 = vld [vmem:[#allocation2 + $0x1d0] sm:$0xff]
    %v1932 = vld [vmem:[#allocation2 + $0x1d8] sm:$0xff]
    %v1933 = vld [vmem:[#allocation2 + $0x1e0] sm:$0xff]
    %v1934 = vld [vmem:[#allocation2 + $0x1e8] sm:$0xff]
    %v1935 = vld [vmem:[#allocation2 + $0x1f0] sm:$0xff]
    %v1936 = vld [vmem:[#allocation2 + $0x1f8] sm:$0xff]
    %v1937 = vld [vmem:[#allocation2 + $0x200] sm:$0xff]
    %v1938 = vld [vmem:[#allocation2 + $0x208] sm:$0xff]
    %v1939 = vld [vmem:[#allocation2 + $0x210] sm:$0xff]
    %v1940 = vld [vmem:[#allocation2 + $0x218] sm:$0xff]
    %v1941 = vld [vmem:[#allocation2 + $0x220] sm:$0xff]
    %v1942 = vld [vmem:[#allocation2 + $0x228] sm:$0xff]
    %v1943 = vld [vmem:[#allocation2 + $0x230] sm:$0xff]
    %v1944 = vld [vmem:[#allocation2 + $0x238] sm:$0xff]
    %v1945 = vld [vmem:[#allocation2 + $0x240] sm:$0xff]
    %v1946 = vld [vmem:[#allocation2 + $0x248] sm:$0xff]
    %v1947 = vld [vmem:[#allocation2 + $0x250] sm:$0xff]
    %v1948 = vld [vmem:[#allocation2 + $0x258] sm:$0xff]
    %v1949 = vld [vmem:[#allocation2 + $0x260] sm:$0xff]
    %v1950 = vld [vmem:[#allocation2 + $0x268] sm:$0xff]
    %v1951 = vld [vmem:[#allocation2 + $0x270] sm:$0xff]
    %v1952 = vld [vmem:[#allocation2 + $0x278] sm:$0xff]
    %v1953 = vld [vmem:[#allocation2 + $0x280] sm:$0xff]
    %v1954 = vld [vmem:[#allocation2 + $0x288] sm:$0xff]
    %v1955 = vld [vmem:[#allocation2 + $0x290] sm:$0xff]
    %v1956 = vld [vmem:[#allocation2 + $0x298] sm:$0xff]
    %v1957 = vld [vmem:[#allocation2 + $0x2a0] sm:$0xff]
    %v1958 = vld [vmem:[#allocation2 + $0x2a8] sm:$0xff]
    %v1959 = vld [vmem:[#allocation2 + $0x2b0] sm:$0xff]
    %v1960 = vld [vmem:[#allocation2 + $0x2b8] sm:$0xff]
    %v1961 = vld [vmem:[#allocation2 + $0x2c0] sm:$0xff]
    %v1962 = vld [vmem:[#allocation2 + $0x2c8] sm:$0xff]
    %v1963 = vld [vmem:[#allocation2 + $0x2d0] sm:$0xff]
    %v1964 = vld [vmem:[#allocation2 + $0x2d8] sm:$0xff]
    %v1965 = vld [vmem:[#allocation2 + $0x2e0] sm:$0xff]
    %v1966 = vld [vmem:[#allocation2 + $0x2e8] sm:$0xff]
    %v1967 = vld [vmem:[#allocation2 + $0x2f0] sm:$0xff]
    %v1968 = vld [vmem:[#allocation2 + $0x2f8] sm:$0xff]
    %v1969 = vld [vmem:[#allocation2 + $0x300] sm:$0xff]
    %v1970 = vld [vmem:[#allocation2 + $0x308] sm:$0xff]
    %v1971 = vld [vmem:[#allocation2 + $0x310] sm:$0xff]
    %v1972 = vld [vmem:[#allocation2 + $0x318] sm:$0xff]
    %v1973 = vld [vmem:[#allocation2 + $0x320] sm:$0xff]
    %v1974 = vld [vmem:[#allocation2 + $0x328] sm:$0xff]
    %v1975 = vld [vmem:[#allocation2 + $0x330] sm:$0xff]
    %v1976 = vld [vmem:[#allocation2 + $0x338] sm:$0xff]
    %v1977 = vld [vmem:[#allocation2 + $0x340] sm:$0xff]
    %v1978 = vld [vmem:[#allocation2 + $0x348] sm:$0xff]
    %v1979 = vld [vmem:[#allocation2 + $0x350] sm:$0xff]
    %v1980 = vld [vmem:[#allocation2 + $0x358] sm:$0xff]
    %v1981 = vld [vmem:[#allocation2 + $0x360] sm:$0xff]
    %v1982 = vld [vmem:[#allocation2 + $0x368] sm:$0xff]
    %v1983 = vld [vmem:[#allocation2 + $0x370] sm:$0xff]
    %v1984 = vld [vmem:[#allocation2 + $0x378] sm:$0xff]
    %v1985 = vld [vmem:[#allocation2 + $0x380] sm:$0xff]
    %v1986 = vld [vmem:[#allocation2 + $0x388] sm:$0xff]
    %v1987 = vld [vmem:[#allocation2 + $0x390] sm:$0xff]
    %v1988 = vld [vmem:[#allocation2 + $0x398] sm:$0xff]
    %v1989 = vld [vmem:[#allocation2 + $0x3a0] sm:$0xff]
    %v1990 = vld [vmem:[#allocation2 + $0x3a8] sm:$0xff]
    %v1991 = vld [vmem:[#allocation2 + $0x3b0] sm:$0xff]
    %v1992 = vld [vmem:[#allocation2 + $0x3b8] sm:$0xff]
    %v1993 = vld [vmem:[#allocation2 + $0x3c0] sm:$0xff]
    %v1994 = vld [vmem:[#allocation2 + $0x3c8] sm:$0xff]
    %v1995 = vld [vmem:[#allocation2 + $0x3d0] sm:$0xff]
    %v1996 = vld [vmem:[#allocation2 + $0x3d8] sm:$0xff]
    %v1997 = vld [vmem:[#allocation2 + $0x3e0] sm:$0xff]
    %v1998 = vld [vmem:[#allocation2 + $0x3e8] sm:$0xff]
    %v1999 = vld [vmem:[#allocation2 + $0x3f0] sm:$0xff]
    %v2000 = vld [vmem:[#allocation2 + $0x3f8] sm:$0xff]
    %v2001 = vld [vmem:[#allocation2 + $0x400] sm:$0xff]
    %v2002 = vld [vmem:[#allocation2 + $0x408] sm:$0xff]
    %v2003 = vld [vmem:[#allocation2 + $0x410] sm:$0xff]
    %v2004 = vld [vmem:[#allocation2 + $0x418] sm:$0xff]
    %v2005 = vld [vmem:[#allocation2 + $0x420] sm:$0xff]
    %v2006 = vld [vmem:[#allocation2 + $0x428] sm:$0xff]
    %v2007 = vld [vmem:[#allocation2 + $0x430] sm:$0xff]
    %v2008 = vld [vmem:[#allocation2 + $0x438] sm:$0xff]
    %v2009 = vld [vmem:[#allocation2 + $0x440] sm:$0xff]
    %v2010 = vld [vmem:[#allocation2 + $0x448] sm:$0xff]
    %v2011 = vld [vmem:[#allocation2 + $0x450] sm:$0xff]
    %v2012 = vld [vmem:[#allocation2 + $0x458] sm:$0xff]
    %v2013 = vld [vmem:[#allocation2 + $0x460] sm:$0xff]
    %v2014 = vld [vmem:[#allocation2 + $0x468] sm:$0xff]
    %v2015 = vld [vmem:[#allocation2 + $0x470] sm:$0xff]
    %v2016 = vld [vmem:[#allocation2 + $0x478] sm:$0xff]
    %v2017 = vld [vmem:[%s2] sm:$0xff]
    %v2018 = vld [vmem:[%s2 + $0x8] sm:$0xff]
    %v2019 = vld [vmem:[%s2 + $0x10] sm:$0xff]
    %v2020 = vld [vmem:[%s2 + $0x18] sm:$0xff]
    %v2021 = vld [vmem:[%s2 + $0x20] sm:$0xff]
    %v2022 = vld [vmem:[%s2 + $0x28] sm:$0xff]
    %v2023 = vld [vmem:[%s2 + $0x30] sm:$0xff]
    %v2024 = vld [vmem:[%s2 + $0x38] sm:$0xff]
    %2026 = vset.pattern.permute.xlu0 0
    %2027 = vperm.xlu0 %2026, %v2017
    %v2028 = vpop.permute.xlu0 %2027
    %2031 = vset.pattern.permute.xlu0 0
    %2032 = vperm.xlu0 %2031, %v2018
    %v2033 = vpop.permute.xlu0 %2032
    %2036 = vset.pattern.permute.xlu0 0
    %2037 = vperm.xlu0 %2036, %v2019
    %v2038 = vpop.permute.xlu0 %2037
    %2041 = vset.pattern.permute.xlu0 0
    %2042 = vperm.xlu0 %2041, %v2020
    %v2043 = vpop.permute.xlu0 %2042
    %2046 = vset.pattern.permute.xlu0 0
    %2047 = vperm.xlu0 %2046, %v2021
    %v2048 = vpop.permute.xlu0 %2047
    %2051 = vset.pattern.permute.xlu0 0
    %2052 = vperm.xlu0 %2051, %v2022
    %v2053 = vpop.permute.xlu0 %2052
    %2056 = vset.pattern.permute.xlu0 0
    %2057 = vperm.xlu0 %2056, %v2023
    %v2058 = vpop.permute.xlu0 %2057
    %2061 = vset.pattern.permute.xlu0 0
    %2062 = vperm.xlu0 %2061, %v2024
    %v2063 = vpop.permute.xlu0 %2062
    %v2089 = vunpack.c.l.b16 %v1849
    %v2090 = vunpack.c.h.b16 %v1849
    %v2091 = vunpack.c.l.b16 %v1850
    %v2092 = vunpack.c.h.b16 %v1850
    %v2093 = vunpack.c.l.b16 %v1851
    %v2094 = vunpack.c.l.b16 %v1852
    %v2095 = vunpack.c.h.b16 %v1852
    %v2096 = vunpack.c.l.b16 %v1853
    %v2097 = vunpack.c.h.b16 %v1853
    %v2098 = vunpack.c.l.b16 %v1854
    %v2099 = vunpack.c.l.b16 %v1855
    %v2100 = vunpack.c.h.b16 %v1855
    %v2101 = vunpack.c.l.b16 %v1856
    %v2102 = vunpack.c.h.b16 %v1856
    %v2103 = vunpack.c.l.b16 %v1857
    %v2104 = vunpack.c.l.b16 %v1858
    %v2105 = vunpack.c.h.b16 %v1858
    %v2106 = vunpack.c.l.b16 %v1859
    %v2107 = vunpack.c.h.b16 %v1859
    %v2108 = vunpack.c.l.b16 %v1860
    %v2109 = vunpack.c.l.b16 %v1861
    %v2110 = vunpack.c.h.b16 %v1861
    %v2111 = vunpack.c.l.b16 %v1862
    %v2112 = vunpack.c.h.b16 %v1862
    %v2113 = vunpack.c.l.b16 %v1863
    %v2114 = vunpack.c.l.b16 %v1864
    %v2115 = vunpack.c.h.b16 %v1864
    %v2116 = vunpack.c.l.b16 %v1865
    %v2117 = vunpack.c.h.b16 %v1865
    %v2118 = vunpack.c.l.b16 %v1866
    %v2119 = vunpack.c.l.b16 %v1867
    %v2120 = vunpack.c.h.b16 %v1867
    %v2121 = vunpack.c.l.b16 %v1868
    %v2122 = vunpack.c.h.b16 %v1868
    %v2123 = vunpack.c.l.b16 %v1869
    %v2124 = vunpack.c.l.b16 %v1870
    %v2125 = vunpack.c.h.b16 %v1870
    %v2126 = vunpack.c.l.b16 %v1871
    %v2127 = vunpack.c.h.b16 %v1871
    %v2128 = vunpack.c.l.b16 %v1872
    %v2129 = vpack.c.b16 %v2094, %v2089
    %v2130 = vpack.c.b16 %v2095, %v2090
    %v2131 = vpack.c.b16 %v2096, %v2091
    %v2132 = vpack.c.b16 %v2097, %v2092
    %v2133 = vpack.c.b16 %v2098, %v2093
    %v2134 = vpack.c.b16 %v2104, %v2099
    %v2135 = vpack.c.b16 %v2105, %v2100
    %v2136 = vpack.c.b16 %v2106, %v2101
    %v2137 = vpack.c.b16 %v2107, %v2102
    %v2138 = vpack.c.b16 %v2108, %v2103
    %v2139 = vpack.c.b16 %v2114, %v2109
    %v2140 = vpack.c.b16 %v2115, %v2110
    %v2141 = vpack.c.b16 %v2116, %v2111
    %v2142 = vpack.c.b16 %v2117, %v2112
    %v2143 = vpack.c.b16 %v2118, %v2113
    %v2144 = vpack.c.b16 %v2124, %v2119
    %v2145 = vpack.c.b16 %v2125, %v2120
    %v2146 = vpack.c.b16 %v2126, %v2121
    %v2147 = vpack.c.b16 %v2127, %v2122
    %v2148 = vpack.c.b16 %v2128, %v2123
    %vm2165 = vcmask 523264
    %v2167 = vsel %vm2165, %v2133, 0
    %v2170 = vsel %vm2165, %v2138, 0
    %v2173 = vsel %vm2165, %v2143, 0
    %v2176 = vsel %vm2165, %v2148, 0
    %2178 = vmatprep.subr.bf16.mxu0 %v1874
    %2179 = vmatpush1.bf16.msra.mxu0 %v1873
    %2180 = vmatprep.subr.bf16.mxu0 %v1878
    %2181 = vmatpush1.bf16.msra.mxu0 %v1877
    %2182 = vmatprep.subr.bf16.mxu0 %v1882
    %2183 = vmatpush1.bf16.msra.mxu0 %v1881
    %2184 = vmatprep.subr.bf16.mxu0 %v1886
    %2185 = vmatpush1.bf16.msra.mxu0 %v1885
    %2186 = vmatprep.subr.bf16.mxu0 %v1890
    %2187 = vmatpush1.bf16.msra.mxu0 %v1889
    %2188 = vmatprep.subr.bf16.mxu0 %v1894
    %2189 = vmatpush1.bf16.msra.mxu0 %v1893
    %2190 = vmatprep.subr.bf16.mxu0 %v1898
    %2191 = vmatpush1.bf16.msra.mxu0 %v1897
    %2192 = vmatprep.subr.bf16.mxu0 %v1902
    %2193 = vmatpush1.bf16.msra.mxu0 %v1901
    %2194 = vmatprep.subr.bf16.mxu0 %v1906
    %2195 = vmatpush1.bf16.msra.mxu0 %v1905
    %2196 = vmatprep.subr.bf16.mxu0 %v1910
    %2197 = vmatpush1.bf16.msra.mxu0 %v1909
    %2198 = vmatprep.subr.bf16.mxu0 %v1914
    %2199 = vmatpush1.bf16.msra.mxu0 %v1913
    %2200 = vmatprep.subr.bf16.mxu0 %v1918
    %2201 = vmatpush1.bf16.msra.mxu0 %v1917
    %2202 = vmatprep.subr.bf16.mxu0 %v1922
    %2203 = vmatpush1.bf16.msra.mxu0 %v1921
    %2204 = vmatprep.subr.bf16.mxu0 %v1926
    %2205 = vmatpush1.bf16.msra.mxu0 %v1925
    %2206 = vmatprep.subr.bf16.mxu0 %v1930
    %2207 = vmatpush1.bf16.msra.mxu0 %v1929
    %2208 = vmatprep.subr.bf16.mxu0 %v1934
    %2209 = vmatpush1.bf16.msra.mxu0 %v1933
    %2210 = vmatprep.mubr.bf16.mxu0 %v2130
    %2211 = vmatmul.mubr.bf16.gmra.mrb[0].mxu0 %v2129
    %v2212 = vpop.f32.mrb[0].mxu0
    %v2213 = vadd.f32 %v2028, %v2212
    %v2214 = vpop.f32.mrb[0].mxu0
    %v2215 = vadd.f32 %v2028, %v2214
    %v2216 = vpop.f32.mrb[0].mxu0
    %v2217 = vadd.f32 %v2033, %v2216
    %v2218 = vpop.f32.mrb[0].mxu0
    %v2219 = vadd.f32 %v2033, %v2218
    %2220 = vmatprep.mubr.bf16.mxu0 %v2135
    %2221 = vmatmul.mubr.bf16.gmra.mrb[0].mxu0 %v2134
    %v2222 = vpop.f32.mrb[0].mxu0
    %v2223 = vadd.f32 %v2038, %v2222
    %v2224 = vpop.f32.mrb[0].mxu0
    %v2225 = vadd.f32 %v2038, %v2224
    %v2226 = vpop.f32.mrb[0].mxu0
    %v2227 = vadd.f32 %v2043, %v2226
    %v2228 = vpop.f32.mrb[0].mxu0
    %v2229 = vadd.f32 %v2043, %v2228
    %2230 = vmatprep.mubr.bf16.mxu0 %v2140
    %2231 = vmatmul.mubr.bf16.gmra.mrb[0].mxu0 %v2139
    %v2232 = vpop.f32.mrb[0].mxu0
    %v2233 = vadd.f32 %v2048, %v2232
    %v2234 = vpop.f32.mrb[0].mxu0
    %v2235 = vadd.f32 %v2048, %v2234
    %v2236 = vpop.f32.mrb[0].mxu0
    %v2237 = vadd.f32 %v2053, %v2236
    %v2238 = vpop.f32.mrb[0].mxu0
    %v2239 = vadd.f32 %v2053, %v2238
    %2240 = vmatprep.mubr.bf16.mxu0 %v2145
    %2241 = vmatmul.mubr.bf16.gmra.mrb[0].mxu0 %v2144
    %v2242 = vpop.f32.mrb[0].mxu0
    %v2243 = vadd.f32 %v2058, %v2242
    %v2244 = vpop.f32.mrb[0].mxu0
    %v2245 = vadd.f32 %v2058, %v2244
    %v2246 = vpop.f32.mrb[0].mxu0
    %v2247 = vadd.f32 %v2063, %v2246
    %v2248 = vpop.f32.mrb[0].mxu0
    %v2249 = vadd.f32 %v2063, %v2248
    %2250 = vdwg.mxu0
    %2251 = vmatprep.subr.bf16.mxu0 %v1938
    %2252 = vmatpush1.bf16.msra.mxu0 %v1937
    %2253 = vmatprep.subr.bf16.mxu0 %v1942
    %2254 = vmatpush1.bf16.msra.mxu0 %v1941
    %2255 = vmatprep.subr.bf16.mxu0 %v1946
    %2256 = vmatpush1.bf16.msra.mxu0 %v1945
    %2257 = vmatprep.subr.bf16.mxu0 %v1950
    %2258 = vmatpush1.bf16.msra.mxu0 %v1949
    %2259 = vmatprep.subr.bf16.mxu0 %v1954
    %2260 = vmatpush1.bf16.msra.mxu0 %v1953
    %2261 = vmatprep.subr.bf16.mxu0 %v1958
    %2262 = vmatpush1.bf16.msra.mxu0 %v1957
    %2263 = vmatprep.subr.bf16.mxu0 %v1962
    %2264 = vmatpush1.bf16.msra.mxu0 %v1961
    %2265 = vmatprep.subr.bf16.mxu0 %v1966
    %2266 = vmatpush1.bf16.msra.mxu0 %v1965
    %2267 = vmatprep.subr.bf16.mxu0 %v1970
    %2268 = vmatpush1.bf16.msra.mxu0 %v1969
    %2269 = vmatprep.subr.bf16.mxu0 %v1974
    %2270 = vmatpush1.bf16.msra.mxu0 %v1973
    %2271 = vmatprep.subr.bf16.mxu0 %v1978
    %2272 = vmatpush1.bf16.msra.mxu0 %v1977
    %2273 = vmatprep.subr.bf16.mxu0 %v1982
    %2274 = vmatpush1.bf16.msra.mxu0 %v1981
    %2275 = vmatprep.subr.bf16.mxu0 %v1986
    %2276 = vmatpush1.bf16.msra.mxu0 %v1985
    %2277 = vmatprep.subr.bf16.mxu0 %v1990
    %2278 = vmatpush1.bf16.msra.mxu0 %v1989
    %2279 = vmatprep.subr.bf16.mxu0 %v1994
    %2280 = vmatpush1.bf16.msra.mxu0 %v1993
    %2281 = vmatprep.subr.bf16.mxu0 %v1998
    %2282 = vmatpush1.bf16.msra.mxu0 %v1997
    %2283 = vmatprep.mubr.bf16.mxu0 %v2132
    %2284 = vmatmul.mubr.bf16.gmra.mrb[0].mxu0 %v2131
    %v2285 = vpop.f32.mrb[0].mxu0
    %v2286 = vadd.f32 %v2213, %v2285
    %v2287 = vpop.f32.mrb[0].mxu0
    %v2288 = vadd.f32 %v2215, %v2287
    %v2289 = vpop.f32.mrb[0].mxu0
    %v2290 = vadd.f32 %v2217, %v2289
    %v2291 = vpop.f32.mrb[0].mxu0
    %v2292 = vadd.f32 %v2219, %v2291
    %2293 = vmatprep.mubr.bf16.mxu0 %v2137
    %2294 = vmatmul.mubr.bf16.gmra.mrb[0].mxu0 %v2136
    %v2295 = vpop.f32.mrb[0].mxu0
    %v2296 = vadd.f32 %v2223, %v2295
    %v2297 = vpop.f32.mrb[0].mxu0
    %v2298 = vadd.f32 %v2225, %v2297
    %v2299 = vpop.f32.mrb[0].mxu0
    %v2300 = vadd.f32 %v2227, %v2299
    %v2301 = vpop.f32.mrb[0].mxu0
    %v2302 = vadd.f32 %v2229, %v2301
    %2303 = vmatprep.mubr.bf16.mxu0 %v2142
    %2304 = vmatmul.mubr.bf16.gmra.mrb[0].mxu0 %v2141
    %v2305 = vpop.f32.mrb[0].mxu0
    %v2306 = vadd.f32 %v2233, %v2305
    %v2307 = vpop.f32.mrb[0].mxu0
    %v2308 = vadd.f32 %v2235, %v2307
    %v2309 = vpop.f32.mrb[0].mxu0
    %v2310 = vadd.f32 %v2237, %v2309
    %v2311 = vpop.f32.mrb[0].mxu0
    %v2312 = vadd.f32 %v2239, %v2311
    %2313 = vmatprep.mubr.bf16.mxu0 %v2147
    %2314 = vmatmul.mubr.bf16.gmra.mrb[0].mxu0 %v2146
    %v2315 = vpop.f32.mrb[0].mxu0
    %v2316 = vadd.f32 %v2243, %v2315
    %v2317 = vpop.f32.mrb[0].mxu0
    %v2318 = vadd.f32 %v2245, %v2317
    %v2319 = vpop.f32.mrb[0].mxu0
    %v2320 = vadd.f32 %v2247, %v2319
    %v2321 = vpop.f32.mrb[0].mxu0
    %v2322 = vadd.f32 %v2249, %v2321
    %2323 = vdwg.mxu0
    %2324 = vmatprep.subr.bf16.mxu0 %v2002
    %2325 = vmatpush1.bf16.msra.mxu0 %v2001
    %2326 = vmatprep.subr.bf16.mxu0 %v2006
    %2327 = vmatpush1.bf16.msra.mxu0 %v2005
    %2328 = vmatprep.subr.bf16.mxu0 %v2010
    %2329 = vmatpush1.bf16.msra.mxu0 %v2009
    %2330 = vmatprep.subr.bf16.mxu0 %v2014
    %2331 = vmatpush1.bf16.msra.mxu0 %v2013
    %2332 = vmatprep.subr.bf16.mxu0 0
    %2333 = vmatpush1.bf16.msra.mxu0 0
    %2334 = vmatprep.subr.bf16.mxu0 0
    %2335 = vmatpush1.bf16.msra.mxu0 0
    %2336 = vmatprep.subr.bf16.mxu0 0
    %2337 = vmatpush1.bf16.msra.mxu0 0
    %2338 = vmatprep.subr.bf16.mxu0 0
    %2339 = vmatpush1.bf16.msra.mxu0 0
    %2340 = vmatprep.subr.bf16.mxu0 0
    %2341 = vmatpush1.bf16.msra.mxu0 0
    %2342 = vmatprep.subr.bf16.mxu0 0
    %2343 = vmatpush1.bf16.msra.mxu0 0
    %2344 = vmatprep.subr.bf16.mxu0 0
    %2345 = vmatpush1.bf16.msra.mxu0 0
    %2346 = vmatprep.subr.bf16.mxu0 0
    %2347 = vmatpush1.bf16.msra.mxu0 0
    %2348 = vmatprep.subr.bf16.mxu0 0
    %2349 = vmatpush1.bf16.msra.mxu0 0
    %2350 = vmatprep.subr.bf16.mxu0 0
    %2351 = vmatpush1.bf16.msra.mxu0 0
    %2352 = vmatprep.subr.bf16.mxu0 0
    %2353 = vmatpush1.bf16.msra.mxu0 0
    %2354 = vmatprep.subr.bf16.mxu0 0
    %2355 = vmatpush1.bf16.msra.mxu0 0
    %2356 = vmatprep.mubr.bf16.mxu0 0
    %2357 = vmatmul.mubr.bf16.gmra.mrb[0].mxu0 %v2167
    %v2358 = vpop.f32.mrb[0].mxu0
    %v2359 = vadd.f32 %v2286, %v2358
    %v2360 = vpop.f32.mrb[0].mxu0
    %v2361 = vadd.f32 %v2288, %v2360
    %v2362 = vpop.f32.mrb[0].mxu0
    %v2363 = vadd.f32 %v2290, %v2362
    %v2364 = vpop.f32.mrb[0].mxu0
    %v2365 = vadd.f32 %v2292, %v2364
    %2366 = vmatprep.mubr.bf16.mxu0 0
    %2367 = vmatmul.mubr.bf16.gmra.mrb[0].mxu0 %v2170
    %v2368 = vpop.f32.mrb[0].mxu0
    %v2369 = vadd.f32 %v2296, %v2368
    %v2370 = vpop.f32.mrb[0].mxu0
    %v2371 = vadd.f32 %v2298, %v2370
    %v2372 = vpop.f32.mrb[0].mxu0
    %v2373 = vadd.f32 %v2300, %v2372
    %v2374 = vpop.f32.mrb[0].mxu0
    %v2375 = vadd.f32 %v2302, %v2374
    %2376 = vmatprep.mubr.bf16.mxu0 0
    %2377 = vmatmul.mubr.bf16.gmra.mrb[0].mxu0 %v2173
    %v2378 = vpop.f32.mrb[0].mxu0
    %v2379 = vadd.f32 %v2306, %v2378
    %v2380 = vpop.f32.mrb[0].mxu0
    %v2381 = vadd.f32 %v2308, %v2380
    %v2382 = vpop.f32.mrb[0].mxu0
    %v2383 = vadd.f32 %v2310, %v2382
    %v2384 = vpop.f32.mrb[0].mxu0
    %v2385 = vadd.f32 %v2312, %v2384
    %2386 = vmatprep.mubr.bf16.mxu0 0
    %2387 = vmatmul.mubr.bf16.gmra.mrb[0].mxu0 %v2176
    %v2388 = vpop.f32.mrb[0].mxu0
    %v2389 = vadd.f32 %v2316, %v2388
    %v2390 = vpop.f32.mrb[0].mxu0
    %v2391 = vadd.f32 %v2318, %v2390
    %v2392 = vpop.f32.mrb[0].mxu0
    %v2393 = vadd.f32 %v2320, %v2392
    %v2394 = vpop.f32.mrb[0].mxu0
    %v2395 = vadd.f32 %v2322, %v2394
    %2396 = vdwg.mxu0
    %2397 = vmatprep.subr.bf16.mxu0 %v1876
    %2398 = vmatpush1.bf16.msra.mxu0 %v1875
    %2399 = vmatprep.subr.bf16.mxu0 %v1880
    %2400 = vmatpush1.bf16.msra.mxu0 %v1879
    %2401 = vmatprep.subr.bf16.mxu0 %v1884
    %2402 = vmatpush1.bf16.msra.mxu0 %v1883
    %2403 = vmatprep.subr.bf16.mxu0 %v1888
    %2404 = vmatpush1.bf16.msra.mxu0 %v1887
    %2405 = vmatprep.subr.bf16.mxu0 %v1892
    %2406 = vmatpush1.bf16.msra.mxu0 %v1891
    %2407 = vmatprep.subr.bf16.mxu0 %v1896
    %2408 = vmatpush1.bf16.msra.mxu0 %v1895
    %2409 = vmatprep.subr.bf16.mxu0 %v1900
    %2410 = vmatpush1.bf16.msra.mxu0 %v1899
    %2411 = vmatprep.subr.bf16.mxu0 %v1904
    %2412 = vmatpush1.bf16.msra.mxu0 %v1903
    %2413 = vmatprep.subr.bf16.mxu0 %v1908
    %2414 = vmatpush1.bf16.msra.mxu0 %v1907
    %2415 = vmatprep.subr.bf16.mxu0 %v1912
    %2416 = vmatpush1.bf16.msra.mxu0 %v1911
    %2417 = vmatprep.subr.bf16.mxu0 %v1916
    %2418 = vmatpush1.bf16.msra.mxu0 %v1915
    %2419 = vmatprep.subr.bf16.mxu0 %v1920
    %2420 = vmatpush1.bf16.msra.mxu0 %v1919
    %2421 = vmatprep.subr.bf16.mxu0 %v1924
    %2422 = vmatpush1.bf16.msra.mxu0 %v1923
    %2423 = vmatprep.subr.bf16.mxu0 %v1928
    %2424 = vmatpush1.bf16.msra.mxu0 %v1927
    %2425 = vmatprep.subr.bf16.mxu0 %v1932
    %2426 = vmatpush1.bf16.msra.mxu0 %v1931
    %2427 = vmatprep.subr.bf16.mxu0 %v1936
    %2428 = vmatpush1.bf16.msra.mxu0 %v1935
    %2429 = vmatprep.mubr.bf16.mxu0 %v2130
    %2430 = vmatmul.mubr.bf16.gmra.mrb[0].mxu0 %v2129
    %v2431 = vpop.f32.mrb[0].mxu0
    %v2432 = vadd.f32 %v2028, %v2431
    %v2433 = vpop.f32.mrb[0].mxu0
    %v2434 = vadd.f32 %v2028, %v2433
    %v2435 = vpop.f32.mrb[0].mxu0
    %v2436 = vadd.f32 %v2033, %v2435
    %v2437 = vpop.f32.mrb[0].mxu0
    %v2438 = vadd.f32 %v2033, %v2437
    %2439 = vmatprep.mubr.bf16.mxu0 %v2135
    %2440 = vmatmul.mubr.bf16.gmra.mrb[0].mxu0 %v2134
    %v2441 = vpop.f32.mrb[0].mxu0
    %v2442 = vadd.f32 %v2038, %v2441
    %v2443 = vpop.f32.mrb[0].mxu0
    %v2444 = vadd.f32 %v2038, %v2443
    %v2445 = vpop.f32.mrb[0].mxu0
    %v2446 = vadd.f32 %v2043, %v2445
    %v2447 = vpop.f32.mrb[0].mxu0
    %v2448 = vadd.f32 %v2043, %v2447
    %2449 = vmatprep.mubr.bf16.mxu0 %v2140
    %2450 = vmatmul.mubr.bf16.gmra.mrb[0].mxu0 %v2139
    %v2451 = vpop.f32.mrb[0].mxu0
    %v2452 = vadd.f32 %v2048, %v2451
    %v2453 = vpop.f32.mrb[0].mxu0
    %v2454 = vadd.f32 %v2048, %v2453
    %v2455 = vpop.f32.mrb[0].mxu0
    %v2456 = vadd.f32 %v2053, %v2455
    %v2457 = vpop.f32.mrb[0].mxu0
    %v2458 = vadd.f32 %v2053, %v2457
    %2459 = vmatprep.mubr.bf16.mxu0 %v2145
    %2460 = vmatmul.mubr.bf16.gmra.mrb[0].mxu0 %v2144
    %v2461 = vpop.f32.mrb[0].mxu0
    %v2462 = vadd.f32 %v2058, %v2461
    %v2463 = vpop.f32.mrb[0].mxu0
    %v2464 = vadd.f32 %v2058, %v2463
    %v2465 = vpop.f32.mrb[0].mxu0
    %v2466 = vadd.f32 %v2063, %v2465
    %v2467 = vpop.f32.mrb[0].mxu0
    %v2468 = vadd.f32 %v2063, %v2467
    %2469 = vdwg.mxu0
    %2470 = vmatprep.subr.bf16.mxu0 %v1940
    %2471 = vmatpush1.bf16.msra.mxu0 %v1939
    %2472 = vmatprep.subr.bf16.mxu0 %v1944
    %2473 = vmatpush1.bf16.msra.mxu0 %v1943
    %2474 = vmatprep.subr.bf16.mxu0 %v1948
    %2475 = vmatpush1.bf16.msra.mxu0 %v1947
    %2476 = vmatprep.subr.bf16.mxu0 %v1952
    %2477 = vmatpush1.bf16.msra.mxu0 %v1951
    %2478 = vmatprep.subr.bf16.mxu0 %v1956
    %2479 = vmatpush1.bf16.msra.mxu0 %v1955
    %2480 = vmatprep.subr.bf16.mxu0 %v1960
    %2481 = vmatpush1.bf16.msra.mxu0 %v1959
    %2482 = vmatprep.subr.bf16.mxu0 %v1964
    %2483 = vmatpush1.bf16.msra.mxu0 %v1963
    %2484 = vmatprep.subr.bf16.mxu0 %v1968
    %2485 = vmatpush1.bf16.msra.mxu0 %v1967
    %2486 = vmatprep.subr.bf16.mxu0 %v1972
    %2487 = vmatpush1.bf16.msra.mxu0 %v1971
    %2488 = vmatprep.subr.bf16.mxu0 %v1976
    %2489 = vmatpush1.bf16.msra.mxu0 %v1975
    %2490 = vmatprep.subr.bf16.mxu0 %v1980
    %2491 = vmatpush1.bf16.msra.mxu0 %v1979
    %2492 = vmatprep.subr.bf16.mxu0 %v1984
    %2493 = vmatpush1.bf16.msra.mxu0 %v1983
    %2494 = vmatprep.subr.bf16.mxu0 %v1988
    %2495 = vmatpush1.bf16.msra.mxu0 %v1987
    %2496 = vmatprep.subr.bf16.mxu0 %v1992
    %2497 = vmatpush1.bf16.msra.mxu0 %v1991
    %2498 = vmatprep.subr.bf16.mxu0 %v1996
    %2499 = vmatpush1.bf16.msra.mxu0 %v1995
    %2500 = vmatprep.subr.bf16.mxu0 %v2000
    %2501 = vmatpush1.bf16.msra.mxu0 %v1999
    %2502 = vmatprep.mubr.bf16.mxu0 %v2132
    %2503 = vmatmul.mubr.bf16.gmra.mrb[0].mxu0 %v2131
    %v2504 = vpop.f32.mrb[0].mxu0
    %v2505 = vadd.f32 %v2432, %v2504
    %v2506 = vpop.f32.mrb[0].mxu0
    %v2507 = vadd.f32 %v2434, %v2506
    %v2508 = vpop.f32.mrb[0].mxu0
    %v2509 = vadd.f32 %v2436, %v2508
    %v2510 = vpop.f32.mrb[0].mxu0
    %v2511 = vadd.f32 %v2438, %v2510
    %2512 = vmatprep.mubr.bf16.mxu0 %v2137
    %2513 = vmatmul.mubr.bf16.gmra.mrb[0].mxu0 %v2136
    %v2514 = vpop.f32.mrb[0].mxu0
    %v2515 = vadd.f32 %v2442, %v2514
    %v2516 = vpop.f32.mrb[0].mxu0
    %v2517 = vadd.f32 %v2444, %v2516
    %v2518 = vpop.f32.mrb[0].mxu0
    %v2519 = vadd.f32 %v2446, %v2518
    %v2520 = vpop.f32.mrb[0].mxu0
    %v2521 = vadd.f32 %v2448, %v2520
    %2522 = vmatprep.mubr.bf16.mxu0 %v2142
    %2523 = vmatmul.mubr.bf16.gmra.mrb[0].mxu0 %v2141
    %v2524 = vpop.f32.mrb[0].mxu0
    %v2525 = vadd.f32 %v2452, %v2524
    %v2526 = vpop.f32.mrb[0].mxu0
    %v2527 = vadd.f32 %v2454, %v2526
    %v2528 = vpop.f32.mrb[0].mxu0
    %v2529 = vadd.f32 %v2456, %v2528
    %v2530 = vpop.f32.mrb[0].mxu0
    %v2531 = vadd.f32 %v2458, %v2530
    %2532 = vmatprep.mubr.bf16.mxu0 %v2147
    %2533 = vmatmul.mubr.bf16.gmra.mrb[0].mxu0 %v2146
    %v2534 = vpop.f32.mrb[0].mxu0
    %v2535 = vadd.f32 %v2462, %v2534
    %v2536 = vpop.f32.mrb[0].mxu0
    %v2537 = vadd.f32 %v2464, %v2536
    %v2538 = vpop.f32.mrb[0].mxu0
    %v2539 = vadd.f32 %v2466, %v2538
    %v2540 = vpop.f32.mrb[0].mxu0
    %v2541 = vadd.f32 %v2468, %v2540
    %2542 = vdwg.mxu0
    %2543 = vmatprep.subr.bf16.mxu0 %v2004
    %2544 = vmatpush1.bf16.msra.mxu0 %v2003
    %2545 = vmatprep.subr.bf16.mxu0 %v2008
    %2546 = vmatpush1.bf16.msra.mxu0 %v2007
    %2547 = vmatprep.subr.bf16.mxu0 %v2012
    %2548 = vmatpush1.bf16.msra.mxu0 %v2011
    %2549 = vmatprep.subr.bf16.mxu0 %v2016
    %2550 = vmatpush1.bf16.msra.mxu0 %v2015
    %2551 = vmatprep.subr.bf16.mxu0 0
    %2552 = vmatpush1.bf16.msra.mxu0 0
    %2553 = vmatprep.subr.bf16.mxu0 0
    %2554 = vmatpush1.bf16.msra.mxu0 0
    %2555 = vmatprep.subr.bf16.mxu0 0
    %2556 = vmatpush1.bf16.msra.mxu0 0
    %2557 = vmatprep.subr.bf16.mxu0 0
    %2558 = vmatpush1.bf16.msra.mxu0 0
    %2559 = vmatprep.subr.bf16.mxu0 0
    %2560 = vmatpush1.bf16.msra.mxu0 0
    %2561 = vmatprep.subr.bf16.mxu0 0
    %2562 = vmatpush1.bf16.msra.mxu0 0
    %2563 = vmatprep.subr.bf16.mxu0 0
    %2564 = vmatpush1.bf16.msra.mxu0 0
    %2565 = vmatprep.subr.bf16.mxu0 0
    %2566 = vmatpush1.bf16.msra.mxu0 0
    %2567 = vmatprep.subr.bf16.mxu0 0
    %2568 = vmatpush1.bf16.msra.mxu0 0
    %2569 = vmatprep.subr.bf16.mxu0 0
    %2570 = vmatpush1.bf16.msra.mxu0 0
    %2571 = vmatprep.subr.bf16.mxu0 0
    %2572 = vmatpush1.bf16.msra.mxu0 0
    %2573 = vmatprep.subr.bf16.mxu0 0
    %2574 = vmatpush1.bf16.msra.mxu0 0
    %2575 = vmatprep.mubr.bf16.mxu0 0
    %2576 = vmatmul.mubr.bf16.gmra.mrb[0].mxu0 %v2167
    %v2577 = vpop.f32.mrb[0].mxu0
    %v2578 = vadd.f32 %v2505, %v2577
    %v2579 = vpop.f32.mrb[0].mxu0
    %v2580 = vadd.f32 %v2507, %v2579
    %v2581 = vpop.f32.mrb[0].mxu0
    %v2582 = vadd.f32 %v2509, %v2581
    %v2583 = vpop.f32.mrb[0].mxu0
    %v2584 = vadd.f32 %v2511, %v2583
    %2585 = vmatprep.mubr.bf16.mxu0 0
    %2586 = vmatmul.mubr.bf16.gmra.mrb[0].mxu0 %v2170
    %v2587 = vpop.f32.mrb[0].mxu0
    %v2588 = vadd.f32 %v2515, %v2587
    %v2589 = vpop.f32.mrb[0].mxu0
    %v2590 = vadd.f32 %v2517, %v2589
    %v2591 = vpop.f32.mrb[0].mxu0
    %v2592 = vadd.f32 %v2519, %v2591
    %v2593 = vpop.f32.mrb[0].mxu0
    %v2594 = vadd.f32 %v2521, %v2593
    %2595 = vmatprep.mubr.bf16.mxu0 0
    %2596 = vmatmul.mubr.bf16.gmra.mrb[0].mxu0 %v2173
    %v2597 = vpop.f32.mrb[0].mxu0
    %v2598 = vadd.f32 %v2525, %v2597
    %v2599 = vpop.f32.mrb[0].mxu0
    %v2600 = vadd.f32 %v2527, %v2599
    %v2601 = vpop.f32.mrb[0].mxu0
    %v2602 = vadd.f32 %v2529, %v2601
    %v2603 = vpop.f32.mrb[0].mxu0
    %v2604 = vadd.f32 %v2531, %v2603
    %2605 = vmatprep.mubr.bf16.mxu0 0
    %2606 = vmatmul.mubr.bf16.gmra.mrb[0].mxu0 %v2176
    %v2607 = vpop.f32.mrb[0].mxu0
    %v2608 = vadd.f32 %v2535, %v2607
    %v2609 = vpop.f32.mrb[0].mxu0
    %v2610 = vadd.f32 %v2537, %v2609
    %v2611 = vpop.f32.mrb[0].mxu0
    %v2612 = vadd.f32 %v2539, %v2611
    %v2613 = vpop.f32.mrb[0].mxu0
    %v2614 = vadd.f32 %v2541, %v2613
    %2615 = vdwg.mxu0
    %v2616 = vmax.f32 %v2359, 0.0
    %v2617 = vmax.f32 %v2361, 0.0
    %v2618 = vmax.f32 %v2578, 0.0
    %v2619 = vmax.f32 %v2580, 0.0
    %v2620 = vmax.f32 %v2363, 0.0
    %v2621 = vmax.f32 %v2365, 0.0
    %v2622 = vmax.f32 %v2582, 0.0
    %v2623 = vmax.f32 %v2584, 0.0
    %v2624 = vmax.f32 %v2369, 0.0
    %v2625 = vmax.f32 %v2371, 0.0
    %v2626 = vmax.f32 %v2588, 0.0
    %v2627 = vmax.f32 %v2590, 0.0
    %v2628 = vmax.f32 %v2373, 0.0
    %v2629 = vmax.f32 %v2375, 0.0
    %v2630 = vmax.f32 %v2592, 0.0
    %v2631 = vmax.f32 %v2594, 0.0
    %v2632 = vmax.f32 %v2379, 0.0
    %v2633 = vmax.f32 %v2381, 0.0
    %v2634 = vmax.f32 %v2598, 0.0
    %v2635 = vmax.f32 %v2600, 0.0
    %v2636 = vmax.f32 %v2383, 0.0
    %v2637 = vmax.f32 %v2385, 0.0
    %v2638 = vmax.f32 %v2602, 0.0
    %v2639 = vmax.f32 %v2604, 0.0
    %v2640 = vmax.f32 %v2389, 0.0
    %v2641 = vmax.f32 %v2391, 0.0
    %v2642 = vmax.f32 %v2608, 0.0
    %v2643 = vmax.f32 %v2610, 0.0
    %v2644 = vmax.f32 %v2393, 0.0
    %v2645 = vmax.f32 %v2395, 0.0
    %v2646 = vmax.f32 %v2612, 0.0
    %v2647 = vmax.f32 %v2614, 0.0
    %v2648 = vld [vmem:[%s3] sm:$0xf]
    %v2649 = vpack.c.bf16 %v2620, %v2616
    %v2650 = vpack.c.bf16 %v2621, %v2617
    %v2651 = vpack.c.bf16 %v2622, %v2618
    %v2652 = vpack.c.bf16 %v2623, %v2619
    %v2653 = vpack.c.bf16 %v2628, %v2624
    %v2654 = vpack.c.bf16 %v2629, %v2625
    %v2655 = vpack.c.bf16 %v2630, %v2626
    %v2656 = vpack.c.bf16 %v2631, %v2627
    %v2657 = vpack.c.bf16 %v2636, %v2632
    %v2658 = vpack.c.bf16 %v2637, %v2633
    %v2659 = vpack.c.bf16 %v2638, %v2634
    %v2660 = vpack.c.bf16 %v2639, %v2635
    %v2661 = vpack.c.bf16 %v2644, %v2640
    %v2662 = vpack.c.bf16 %v2645, %v2641
    %v2663 = vpack.c.bf16 %v2646, %v2642
    %v2664 = vpack.c.bf16 %v2647, %v2643
    %v2665 = vld [vmem:[%s4] sm:$0xff]
    %2667 = vset.pattern.permute.xlu0 0
    %2668 = vperm.xlu0 %2667, %v2665
    %v2669 = vpop.permute.xlu0 %2668
    %v2672 = vsel %vm2165, %v2648, 0
    %2674 = vmatprep.subr.bf16.mxu0 %v2650
    %2675 = vmatpush1.bf16.msra.mxu0 %v2649
    %2676 = vmatprep.subr.bf16.mxu0 %v2654
    %2677 = vmatpush1.bf16.msra.mxu0 %v2653
    %2678 = vmatprep.subr.bf16.mxu0 %v2658
    %2679 = vmatpush1.bf16.msra.mxu0 %v2657
    %2680 = vmatprep.subr.bf16.mxu0 %v2662
    %2681 = vmatpush1.bf16.msra.mxu0 %v2661
    %2682 = vmatprep.subr.bf16.mxu0 0
    %2683 = vmatpush1.bf16.msra.mxu0 0
    %2684 = vmatprep.subr.bf16.mxu0 0
    %2685 = vmatpush1.bf16.msra.mxu0 0
    %2686 = vmatprep.subr.bf16.mxu0 0
    %2687 = vmatpush1.bf16.msra.mxu0 0
    %2688 = vmatprep.subr.bf16.mxu0 0
    %2689 = vmatpush1.bf16.msra.mxu0 0
    %2690 = vmatprep.subr.bf16.mxu0 0
    %2691 = vmatpush1.bf16.msra.mxu0 0
    %2692 = vmatprep.subr.bf16.mxu0 0
    %2693 = vmatpush1.bf16.msra.mxu0 0
    %2694 = vmatprep.subr.bf16.mxu0 0
    %2695 = vmatpush1.bf16.msra.mxu0 0
    %2696 = vmatprep.subr.bf16.mxu0 0
    %2697 = vmatpush1.bf16.msra.mxu0 0
    %2698 = vmatprep.subr.bf16.mxu0 0
    %2699 = vmatpush1.bf16.msra.mxu0 0
    %2700 = vmatprep.subr.bf16.mxu0 0
    %2701 = vmatpush1.bf16.msra.mxu0 0
    %2702 = vmatprep.subr.bf16.mxu0 0
    %2703 = vmatpush1.bf16.msra.mxu0 0
    %2704 = vmatprep.subr.bf16.mxu0 0
    %2705 = vmatpush1.bf16.msra.mxu0 0
    %2706 = vmatprep.mubr.bf16.mxu0 0
    %2707 = vmatmul.mubr.bf16.gmra.mrb[0].mxu0 %v2672
    %v2708 = vpop.f32.mrb[0].mxu0
    %v2709 = vadd.f32 %v2669, %v2708
    %v2710 = vpop.f32.mrb[0].mxu0
    %v2711 = vadd.f32 %v2669, %v2710
    %v2712 = vpop.f32.mrb[0].mxu0
    %v2713 = vpop.f32.mrb[0].mxu0
    %2714 = vdwg.mxu0
    %2715 = vmatprep.subr.bf16.mxu0 %v2652
    %2716 = vmatpush1.bf16.msra.mxu0 %v2651
    %2717 = vmatprep.subr.bf16.mxu0 %v2656
    %2718 = vmatpush1.bf16.msra.mxu0 %v2655
    %2719 = vmatprep.subr.bf16.mxu0 %v2660
    %2720 = vmatpush1.bf16.msra.mxu0 %v2659
    %2721 = vmatprep.subr.bf16.mxu0 %v2664
    %2722 = vmatpush1.bf16.msra.mxu0 %v2663
    %2723 = vmatprep.subr.bf16.mxu0 0
    %2724 = vmatpush1.bf16.msra.mxu0 0
    %2725 = vmatprep.subr.bf16.mxu0 0
    %2726 = vmatpush1.bf16.msra.mxu0 0
    %2727 = vmatprep.subr.bf16.mxu0 0
    %2728 = vmatpush1.bf16.msra.mxu0 0
    %2729 = vmatprep.subr.bf16.mxu0 0
    %2730 = vmatpush1.bf16.msra.mxu0 0
    %2731 = vmatprep.subr.bf16.mxu0 0
    %2732 = vmatpush1.bf16.msra.mxu0 0
    %2733 = vmatprep.subr.bf16.mxu0 0
    %2734 = vmatpush1.bf16.msra.mxu0 0
    %2735 = vmatprep.subr.bf16.mxu0 0
    %2736 = vmatpush1.bf16.msra.mxu0 0
    %2737 = vmatprep.subr.bf16.mxu0 0
    %2738 = vmatpush1.bf16.msra.mxu0 0
    %2739 = vmatprep.subr.bf16.mxu0 0
    %2740 = vmatpush1.bf16.msra.mxu0 0
    %2741 = vmatprep.subr.bf16.mxu0 0
    %2742 = vmatpush1.bf16.msra.mxu0 0
    %2743 = vmatprep.subr.bf16.mxu0 0
    %2744 = vmatpush1.bf16.msra.mxu0 0
    %2745 = vmatprep.subr.bf16.mxu0 0
    %2746 = vmatpush1.bf16.msra.mxu0 0
    %2747 = vmatprep.mubr.bf16.mxu0 0
    %2748 = vmatmul.mubr.bf16.gmra.mrb[0].mxu0 %v2672
    %v2749 = vpop.f32.mrb[0].mxu0
    %v2750 = vadd.f32 %v2669, %v2749
    %v2751 = vpop.f32.mrb[0].mxu0
    %v2752 = vadd.f32 %v2669, %v2751
    %v2753 = vpop.f32.mrb[0].mxu0
    %v2754 = vpop.f32.mrb[0].mxu0
    %2755 = vdwg.mxu0
    %v2756 = vxor.u32 %v2709, 2147483648
    %v2757 = vxor.u32 %v2711, 2147483648
    %v2758 = vxor.u32 %v2750, 2147483648
    %v2759 = vxor.u32 %v2752, 2147483648
    %v2760 = vmul.f32 %v2756, 1.442695
    %v2761 = vpow.pop %v2760
    %v2762 = vmul.f32 %v2757, 1.442695
    %v2763 = vpow.pop %v2762
    %v2764 = vmul.f32 %v2758, 1.442695
    %v2765 = vpow.pop %v2764
    %v2766 = vmul.f32 %v2759, 1.442695
    %v2767 = vpow.pop %v2766
    %v2768 = vadd.f32 %v2761, 1.0
    %v2769 = vadd.f32 %v2763, 1.0
    %v2770 = vadd.f32 %v2765, 1.0
    %v2771 = vadd.f32 %v2767, 1.0
    %v2772 = vrcp.pop %v2768
    %v2773 = vmul.f32 1.0, %v2772
    %v2774 = vrcp.pop %v2769
    %v2775 = vmul.f32 1.0, %v2774
    %v2776 = vrcp.pop %v2770
    %v2777 = vmul.f32 1.0, %v2776
    %v2778 = vrcp.pop %v2771
    %v2779 = vmul.f32 1.0, %v2778
    %v2780 = vld [vmem:[%s6] sm:$0xff]
    %v2781 = vsub.f32 %v2773, %v2709
    %v2782 = vsub.f32 %v2775, %v2711
    %v2783 = vsub.f32 %v2777, %v2750
    %v2784 = vsub.f32 %v2779, %v2752
    %2786 = vset.pattern.permute.xlu0 0
    %2787 = vperm.xlu0 %2786, %v2780
    %v2788 = vpop.permute.xlu0 %2787
    %v2790 = vmul.f32 %v2788, %v2781
    %v2791 = vmul.f32 %v2788, %v2782
    %v2792 = vmul.f32 %v2788, %v2783
    %v2793 = vmul.f32 %v2788, %v2784
    %v2794 = vadd.f32 %v2709, %v2790
    %v2795 = vadd.f32 %v2711, %v2791
    %v2796 = vadd.f32 %v2750, %v2792
    %v2797 = vadd.f32 %v2752, %v2793
    %2798 = vst [vmem:[#allocation8] sm:$0xff] %v2794
    %2799 = vst [vmem:[#allocation8 + $0x8] sm:$0xff] %v2795
    %2800 = vst [vmem:[#allocation8 + $0x10] sm:$0xff] %v2796
    %2801 = vst [vmem:[#allocation8 + $0x18] sm:$0xff] %v2797
    // Predicated region
    $region38: #{tpu_custom_call.1} parent=1 // pred_check
      _
    $region39: #{tpu_custom_call.1} parent=1 // pred_check_branch
      %2803 = sbr.rel (0) target = $region41
    $region40: #{tpu_custom_call.1} parent=1 // pred_region
      %s2805 = ssub.s32 512, 512
      %2806 = vsyncadd [#allocation5], %s2805
      %s2808 = sshll.u32 [#allocation8], 4
      %s2809 = int_to_ptr.vmem [resolvable:$true] %s2808
      %2811 = dma.vmem_to_hbm [thread:$0]  %s2809, 512, %s7, [#allocation5]
    $region41: #{tpu_custom_call.1} parent=1 // pred_fallthru
      _
    // Predicated region
    $region42: #{tpu_custom_call.1} parent=1 // pred_check
      _
    $region43: #{tpu_custom_call.1} parent=1 // pred_check_branch
      %2813 = sbr.rel (0) target = $region45
    $region44: #{tpu_custom_call.1} parent=1 // pred_region
      %2814 = dma.done [#allocation5], 512
    $region45: #{tpu_custom_call.1} parent=1 // pred_fallthru
      _
    %2815 = vsyncpa [#allocation4], 1
    %2816 = vsyncpa [#allocation7], 1
    %2817 = vsyncpa [#allocation5], 1

</llo_original>
